<compile_context>
chip_gen: v5e
topology: v5e:2x2
jax: 0.10.0
libtpu: 0.0.40
codegen_flags: <defaults>
</compile_context>

<pallas_src>
import jax
import jax.numpy as jnp
from jax.experimental import pallas as pl
from jax.experimental.pallas import tpu as pltpu

# Model constants implied by the PyTorch module (fc in_features=3136 = 16*196,
# maxpool stride 2  =>  conv output length 392  =>  input length 392).
C_OUT = 16
K = 3
L = 392
L_POOL = L // 2            # 196
LP_PAD = 256               # 196 rounded up to a multiple of 128 (lane tile)
FC_IN = C_OUT * L_POOL     # 3136
FC_K = C_OUT * LP_PAD      # 4096  lane-aligned, zero-padded K for the fused dot
FC_OUT = 10


def _round_up(n, m):
    return (n + m - 1) // m * m


def model4_kernel(xs_ref, wconv_ref, bconv_ref, wt_ref, bfc_ref, out_ref,
                  pooled_ref):
    # xs_ref    : VMEM (4, TB, 256)  f32  phase-decomposed input, lanes 196..255 = 0
    # wconv_ref : SMEM (48,)         f32  0.5 * conv1 weight, flattened [o*3 + k]
    # bconv_ref : SMEM (16,)         f32  0.5 * conv1 bias
    # wt_ref    : VMEM (4096, 10)    f32  0.5 * fc1 weight; channel o in rows [o*256, o*256+196)
    # bfc_ref   : VMEM (1, 10)       f32  fc1 bias + 0.5 * sum(fc1 weight, axis=1)
    # out_ref   : VMEM (TB, 10)      f32
    # pooled_ref: VMEM (TB, 4096)    f32  scratch; every lane is overwritten below

    for o in range(C_OUT):          # static, unrolled at trace time (16 channels)
        # Re-read the phases per channel: short-lived VMEM loads instead of a
        # long-lived vreg hoist across the 16-way unroll.
        x0 = xs_ref[0]
        x1 = xs_ref[1]
        x2 = xs_ref[2]
        x3 = xs_ref[3]
        w0 = wconv_ref[3 * o + 0]
        w1 = wconv_ref[3 * o + 1]
        w2 = wconv_ref[3 * o + 2]
        b = bconv_ref[o]
        # 0.5 * Conv1d (stride 1, padding 1) at even / odd output positions;
        # bias added once after the max (max(a+b, c+b) == max(a, c) + b).
        half_even = w0 * x0 + w1 * x1 + w2 * x2            # (TB, 256)
        half_odd = w0 * x1 + w1 * x2 + w2 * x3             # (TB, 256)
        m = jnp.maximum(half_even, half_odd) + b
        # sigmoid(z) = 0.5*tanh(z/2) + 0.5 and maxpool commutes with the
        # monotone sigmoid, so only tanh() is left in-kernel; the *0.5+0.5
        # affine lives in wt_ref / bfc_ref.  Full 256-lane, unmasked store.
        pooled_ref[:, o * LP_PAD:(o + 1) * LP_PAD] = jnp.tanh(m)

    # One consolidated MXU dot instead of 16 tiny N=10 dots.
    acc = jnp.dot(pooled_ref[...], wt_ref[...],
                  preferred_element_type=jnp.float32)       # (TB, 10)
    out_ref[...] = acc + bfc_ref[...]


def model4_forward(x, wconv, bconv, wfc, bfc, *, block_b=256):
    """x: (B, 1, 392) f32 (NCW).  Returns (B, 10) f32."""
    B = x.shape[0]
    TB = min(block_b, _round_up(B, 8))       # batch tile (multiple of 8 sublanes)
    # Keep >= 2 grid steps when the batch allows it so both v7x TensorCores
    # get work on the "parallel" batch axis.
    if B <= TB and TB > 8:
        TB = max(8, (TB // 2) // 8 * 8)
    Bp = _round_up(B, TB)                    # padded batch

    # Phase-decomposed, lane-padded input: xs[k, b, j] = x_pad[b, 2*j + k] for
    # j < 196, and exactly 0 for 196 <= j < 256.  The pad lanes pair with the
    # zero-padded weight rows, so no in-kernel scratch zeroing is needed.
    xp = jnp.pad(x[:, 0, :], ((0, Bp - B), (1, 1)))                   # (Bp, 394)
    xs = jnp.stack([xp[:, k:k + 2 * L_POOL - 1:2] for k in range(4)], axis=0)
    xs = jnp.pad(xs, ((0, 0), (0, 0), (0, LP_PAD - L_POOL)))          # (4, Bp, 256)

    # Fold the sigmoid affine into the parameters:
    #   sigmoid(c) = 0.5 * tanh(0.5 * c) + 0.5
    #   => conv weight/bias * 0.5 (tanh argument produced directly),
    #      fc weight * 0.5, fc bias += 0.5 * sum_k wfc[:, k].
    wconv_half = (0.5 * wconv[:, 0, :]).reshape(C_OUT * K)            # (48,)
    bconv_half = 0.5 * bconv                                          # (16,)
    wt = (0.5 * wfc.T).reshape(C_OUT, L_POOL, FC_OUT)                 # (16,196,10)
    wt_pad = jnp.pad(wt, ((0, 0), (0, LP_PAD - L_POOL), (0, 0))).reshape(FC_K, FC_OUT)
    bfc_adj = (bfc + 0.5 * jnp.sum(wfc, axis=1)).reshape(1, FC_OUT)   # (1, 10)

    out = pl.pallas_call(
        model4_kernel,
        out_shape=jax.ShapeDtypeStruct((Bp, FC_OUT), jnp.float32),
        grid=(Bp // TB,),
        in_specs=[
            pl.BlockSpec((4, TB, LP_PAD), lambda i: (0, i, 0)),        # xs (batch-tiled)
            pl.BlockSpec(memory_space=pltpu.MemorySpace.SMEM),         # conv weight (48,)
            pl.BlockSpec(memory_space=pltpu.MemorySpace.SMEM),         # conv bias (16,)
            pl.BlockSpec((FC_K, FC_OUT), lambda i: (0, 0)),            # fc weight (replicated)
            pl.BlockSpec((1, FC_OUT), lambda i: (0, 0)),               # fc bias (replicated)
        ],
        out_specs=pl.BlockSpec((TB, FC_OUT), lambda i: (i, 0)),
        scratch_shapes=[pltpu.VMEM((TB, FC_K), jnp.float32)],
        compiler_params=pltpu.CompilerParams(
            dimension_semantics=("parallel",),
            vmem_limit_bytes=32 * 1024 * 1024),
    )(xs, wconv_half, bconv_half, wt_pad, bfc_adj)
    return out[:B]


def model4_reference(x, wconv, bconv, wfc, bfc):
    """Pure-JAX reference reproducing the PyTorch forward exactly."""
    B = x.shape[0]
    xp = jnp.pad(x[:, 0, :], ((0, 0), (1, 1)))                        # (B, 394)
    c = (wconv[:, 0, 0][None, :, None] * xp[:, None, 0:L]
         + wconv[:, 0, 1][None, :, None] * xp[:, None, 1:L + 1]
         + wconv[:, 0, 2][None, :, None] * xp[:, None, 2:L + 2]
         + bconv[None, :, None])                                      # (B,16,392)
    s = 1.0 / (1.0 + jnp.exp(-c))
    pooled = jnp.maximum(s[:, :, 0::2], s[:, :, 1::2])                # (B,16,196)
    flat = pooled.reshape(B, FC_IN)                                   # view(-1,3136)
    return flat @ wfc.T + bfc[None, :]


if __name__ == "__main__":
    key = jax.random.PRNGKey(0)
    kx, kw1, kb1, kw2, kb2 = jax.random.split(key, 5)

    B = 2
    x = jax.random.normal(kx, (B, 1, L), dtype=jnp.float32)

    # Deterministic parameter init (PyTorch-style uniform bounds).
    a1 = 1.0 / (1 * K) ** 0.5
    wconv = jax.random.uniform(kw1, (C_OUT, 1, K), jnp.float32, -a1, a1)
    bconv = jax.random.uniform(kb1, (C_OUT,), jnp.float32, -a1, a1)
    a2 = 1.0 / FC_IN ** 0.5
    wfc = jax.random.uniform(kw2, (FC_OUT, FC_IN), jnp.float32, -a2, a2)
    bfc = jax.random.uniform(kb2, (FC_OUT,), jnp.float32, -a2, a2)

    out = jax.block_until_ready(model4_forward(x, wconv, bconv, wfc, bfc))
    ref = jax.block_until_ready(model4_reference(x, wconv, bconv, wfc, bfc))

    assert out.shape == (B, FC_OUT)
    assert jnp.allclose(out, ref, atol=1e-4, rtol=1e-4), (out, ref)
    print("KERNEL_OK")
</pallas_src>

<mosaic_0001>
module attributes {stable_mosaic.version = 11 : i64} {
  func.func @model4_kernel(%arg0: i32, %arg1: memref<4x8x256xf32, #tpu.memory_space<vmem>>, %arg2: memref<48xf32, #tpu.memory_space<smem>>, %arg3: memref<16xf32, #tpu.memory_space<smem>>, %arg4: memref<4096x10xf32, #tpu.memory_space<vmem>>, %arg5: memref<1x10xf32, #tpu.memory_space<vmem>>, %arg6: memref<8x10xf32, #tpu.memory_space<vmem>>, %arg7: memref<8x4096xf32, #tpu.memory_space<vmem>>) attributes {dimension_semantics = [#tpu.dimension_semantics<parallel>], iteration_bounds = array<i64: 1>, scalar_prefetch = 0 : i64, scratch_operands = 1 : i64, tpu.core_type = #tpu.core_type<tc>, window_params = [{transform_indices = @transform_0, window_bounds = array<i64: 4, 8, 256>}, {transform_indices = @transform_1, window_bounds = array<i64: 48>}, {transform_indices = @transform_2, window_bounds = array<i64: 16>}, {pipeline_mode = #tpu.pipeline_mode<synchronous>, transform_indices = @transform_3, window_bounds = array<i64: 4096, 10>}, {pipeline_mode = #tpu.pipeline_mode<synchronous>, transform_indices = @transform_4, window_bounds = array<i64: 1, 10>}, {transform_indices = @transform_5, window_bounds = array<i64: 8, 10>}]} {
    %c0 = arith.constant 0 : index
    %c0_0 = arith.constant 0 : index
    %c0_1 = arith.constant 0 : index
    %0 = vector.load %arg1[%c0, %c0_0, %c0_1] : memref<4x8x256xf32, #tpu.memory_space<vmem>>, vector<1x8x256xf32>
    %1 = vector.shape_cast %0 : vector<1x8x256xf32> to vector<8x256xf32>
    %c1 = arith.constant 1 : index
    %c0_2 = arith.constant 0 : index
    %c0_3 = arith.constant 0 : index
    %2 = vector.load %arg1[%c1, %c0_2, %c0_3] : memref<4x8x256xf32, #tpu.memory_space<vmem>>, vector<1x8x256xf32>
    %3 = vector.shape_cast %2 : vector<1x8x256xf32> to vector<8x256xf32>
    %c2 = arith.constant 2 : index
    %c0_4 = arith.constant 0 : index
    %c0_5 = arith.constant 0 : index
    %4 = vector.load %arg1[%c2, %c0_4, %c0_5] : memref<4x8x256xf32, #tpu.memory_space<vmem>>, vector<1x8x256xf32>
    %5 = vector.shape_cast %4 : vector<1x8x256xf32> to vector<8x256xf32>
    %c3 = arith.constant 3 : index
    %c0_6 = arith.constant 0 : index
    %c0_7 = arith.constant 0 : index
    %6 = vector.load %arg1[%c3, %c0_6, %c0_7] : memref<4x8x256xf32, #tpu.memory_space<vmem>>, vector<1x8x256xf32>
    %7 = vector.shape_cast %6 : vector<1x8x256xf32> to vector<8x256xf32>
    %c0_8 = arith.constant 0 : index
    %8 = memref.load %arg2[%c0_8] : memref<48xf32, #tpu.memory_space<smem>>
    %c1_9 = arith.constant 1 : index
    %9 = memref.load %arg2[%c1_9] : memref<48xf32, #tpu.memory_space<smem>>
    %c2_10 = arith.constant 2 : index
    %10 = memref.load %arg2[%c2_10] : memref<48xf32, #tpu.memory_space<smem>>
    %c0_11 = arith.constant 0 : index
    %11 = memref.load %arg3[%c0_11] : memref<16xf32, #tpu.memory_space<smem>>
    %12 = vector.broadcast %8 : f32 to vector<8x256xf32>
    %13 = arith.mulf %12, %1 : vector<8x256xf32>
    %14 = vector.broadcast %9 : f32 to vector<8x256xf32>
    %15 = arith.mulf %14, %3 : vector<8x256xf32>
    %16 = arith.addf %13, %15 : vector<8x256xf32>
    %17 = vector.broadcast %10 : f32 to vector<8x256xf32>
    %18 = arith.mulf %17, %5 : vector<8x256xf32>
    %19 = arith.addf %16, %18 : vector<8x256xf32>
    %20 = vector.broadcast %8 : f32 to vector<8x256xf32>
    %21 = arith.mulf %20, %3 : vector<8x256xf32>
    %22 = vector.broadcast %9 : f32 to vector<8x256xf32>
    %23 = arith.mulf %22, %5 : vector<8x256xf32>
    %24 = arith.addf %21, %23 : vector<8x256xf32>
    %25 = vector.broadcast %10 : f32 to vector<8x256xf32>
    %26 = arith.mulf %25, %7 : vector<8x256xf32>
    %27 = arith.addf %24, %26 : vector<8x256xf32>
    %28 = arith.maximumf %19, %27 : vector<8x256xf32>
    %29 = vector.broadcast %11 : f32 to vector<8x256xf32>
    %30 = arith.addf %28, %29 : vector<8x256xf32>
    %31 = math.tanh %30 : vector<8x256xf32>
    %c0_12 = arith.constant 0 : index
    %c0_13 = arith.constant 0 : index
    %32 = vector.load %arg7[%c0_12, %c0_13] : memref<8x4096xf32, #tpu.memory_space<vmem>>, vector<8x256xf32>
    tpu.vector_store %arg7[%c0_12, %c0_13], %31 {strides = array<i32>} : memref<8x4096xf32, #tpu.memory_space<vmem>>, vector<8x256xf32>,
    %c0_14 = arith.constant 0 : index
    %c0_15 = arith.constant 0 : index
    %c0_16 = arith.constant 0 : index
    %33 = vector.load %arg1[%c0_14, %c0_15, %c0_16] : memref<4x8x256xf32, #tpu.memory_space<vmem>>, vector<1x8x256xf32>
    %34 = vector.shape_cast %33 : vector<1x8x256xf32> to vector<8x256xf32>
    %c1_17 = arith.constant 1 : index
    %c0_18 = arith.constant 0 : index
    %c0_19 = arith.constant 0 : index
    %35 = vector.load %arg1[%c1_17, %c0_18, %c0_19] : memref<4x8x256xf32, #tpu.memory_space<vmem>>, vector<1x8x256xf32>
    %36 = vector.shape_cast %35 : vector<1x8x256xf32> to vector<8x256xf32>
    %c2_20 = arith.constant 2 : index
    %c0_21 = arith.constant 0 : index
    %c0_22 = arith.constant 0 : index
    %37 = vector.load %arg1[%c2_20, %c0_21, %c0_22] : memref<4x8x256xf32, #tpu.memory_space<vmem>>, vector<1x8x256xf32>
    %38 = vector.shape_cast %37 : vector<1x8x256xf32> to vector<8x256xf32>
    %c3_23 = arith.constant 3 : index
    %c0_24 = arith.constant 0 : index
    %c0_25 = arith.constant 0 : index
    %39 = vector.load %arg1[%c3_23, %c0_24, %c0_25] : memref<4x8x256xf32, #tpu.memory_space<vmem>>, vector<1x8x256xf32>
    %40 = vector.shape_cast %39 : vector<1x8x256xf32> to vector<8x256xf32>
    %c3_26 = arith.constant 3 : index
    %41 = memref.load %arg2[%c3_26] : memref<48xf32, #tpu.memory_space<smem>>
    %c4 = arith.constant 4 : index
    %42 = memref.load %arg2[%c4] : memref<48xf32, #tpu.memory_space<smem>>
    %c5 = arith.constant 5 : index
    %43 = memref.load %arg2[%c5] : memref<48xf32, #tpu.memory_space<smem>>
    %c1_27 = arith.constant 1 : index
    %44 = memref.load %arg3[%c1_27] : memref<16xf32, #tpu.memory_space<smem>>
    %45 = vector.broadcast %41 : f32 to vector<8x256xf32>
    %46 = arith.mulf %45, %34 : vector<8x256xf32>
    %47 = vector.broadcast %42 : f32 to vector<8x256xf32>
    %48 = arith.mulf %47, %36 : vector<8x256xf32>
    %49 = arith.addf %46, %48 : vector<8x256xf32>
    %50 = vector.broadcast %43 : f32 to vector<8x256xf32>
    %51 = arith.mulf %50, %38 : vector<8x256xf32>
    %52 = arith.addf %49, %51 : vector<8x256xf32>
    %53 = vector.broadcast %41 : f32 to vector<8x256xf32>
    %54 = arith.mulf %53, %36 : vector<8x256xf32>
    %55 = vector.broadcast %42 : f32 to vector<8x256xf32>
    %56 = arith.mulf %55, %38 : vector<8x256xf32>
    %57 = arith.addf %54, %56 : vector<8x256xf32>
    %58 = vector.broadcast %43 : f32 to vector<8x256xf32>
    %59 = arith.mulf %58, %40 : vector<8x256xf32>
    %60 = arith.addf %57, %59 : vector<8x256xf32>
    %61 = arith.maximumf %52, %60 : vector<8x256xf32>
    %62 = vector.broadcast %44 : f32 to vector<8x256xf32>
    %63 = arith.addf %61, %62 : vector<8x256xf32>
    %64 = math.tanh %63 : vector<8x256xf32>
    %c0_28 = arith.constant 0 : index
    %c256 = arith.constant 256 : index
    %65 = vector.load %arg7[%c0_28, %c256] : memref<8x4096xf32, #tpu.memory_space<vmem>>, vector<8x256xf32>
    tpu.vector_store %arg7[%c0_28, %c256], %64 {strides = array<i32>} : memref<8x4096xf32, #tpu.memory_space<vmem>>, vector<8x256xf32>,
    %c0_29 = arith.constant 0 : index
    %c0_30 = arith.constant 0 : index
    %c0_31 = arith.constant 0 : index
    %66 = vector.load %arg1[%c0_29, %c0_30, %c0_31] : memref<4x8x256xf32, #tpu.memory_space<vmem>>, vector<1x8x256xf32>
    %67 = vector.shape_cast %66 : vector<1x8x256xf32> to vector<8x256xf32>
    %c1_32 = arith.constant 1 : index
    %c0_33 = arith.constant 0 : index
    %c0_34 = arith.constant 0 : index
    %68 = vector.load %arg1[%c1_32, %c0_33, %c0_34] : memref<4x8x256xf32, #tpu.memory_space<vmem>>, vector<1x8x256xf32>
    %69 = vector.shape_cast %68 : vector<1x8x256xf32> to vector<8x256xf32>
    %c2_35 = arith.constant 2 : index
    %c0_36 = arith.constant 0 : index
    %c0_37 = arith.constant 0 : index
    %70 = vector.load %arg1[%c2_35, %c0_36, %c0_37] : memref<4x8x256xf32, #tpu.memory_space<vmem>>, vector<1x8x256xf32>
    %71 = vector.shape_cast %70 : vector<1x8x256xf32> to vector<8x256xf32>
    %c3_38 = arith.constant 3 : index
    %c0_39 = arith.constant 0 : index
    %c0_40 = arith.constant 0 : index
    %72 = vector.load %arg1[%c3_38, %c0_39, %c0_40] : memref<4x8x256xf32, #tpu.memory_space<vmem>>, vector<1x8x256xf32>
    %73 = vector.shape_cast %72 : vector<1x8x256xf32> to vector<8x256xf32>
    %c6 = arith.constant 6 : index
    %74 = memref.load %arg2[%c6] : memref<48xf32, #tpu.memory_space<smem>>
    %c7 = arith.constant 7 : index
    %75 = memref.load %arg2[%c7] : memref<48xf32, #tpu.memory_space<smem>>
    %c8 = arith.constant 8 : index
    %76 = memref.load %arg2[%c8] : memref<48xf32, #tpu.memory_space<smem>>
    %c2_41 = arith.constant 2 : index
    %77 = memref.load %arg3[%c2_41] : memref<16xf32, #tpu.memory_space<smem>>
    %78 = vector.broadcast %74 : f32 to vector<8x256xf32>
    %79 = arith.mulf %78, %67 : vector<8x256xf32>
    %80 = vector.broadcast %75 : f32 to vector<8x256xf32>
    %81 = arith.mulf %80, %69 : vector<8x256xf32>
    %82 = arith.addf %79, %81 : vector<8x256xf32>
    %83 = vector.broadcast %76 : f32 to vector<8x256xf32>
    %84 = arith.mulf %83, %71 : vector<8x256xf32>
    %85 = arith.addf %82, %84 : vector<8x256xf32>
    %86 = vector.broadcast %74 : f32 to vector<8x256xf32>
    %87 = arith.mulf %86, %69 : vector<8x256xf32>
    %88 = vector.broadcast %75 : f32 to vector<8x256xf32>
    %89 = arith.mulf %88, %71 : vector<8x256xf32>
    %90 = arith.addf %87, %89 : vector<8x256xf32>
    %91 = vector.broadcast %76 : f32 to vector<8x256xf32>
    %92 = arith.mulf %91, %73 : vector<8x256xf32>
    %93 = arith.addf %90, %92 : vector<8x256xf32>
    %94 = arith.maximumf %85, %93 : vector<8x256xf32>
    %95 = vector.broadcast %77 : f32 to vector<8x256xf32>
    %96 = arith.addf %94, %95 : vector<8x256xf32>
    %97 = math.tanh %96 : vector<8x256xf32>
    %c0_42 = arith.constant 0 : index
    %c512 = arith.constant 512 : index
    %98 = vector.load %arg7[%c0_42, %c512] : memref<8x4096xf32, #tpu.memory_space<vmem>>, vector<8x256xf32>
    tpu.vector_store %arg7[%c0_42, %c512], %97 {strides = array<i32>} : memref<8x4096xf32, #tpu.memory_space<vmem>>, vector<8x256xf32>,
    %c0_43 = arith.constant 0 : index
    %c0_44 = arith.constant 0 : index
    %c0_45 = arith.constant 0 : index
    %99 = vector.load %arg1[%c0_43, %c0_44, %c0_45] : memref<4x8x256xf32, #tpu.memory_space<vmem>>, vector<1x8x256xf32>
    %100 = vector.shape_cast %99 : vector<1x8x256xf32> to vector<8x256xf32>
    %c1_46 = arith.constant 1 : index
    %c0_47 = arith.constant 0 : index
    %c0_48 = arith.constant 0 : index
    %101 = vector.load %arg1[%c1_46, %c0_47, %c0_48] : memref<4x8x256xf32, #tpu.memory_space<vmem>>, vector<1x8x256xf32>
    %102 = vector.shape_cast %101 : vector<1x8x256xf32> to vector<8x256xf32>
    %c2_49 = arith.constant 2 : index
    %c0_50 = arith.constant 0 : index
    %c0_51 = arith.constant 0 : index
    %103 = vector.load %arg1[%c2_49, %c0_50, %c0_51] : memref<4x8x256xf32, #tpu.memory_space<vmem>>, vector<1x8x256xf32>
    %104 = vector.shape_cast %103 : vector<1x8x256xf32> to vector<8x256xf32>
    %c3_52 = arith.constant 3 : index
    %c0_53 = arith.constant 0 : index
    %c0_54 = arith.constant 0 : index
    %105 = vector.load %arg1[%c3_52, %c0_53, %c0_54] : memref<4x8x256xf32, #tpu.memory_space<vmem>>, vector<1x8x256xf32>
    %106 = vector.shape_cast %105 : vector<1x8x256xf32> to vector<8x256xf32>
    %c9 = arith.constant 9 : index
    %107 = memref.load %arg2[%c9] : memref<48xf32, #tpu.memory_space<smem>>
    %c10 = arith.constant 10 : index
    %108 = memref.load %arg2[%c10] : memref<48xf32, #tpu.memory_space<smem>>
    %c11 = arith.constant 11 : index
    %109 = memref.load %arg2[%c11] : memref<48xf32, #tpu.memory_space<smem>>
    %c3_55 = arith.constant 3 : index
    %110 = memref.load %arg3[%c3_55] : memref<16xf32, #tpu.memory_space<smem>>
    %111 = vector.broadcast %107 : f32 to vector<8x256xf32>
    %112 = arith.mulf %111, %100 : vector<8x256xf32>
    %113 = vector.broadcast %108 : f32 to vector<8x256xf32>
    %114 = arith.mulf %113, %102 : vector<8x256xf32>
    %115 = arith.addf %112, %114 : vector<8x256xf32>
    %116 = vector.broadcast %109 : f32 to vector<8x256xf32>
    %117 = arith.mulf %116, %104 : vector<8x256xf32>
    %118 = arith.addf %115, %117 : vector<8x256xf32>
    %119 = vector.broadcast %107 : f32 to vector<8x256xf32>
    %120 = arith.mulf %119, %102 : vector<8x256xf32>
    %121 = vector.broadcast %108 : f32 to vector<8x256xf32>
    %122 = arith.mulf %121, %104 : vector<8x256xf32>
    %123 = arith.addf %120, %122 : vector<8x256xf32>
    %124 = vector.broadcast %109 : f32 to vector<8x256xf32>
    %125 = arith.mulf %124, %106 : vector<8x256xf32>
    %126 = arith.addf %123, %125 : vector<8x256xf32>
    %127 = arith.maximumf %118, %126 : vector<8x256xf32>
    %128 = vector.broadcast %110 : f32 to vector<8x256xf32>
    %129 = arith.addf %127, %128 : vector<8x256xf32>
    %130 = math.tanh %129 : vector<8x256xf32>
    %c0_56 = arith.constant 0 : index
    %c768 = arith.constant 768 : index
    %131 = vector.load %arg7[%c0_56, %c768] : memref<8x4096xf32, #tpu.memory_space<vmem>>, vector<8x256xf32>
    tpu.vector_store %arg7[%c0_56, %c768], %130 {strides = array<i32>} : memref<8x4096xf32, #tpu.memory_space<vmem>>, vector<8x256xf32>,
    %c0_57 = arith.constant 0 : index
    %c0_58 = arith.constant 0 : index
    %c0_59 = arith.constant 0 : index
    %132 = vector.load %arg1[%c0_57, %c0_58, %c0_59] : memref<4x8x256xf32, #tpu.memory_space<vmem>>, vector<1x8x256xf32>
    %133 = vector.shape_cast %132 : vector<1x8x256xf32> to vector<8x256xf32>
    %c1_60 = arith.constant 1 : index
    %c0_61 = arith.constant 0 : index
    %c0_62 = arith.constant 0 : index
    %134 = vector.load %arg1[%c1_60, %c0_61, %c0_62] : memref<4x8x256xf32, #tpu.memory_space<vmem>>, vector<1x8x256xf32>
    %135 = vector.shape_cast %134 : vector<1x8x256xf32> to vector<8x256xf32>
    %c2_63 = arith.constant 2 : index
    %c0_64 = arith.constant 0 : index
    %c0_65 = arith.constant 0 : index
    %136 = vector.load %arg1[%c2_63, %c0_64, %c0_65] : memref<4x8x256xf32, #tpu.memory_space<vmem>>, vector<1x8x256xf32>
    %137 = vector.shape_cast %136 : vector<1x8x256xf32> to vector<8x256xf32>
    %c3_66 = arith.constant 3 : index
    %c0_67 = arith.constant 0 : index
    %c0_68 = arith.constant 0 : index
    %138 = vector.load %arg1[%c3_66, %c0_67, %c0_68] : memref<4x8x256xf32, #tpu.memory_space<vmem>>, vector<1x8x256xf32>
    %139 = vector.shape_cast %138 : vector<1x8x256xf32> to vector<8x256xf32>
    %c12 = arith.constant 12 : index
    %140 = memref.load %arg2[%c12] : memref<48xf32, #tpu.memory_space<smem>>
    %c13 = arith.constant 13 : index
    %141 = memref.load %arg2[%c13] : memref<48xf32, #tpu.memory_space<smem>>
    %c14 = arith.constant 14 : index
    %142 = memref.load %arg2[%c14] : memref<48xf32, #tpu.memory_space<smem>>
    %c4_69 = arith.constant 4 : index
    %143 = memref.load %arg3[%c4_69] : memref<16xf32, #tpu.memory_space<smem>>
    %144 = vector.broadcast %140 : f32 to vector<8x256xf32>
    %145 = arith.mulf %144, %133 : vector<8x256xf32>
    %146 = vector.broadcast %141 : f32 to vector<8x256xf32>
    %147 = arith.mulf %146, %135 : vector<8x256xf32>
    %148 = arith.addf %145, %147 : vector<8x256xf32>
    %149 = vector.broadcast %142 : f32 to vector<8x256xf32>
    %150 = arith.mulf %149, %137 : vector<8x256xf32>
    %151 = arith.addf %148, %150 : vector<8x256xf32>
    %152 = vector.broadcast %140 : f32 to vector<8x256xf32>
    %153 = arith.mulf %152, %135 : vector<8x256xf32>
    %154 = vector.broadcast %141 : f32 to vector<8x256xf32>
    %155 = arith.mulf %154, %137 : vector<8x256xf32>
    %156 = arith.addf %153, %155 : vector<8x256xf32>
    %157 = vector.broadcast %142 : f32 to vector<8x256xf32>
    %158 = arith.mulf %157, %139 : vector<8x256xf32>
    %159 = arith.addf %156, %158 : vector<8x256xf32>
    %160 = arith.maximumf %151, %159 : vector<8x256xf32>
    %161 = vector.broadcast %143 : f32 to vector<8x256xf32>
    %162 = arith.addf %160, %161 : vector<8x256xf32>
    %163 = math.tanh %162 : vector<8x256xf32>
    %c0_70 = arith.constant 0 : index
    %c1024 = arith.constant 1024 : index
    %164 = vector.load %arg7[%c0_70, %c1024] : memref<8x4096xf32, #tpu.memory_space<vmem>>, vector<8x256xf32>
    tpu.vector_store %arg7[%c0_70, %c1024], %163 {strides = array<i32>} : memref<8x4096xf32, #tpu.memory_space<vmem>>, vector<8x256xf32>,
    %c0_71 = arith.constant 0 : index
    %c0_72 = arith.constant 0 : index
    %c0_73 = arith.constant 0 : index
    %165 = vector.load %arg1[%c0_71, %c0_72, %c0_73] : memref<4x8x256xf32, #tpu.memory_space<vmem>>, vector<1x8x256xf32>
    %166 = vector.shape_cast %165 : vector<1x8x256xf32> to vector<8x256xf32>
    %c1_74 = arith.constant 1 : index
    %c0_75 = arith.constant 0 : index
    %c0_76 = arith.constant 0 : index
    %167 = vector.load %arg1[%c1_74, %c0_75, %c0_76] : memref<4x8x256xf32, #tpu.memory_space<vmem>>, vector<1x8x256xf32>
    %168 = vector.shape_cast %167 : vector<1x8x256xf32> to vector<8x256xf32>
    %c2_77 = arith.constant 2 : index
    %c0_78 = arith.constant 0 : index
    %c0_79 = arith.constant 0 : index
    %169 = vector.load %arg1[%c2_77, %c0_78, %c0_79] : memref<4x8x256xf32, #tpu.memory_space<vmem>>, vector<1x8x256xf32>
    %170 = vector.shape_cast %169 : vector<1x8x256xf32> to vector<8x256xf32>
    %c3_80 = arith.constant 3 : index
    %c0_81 = arith.constant 0 : index
    %c0_82 = arith.constant 0 : index
    %171 = vector.load %arg1[%c3_80, %c0_81, %c0_82] : memref<4x8x256xf32, #tpu.memory_space<vmem>>, vector<1x8x256xf32>
    %172 = vector.shape_cast %171 : vector<1x8x256xf32> to vector<8x256xf32>
    %c15 = arith.constant 15 : index
    %173 = memref.load %arg2[%c15] : memref<48xf32, #tpu.memory_space<smem>>
    %c16 = arith.constant 16 : index
    %174 = memref.load %arg2[%c16] : memref<48xf32, #tpu.memory_space<smem>>
    %c17 = arith.constant 17 : index
    %175 = memref.load %arg2[%c17] : memref<48xf32, #tpu.memory_space<smem>>
    %c5_83 = arith.constant 5 : index
    %176 = memref.load %arg3[%c5_83] : memref<16xf32, #tpu.memory_space<smem>>
    %177 = vector.broadcast %173 : f32 to vector<8x256xf32>
    %178 = arith.mulf %177, %166 : vector<8x256xf32>
    %179 = vector.broadcast %174 : f32 to vector<8x256xf32>
    %180 = arith.mulf %179, %168 : vector<8x256xf32>
    %181 = arith.addf %178, %180 : vector<8x256xf32>
    %182 = vector.broadcast %175 : f32 to vector<8x256xf32>
    %183 = arith.mulf %182, %170 : vector<8x256xf32>
    %184 = arith.addf %181, %183 : vector<8x256xf32>
    %185 = vector.broadcast %173 : f32 to vector<8x256xf32>
    %186 = arith.mulf %185, %168 : vector<8x256xf32>
    %187 = vector.broadcast %174 : f32 to vector<8x256xf32>
    %188 = arith.mulf %187, %170 : vector<8x256xf32>
    %189 = arith.addf %186, %188 : vector<8x256xf32>
    %190 = vector.broadcast %175 : f32 to vector<8x256xf32>
    %191 = arith.mulf %190, %172 : vector<8x256xf32>
    %192 = arith.addf %189, %191 : vector<8x256xf32>
    %193 = arith.maximumf %184, %192 : vector<8x256xf32>
    %194 = vector.broadcast %176 : f32 to vector<8x256xf32>
    %195 = arith.addf %193, %194 : vector<8x256xf32>
    %196 = math.tanh %195 : vector<8x256xf32>
    %c0_84 = arith.constant 0 : index
    %c1280 = arith.constant 1280 : index
    %197 = vector.load %arg7[%c0_84, %c1280] : memref<8x4096xf32, #tpu.memory_space<vmem>>, vector<8x256xf32>
    tpu.vector_store %arg7[%c0_84, %c1280], %196 {strides = array<i32>} : memref<8x4096xf32, #tpu.memory_space<vmem>>, vector<8x256xf32>,
    %c0_85 = arith.constant 0 : index
    %c0_86 = arith.constant 0 : index
    %c0_87 = arith.constant 0 : index
    %198 = vector.load %arg1[%c0_85, %c0_86, %c0_87] : memref<4x8x256xf32, #tpu.memory_space<vmem>>, vector<1x8x256xf32>
    %199 = vector.shape_cast %198 : vector<1x8x256xf32> to vector<8x256xf32>
    %c1_88 = arith.constant 1 : index
    %c0_89 = arith.constant 0 : index
    %c0_90 = arith.constant 0 : index
    %200 = vector.load %arg1[%c1_88, %c0_89, %c0_90] : memref<4x8x256xf32, #tpu.memory_space<vmem>>, vector<1x8x256xf32>
    %201 = vector.shape_cast %200 : vector<1x8x256xf32> to vector<8x256xf32>
    %c2_91 = arith.constant 2 : index
    %c0_92 = arith.constant 0 : index
    %c0_93 = arith.constant 0 : index
    %202 = vector.load %arg1[%c2_91, %c0_92, %c0_93] : memref<4x8x256xf32, #tpu.memory_space<vmem>>, vector<1x8x256xf32>
    %203 = vector.shape_cast %202 : vector<1x8x256xf32> to vector<8x256xf32>
    %c3_94 = arith.constant 3 : index
    %c0_95 = arith.constant 0 : index
    %c0_96 = arith.constant 0 : index
    %204 = vector.load %arg1[%c3_94, %c0_95, %c0_96] : memref<4x8x256xf32, #tpu.memory_space<vmem>>, vector<1x8x256xf32>
    %205 = vector.shape_cast %204 : vector<1x8x256xf32> to vector<8x256xf32>
    %c18 = arith.constant 18 : index
    %206 = memref.load %arg2[%c18] : memref<48xf32, #tpu.memory_space<smem>>
    %c19 = arith.constant 19 : index
    %207 = memref.load %arg2[%c19] : memref<48xf32, #tpu.memory_space<smem>>
    %c20 = arith.constant 20 : index
    %208 = memref.load %arg2[%c20] : memref<48xf32, #tpu.memory_space<smem>>
    %c6_97 = arith.constant 6 : index
    %209 = memref.load %arg3[%c6_97] : memref<16xf32, #tpu.memory_space<smem>>
    %210 = vector.broadcast %206 : f32 to vector<8x256xf32>
    %211 = arith.mulf %210, %199 : vector<8x256xf32>
    %212 = vector.broadcast %207 : f32 to vector<8x256xf32>
    %213 = arith.mulf %212, %201 : vector<8x256xf32>
    %214 = arith.addf %211, %213 : vector<8x256xf32>
    %215 = vector.broadcast %208 : f32 to vector<8x256xf32>
    %216 = arith.mulf %215, %203 : vector<8x256xf32>
    %217 = arith.addf %214, %216 : vector<8x256xf32>
    %218 = vector.broadcast %206 : f32 to vector<8x256xf32>
    %219 = arith.mulf %218, %201 : vector<8x256xf32>
    %220 = vector.broadcast %207 : f32 to vector<8x256xf32>
    %221 = arith.mulf %220, %203 : vector<8x256xf32>
    %222 = arith.addf %219, %221 : vector<8x256xf32>
    %223 = vector.broadcast %208 : f32 to vector<8x256xf32>
    %224 = arith.mulf %223, %205 : vector<8x256xf32>
    %225 = arith.addf %222, %224 : vector<8x256xf32>
    %226 = arith.maximumf %217, %225 : vector<8x256xf32>
    %227 = vector.broadcast %209 : f32 to vector<8x256xf32>
    %228 = arith.addf %226, %227 : vector<8x256xf32>
    %229 = math.tanh %228 : vector<8x256xf32>
    %c0_98 = arith.constant 0 : index
    %c1536 = arith.constant 1536 : index
    %230 = vector.load %arg7[%c0_98, %c1536] : memref<8x4096xf32, #tpu.memory_space<vmem>>, vector<8x256xf32>
    tpu.vector_store %arg7[%c0_98, %c1536], %229 {strides = array<i32>} : memref<8x4096xf32, #tpu.memory_space<vmem>>, vector<8x256xf32>,
    %c0_99 = arith.constant 0 : index
    %c0_100 = arith.constant 0 : index
    %c0_101 = arith.constant 0 : index
    %231 = vector.load %arg1[%c0_99, %c0_100, %c0_101] : memref<4x8x256xf32, #tpu.memory_space<vmem>>, vector<1x8x256xf32>
    %232 = vector.shape_cast %231 : vector<1x8x256xf32> to vector<8x256xf32>
    %c1_102 = arith.constant 1 : index
    %c0_103 = arith.constant 0 : index
    %c0_104 = arith.constant 0 : index
    %233 = vector.load %arg1[%c1_102, %c0_103, %c0_104] : memref<4x8x256xf32, #tpu.memory_space<vmem>>, vector<1x8x256xf32>
    %234 = vector.shape_cast %233 : vector<1x8x256xf32> to vector<8x256xf32>
    %c2_105 = arith.constant 2 : index
    %c0_106 = arith.constant 0 : index
    %c0_107 = arith.constant 0 : index
    %235 = vector.load %arg1[%c2_105, %c0_106, %c0_107] : memref<4x8x256xf32, #tpu.memory_space<vmem>>, vector<1x8x256xf32>
    %236 = vector.shape_cast %235 : vector<1x8x256xf32> to vector<8x256xf32>
    %c3_108 = arith.constant 3 : index
    %c0_109 = arith.constant 0 : index
    %c0_110 = arith.constant 0 : index
    %237 = vector.load %arg1[%c3_108, %c0_109, %c0_110] : memref<4x8x256xf32, #tpu.memory_space<vmem>>, vector<1x8x256xf32>
    %238 = vector.shape_cast %237 : vector<1x8x256xf32> to vector<8x256xf32>
    %c21 = arith.constant 21 : index
    %239 = memref.load %arg2[%c21] : memref<48xf32, #tpu.memory_space<smem>>
    %c22 = arith.constant 22 : index
    %240 = memref.load %arg2[%c22] : memref<48xf32, #tpu.memory_space<smem>>
    %c23 = arith.constant 23 : index
    %241 = memref.load %arg2[%c23] : memref<48xf32, #tpu.memory_space<smem>>
    %c7_111 = arith.constant 7 : index
    %242 = memref.load %arg3[%c7_111] : memref<16xf32, #tpu.memory_space<smem>>
    %243 = vector.broadcast %239 : f32 to vector<8x256xf32>
    %244 = arith.mulf %243, %232 : vector<8x256xf32>
    %245 = vector.broadcast %240 : f32 to vector<8x256xf32>
    %246 = arith.mulf %245, %234 : vector<8x256xf32>
    %247 = arith.addf %244, %246 : vector<8x256xf32>
    %248 = vector.broadcast %241 : f32 to vector<8x256xf32>
    %249 = arith.mulf %248, %236 : vector<8x256xf32>
    %250 = arith.addf %247, %249 : vector<8x256xf32>
    %251 = vector.broadcast %239 : f32 to vector<8x256xf32>
    %252 = arith.mulf %251, %234 : vector<8x256xf32>
    %253 = vector.broadcast %240 : f32 to vector<8x256xf32>
    %254 = arith.mulf %253, %236 : vector<8x256xf32>
    %255 = arith.addf %252, %254 : vector<8x256xf32>
    %256 = vector.broadcast %241 : f32 to vector<8x256xf32>
    %257 = arith.mulf %256, %238 : vector<8x256xf32>
    %258 = arith.addf %255, %257 : vector<8x256xf32>
    %259 = arith.maximumf %250, %258 : vector<8x256xf32>
    %260 = vector.broadcast %242 : f32 to vector<8x256xf32>
    %261 = arith.addf %259, %260 : vector<8x256xf32>
    %262 = math.tanh %261 : vector<8x256xf32>
    %c0_112 = arith.constant 0 : index
    %c1792 = arith.constant 1792 : index
    %263 = vector.load %arg7[%c0_112, %c1792] : memref<8x4096xf32, #tpu.memory_space<vmem>>, vector<8x256xf32>
    tpu.vector_store %arg7[%c0_112, %c1792], %262 {strides = array<i32>} : memref<8x4096xf32, #tpu.memory_space<vmem>>, vector<8x256xf32>,
    %c0_113 = arith.constant 0 : index
    %c0_114 = arith.constant 0 : index
    %c0_115 = arith.constant 0 : index
    %264 = vector.load %arg1[%c0_113, %c0_114, %c0_115] : memref<4x8x256xf32, #tpu.memory_space<vmem>>, vector<1x8x256xf32>
    %265 = vector.shape_cast %264 : vector<1x8x256xf32> to vector<8x256xf32>
    %c1_116 = arith.constant 1 : index
    %c0_117 = arith.constant 0 : index
    %c0_118 = arith.constant 0 : index
    %266 = vector.load %arg1[%c1_116, %c0_117, %c0_118] : memref<4x8x256xf32, #tpu.memory_space<vmem>>, vector<1x8x256xf32>
    %267 = vector.shape_cast %266 : vector<1x8x256xf32> to vector<8x256xf32>
    %c2_119 = arith.constant 2 : index
    %c0_120 = arith.constant 0 : index
    %c0_121 = arith.constant 0 : index
    %268 = vector.load %arg1[%c2_119, %c0_120, %c0_121] : memref<4x8x256xf32, #tpu.memory_space<vmem>>, vector<1x8x256xf32>
    %269 = vector.shape_cast %268 : vector<1x8x256xf32> to vector<8x256xf32>
    %c3_122 = arith.constant 3 : index
    %c0_123 = arith.constant 0 : index
    %c0_124 = arith.constant 0 : index
    %270 = vector.load %arg1[%c3_122, %c0_123, %c0_124] : memref<4x8x256xf32, #tpu.memory_space<vmem>>, vector<1x8x256xf32>
    %271 = vector.shape_cast %270 : vector<1x8x256xf32> to vector<8x256xf32>
    %c24 = arith.constant 24 : index
    %272 = memref.load %arg2[%c24] : memref<48xf32, #tpu.memory_space<smem>>
    %c25 = arith.constant 25 : index
    %273 = memref.load %arg2[%c25] : memref<48xf32, #tpu.memory_space<smem>>
    %c26 = arith.constant 26 : index
    %274 = memref.load %arg2[%c26] : memref<48xf32, #tpu.memory_space<smem>>
    %c8_125 = arith.constant 8 : index
    %275 = memref.load %arg3[%c8_125] : memref<16xf32, #tpu.memory_space<smem>>
    %276 = vector.broadcast %272 : f32 to vector<8x256xf32>
    %277 = arith.mulf %276, %265 : vector<8x256xf32>
    %278 = vector.broadcast %273 : f32 to vector<8x256xf32>
    %279 = arith.mulf %278, %267 : vector<8x256xf32>
    %280 = arith.addf %277, %279 : vector<8x256xf32>
    %281 = vector.broadcast %274 : f32 to vector<8x256xf32>
    %282 = arith.mulf %281, %269 : vector<8x256xf32>
    %283 = arith.addf %280, %282 : vector<8x256xf32>
    %284 = vector.broadcast %272 : f32 to vector<8x256xf32>
    %285 = arith.mulf %284, %267 : vector<8x256xf32>
    %286 = vector.broadcast %273 : f32 to vector<8x256xf32>
    %287 = arith.mulf %286, %269 : vector<8x256xf32>
    %288 = arith.addf %285, %287 : vector<8x256xf32>
    %289 = vector.broadcast %274 : f32 to vector<8x256xf32>
    %290 = arith.mulf %289, %271 : vector<8x256xf32>
    %291 = arith.addf %288, %290 : vector<8x256xf32>
    %292 = arith.maximumf %283, %291 : vector<8x256xf32>
    %293 = vector.broadcast %275 : f32 to vector<8x256xf32>
    %294 = arith.addf %292, %293 : vector<8x256xf32>
    %295 = math.tanh %294 : vector<8x256xf32>
    %c0_126 = arith.constant 0 : index
    %c2048 = arith.constant 2048 : index
    %296 = vector.load %arg7[%c0_126, %c2048] : memref<8x4096xf32, #tpu.memory_space<vmem>>, vector<8x256xf32>
    tpu.vector_store %arg7[%c0_126, %c2048], %295 {strides = array<i32>} : memref<8x4096xf32, #tpu.memory_space<vmem>>, vector<8x256xf32>,
    %c0_127 = arith.constant 0 : index
    %c0_128 = arith.constant 0 : index
    %c0_129 = arith.constant 0 : index
    %297 = vector.load %arg1[%c0_127, %c0_128, %c0_129] : memref<4x8x256xf32, #tpu.memory_space<vmem>>, vector<1x8x256xf32>
    %298 = vector.shape_cast %297 : vector<1x8x256xf32> to vector<8x256xf32>
    %c1_130 = arith.constant 1 : index
    %c0_131 = arith.constant 0 : index
    %c0_132 = arith.constant 0 : index
    %299 = vector.load %arg1[%c1_130, %c0_131, %c0_132] : memref<4x8x256xf32, #tpu.memory_space<vmem>>, vector<1x8x256xf32>
    %300 = vector.shape_cast %299 : vector<1x8x256xf32> to vector<8x256xf32>
    %c2_133 = arith.constant 2 : index
    %c0_134 = arith.constant 0 : index
    %c0_135 = arith.constant 0 : index
    %301 = vector.load %arg1[%c2_133, %c0_134, %c0_135] : memref<4x8x256xf32, #tpu.memory_space<vmem>>, vector<1x8x256xf32>
    %302 = vector.shape_cast %301 : vector<1x8x256xf32> to vector<8x256xf32>
    %c3_136 = arith.constant 3 : index
    %c0_137 = arith.constant 0 : index
    %c0_138 = arith.constant 0 : index
    %303 = vector.load %arg1[%c3_136, %c0_137, %c0_138] : memref<4x8x256xf32, #tpu.memory_space<vmem>>, vector<1x8x256xf32>
    %304 = vector.shape_cast %303 : vector<1x8x256xf32> to vector<8x256xf32>
    %c27 = arith.constant 27 : index
    %305 = memref.load %arg2[%c27] : memref<48xf32, #tpu.memory_space<smem>>
    %c28 = arith.constant 28 : index
    %306 = memref.load %arg2[%c28] : memref<48xf32, #tpu.memory_space<smem>>
    %c29 = arith.constant 29 : index
    %307 = memref.load %arg2[%c29] : memref<48xf32, #tpu.memory_space<smem>>
    %c9_139 = arith.constant 9 : index
    %308 = memref.load %arg3[%c9_139] : memref<16xf32, #tpu.memory_space<smem>>
    %309 = vector.broadcast %305 : f32 to vector<8x256xf32>
    %310 = arith.mulf %309, %298 : vector<8x256xf32>
    %311 = vector.broadcast %306 : f32 to vector<8x256xf32>
    %312 = arith.mulf %311, %300 : vector<8x256xf32>
    %313 = arith.addf %310, %312 : vector<8x256xf32>
    %314 = vector.broadcast %307 : f32 to vector<8x256xf32>
    %315 = arith.mulf %314, %302 : vector<8x256xf32>
    %316 = arith.addf %313, %315 : vector<8x256xf32>
    %317 = vector.broadcast %305 : f32 to vector<8x256xf32>
    %318 = arith.mulf %317, %300 : vector<8x256xf32>
    %319 = vector.broadcast %306 : f32 to vector<8x256xf32>
    %320 = arith.mulf %319, %302 : vector<8x256xf32>
    %321 = arith.addf %318, %320 : vector<8x256xf32>
    %322 = vector.broadcast %307 : f32 to vector<8x256xf32>
    %323 = arith.mulf %322, %304 : vector<8x256xf32>
    %324 = arith.addf %321, %323 : vector<8x256xf32>
    %325 = arith.maximumf %316, %324 : vector<8x256xf32>
    %326 = vector.broadcast %308 : f32 to vector<8x256xf32>
    %327 = arith.addf %325, %326 : vector<8x256xf32>
    %328 = math.tanh %327 : vector<8x256xf32>
    %c0_140 = arith.constant 0 : index
    %c2304 = arith.constant 2304 : index
    %329 = vector.load %arg7[%c0_140, %c2304] : memref<8x4096xf32, #tpu.memory_space<vmem>>, vector<8x256xf32>
    tpu.vector_store %arg7[%c0_140, %c2304], %328 {strides = array<i32>} : memref<8x4096xf32, #tpu.memory_space<vmem>>, vector<8x256xf32>,
    %c0_141 = arith.constant 0 : index
    %c0_142 = arith.constant 0 : index
    %c0_143 = arith.constant 0 : index
    %330 = vector.load %arg1[%c0_141, %c0_142, %c0_143] : memref<4x8x256xf32, #tpu.memory_space<vmem>>, vector<1x8x256xf32>
    %331 = vector.shape_cast %330 : vector<1x8x256xf32> to vector<8x256xf32>
    %c1_144 = arith.constant 1 : index
    %c0_145 = arith.constant 0 : index
    %c0_146 = arith.constant 0 : index
    %332 = vector.load %arg1[%c1_144, %c0_145, %c0_146] : memref<4x8x256xf32, #tpu.memory_space<vmem>>, vector<1x8x256xf32>
    %333 = vector.shape_cast %332 : vector<1x8x256xf32> to vector<8x256xf32>
    %c2_147 = arith.constant 2 : index
    %c0_148 = arith.constant 0 : index
    %c0_149 = arith.constant 0 : index
    %334 = vector.load %arg1[%c2_147, %c0_148, %c0_149] : memref<4x8x256xf32, #tpu.memory_space<vmem>>, vector<1x8x256xf32>
    %335 = vector.shape_cast %334 : vector<1x8x256xf32> to vector<8x256xf32>
    %c3_150 = arith.constant 3 : index
    %c0_151 = arith.constant 0 : index
    %c0_152 = arith.constant 0 : index
    %336 = vector.load %arg1[%c3_150, %c0_151, %c0_152] : memref<4x8x256xf32, #tpu.memory_space<vmem>>, vector<1x8x256xf32>
    %337 = vector.shape_cast %336 : vector<1x8x256xf32> to vector<8x256xf32>
    %c30 = arith.constant 30 : index
    %338 = memref.load %arg2[%c30] : memref<48xf32, #tpu.memory_space<smem>>
    %c31 = arith.constant 31 : index
    %339 = memref.load %arg2[%c31] : memref<48xf32, #tpu.memory_space<smem>>
    %c32 = arith.constant 32 : index
    %340 = memref.load %arg2[%c32] : memref<48xf32, #tpu.memory_space<smem>>
    %c10_153 = arith.constant 10 : index
    %341 = memref.load %arg3[%c10_153] : memref<16xf32, #tpu.memory_space<smem>>
    %342 = vector.broadcast %338 : f32 to vector<8x256xf32>
    %343 = arith.mulf %342, %331 : vector<8x256xf32>
    %344 = vector.broadcast %339 : f32 to vector<8x256xf32>
    %345 = arith.mulf %344, %333 : vector<8x256xf32>
    %346 = arith.addf %343, %345 : vector<8x256xf32>
    %347 = vector.broadcast %340 : f32 to vector<8x256xf32>
    %348 = arith.mulf %347, %335 : vector<8x256xf32>
    %349 = arith.addf %346, %348 : vector<8x256xf32>
    %350 = vector.broadcast %338 : f32 to vector<8x256xf32>
    %351 = arith.mulf %350, %333 : vector<8x256xf32>
    %352 = vector.broadcast %339 : f32 to vector<8x256xf32>
    %353 = arith.mulf %352, %335 : vector<8x256xf32>
    %354 = arith.addf %351, %353 : vector<8x256xf32>
    %355 = vector.broadcast %340 : f32 to vector<8x256xf32>
    %356 = arith.mulf %355, %337 : vector<8x256xf32>
    %357 = arith.addf %354, %356 : vector<8x256xf32>
    %358 = arith.maximumf %349, %357 : vector<8x256xf32>
    %359 = vector.broadcast %341 : f32 to vector<8x256xf32>
    %360 = arith.addf %358, %359 : vector<8x256xf32>
    %361 = math.tanh %360 : vector<8x256xf32>
    %c0_154 = arith.constant 0 : index
    %c2560 = arith.constant 2560 : index
    %362 = vector.load %arg7[%c0_154, %c2560] : memref<8x4096xf32, #tpu.memory_space<vmem>>, vector<8x256xf32>
    tpu.vector_store %arg7[%c0_154, %c2560], %361 {strides = array<i32>} : memref<8x4096xf32, #tpu.memory_space<vmem>>, vector<8x256xf32>,
    %c0_155 = arith.constant 0 : index
    %c0_156 = arith.constant 0 : index
    %c0_157 = arith.constant 0 : index
    %363 = vector.load %arg1[%c0_155, %c0_156, %c0_157] : memref<4x8x256xf32, #tpu.memory_space<vmem>>, vector<1x8x256xf32>
    %364 = vector.shape_cast %363 : vector<1x8x256xf32> to vector<8x256xf32>
    %c1_158 = arith.constant 1 : index
    %c0_159 = arith.constant 0 : index
    %c0_160 = arith.constant 0 : index
    %365 = vector.load %arg1[%c1_158, %c0_159, %c0_160] : memref<4x8x256xf32, #tpu.memory_space<vmem>>, vector<1x8x256xf32>
    %366 = vector.shape_cast %365 : vector<1x8x256xf32> to vector<8x256xf32>
    %c2_161 = arith.constant 2 : index
    %c0_162 = arith.constant 0 : index
    %c0_163 = arith.constant 0 : index
    %367 = vector.load %arg1[%c2_161, %c0_162, %c0_163] : memref<4x8x256xf32, #tpu.memory_space<vmem>>, vector<1x8x256xf32>
    %368 = vector.shape_cast %367 : vector<1x8x256xf32> to vector<8x256xf32>
    %c3_164 = arith.constant 3 : index
    %c0_165 = arith.constant 0 : index
    %c0_166 = arith.constant 0 : index
    %369 = vector.load %arg1[%c3_164, %c0_165, %c0_166] : memref<4x8x256xf32, #tpu.memory_space<vmem>>, vector<1x8x256xf32>
    %370 = vector.shape_cast %369 : vector<1x8x256xf32> to vector<8x256xf32>
    %c33 = arith.constant 33 : index
    %371 = memref.load %arg2[%c33] : memref<48xf32, #tpu.memory_space<smem>>
    %c34 = arith.constant 34 : index
    %372 = memref.load %arg2[%c34] : memref<48xf32, #tpu.memory_space<smem>>
    %c35 = arith.constant 35 : index
    %373 = memref.load %arg2[%c35] : memref<48xf32, #tpu.memory_space<smem>>
    %c11_167 = arith.constant 11 : index
    %374 = memref.load %arg3[%c11_167] : memref<16xf32, #tpu.memory_space<smem>>
    %375 = vector.broadcast %371 : f32 to vector<8x256xf32>
    %376 = arith.mulf %375, %364 : vector<8x256xf32>
    %377 = vector.broadcast %372 : f32 to vector<8x256xf32>
    %378 = arith.mulf %377, %366 : vector<8x256xf32>
    %379 = arith.addf %376, %378 : vector<8x256xf32>
    %380 = vector.broadcast %373 : f32 to vector<8x256xf32>
    %381 = arith.mulf %380, %368 : vector<8x256xf32>
    %382 = arith.addf %379, %381 : vector<8x256xf32>
    %383 = vector.broadcast %371 : f32 to vector<8x256xf32>
    %384 = arith.mulf %383, %366 : vector<8x256xf32>
    %385 = vector.broadcast %372 : f32 to vector<8x256xf32>
    %386 = arith.mulf %385, %368 : vector<8x256xf32>
    %387 = arith.addf %384, %386 : vector<8x256xf32>
    %388 = vector.broadcast %373 : f32 to vector<8x256xf32>
    %389 = arith.mulf %388, %370 : vector<8x256xf32>
    %390 = arith.addf %387, %389 : vector<8x256xf32>
    %391 = arith.maximumf %382, %390 : vector<8x256xf32>
    %392 = vector.broadcast %374 : f32 to vector<8x256xf32>
    %393 = arith.addf %391, %392 : vector<8x256xf32>
    %394 = math.tanh %393 : vector<8x256xf32>
    %c0_168 = arith.constant 0 : index
    %c2816 = arith.constant 2816 : index
    %395 = vector.load %arg7[%c0_168, %c2816] : memref<8x4096xf32, #tpu.memory_space<vmem>>, vector<8x256xf32>
    tpu.vector_store %arg7[%c0_168, %c2816], %394 {strides = array<i32>} : memref<8x4096xf32, #tpu.memory_space<vmem>>, vector<8x256xf32>,
    %c0_169 = arith.constant 0 : index
    %c0_170 = arith.constant 0 : index
    %c0_171 = arith.constant 0 : index
    %396 = vector.load %arg1[%c0_169, %c0_170, %c0_171] : memref<4x8x256xf32, #tpu.memory_space<vmem>>, vector<1x8x256xf32>
    %397 = vector.shape_cast %396 : vector<1x8x256xf32> to vector<8x256xf32>
    %c1_172 = arith.constant 1 : index
    %c0_173 = arith.constant 0 : index
    %c0_174 = arith.constant 0 : index
    %398 = vector.load %arg1[%c1_172, %c0_173, %c0_174] : memref<4x8x256xf32, #tpu.memory_space<vmem>>, vector<1x8x256xf32>
    %399 = vector.shape_cast %398 : vector<1x8x256xf32> to vector<8x256xf32>
    %c2_175 = arith.constant 2 : index
    %c0_176 = arith.constant 0 : index
    %c0_177 = arith.constant 0 : index
    %400 = vector.load %arg1[%c2_175, %c0_176, %c0_177] : memref<4x8x256xf32, #tpu.memory_space<vmem>>, vector<1x8x256xf32>
    %401 = vector.shape_cast %400 : vector<1x8x256xf32> to vector<8x256xf32>
    %c3_178 = arith.constant 3 : index
    %c0_179 = arith.constant 0 : index
    %c0_180 = arith.constant 0 : index
    %402 = vector.load %arg1[%c3_178, %c0_179, %c0_180] : memref<4x8x256xf32, #tpu.memory_space<vmem>>, vector<1x8x256xf32>
    %403 = vector.shape_cast %402 : vector<1x8x256xf32> to vector<8x256xf32>
    %c36 = arith.constant 36 : index
    %404 = memref.load %arg2[%c36] : memref<48xf32, #tpu.memory_space<smem>>
    %c37 = arith.constant 37 : index
    %405 = memref.load %arg2[%c37] : memref<48xf32, #tpu.memory_space<smem>>
    %c38 = arith.constant 38 : index
    %406 = memref.load %arg2[%c38] : memref<48xf32, #tpu.memory_space<smem>>
    %c12_181 = arith.constant 12 : index
    %407 = memref.load %arg3[%c12_181] : memref<16xf32, #tpu.memory_space<smem>>
    %408 = vector.broadcast %404 : f32 to vector<8x256xf32>
    %409 = arith.mulf %408, %397 : vector<8x256xf32>
    %410 = vector.broadcast %405 : f32 to vector<8x256xf32>
    %411 = arith.mulf %410, %399 : vector<8x256xf32>
    %412 = arith.addf %409, %411 : vector<8x256xf32>
    %413 = vector.broadcast %406 : f32 to vector<8x256xf32>
    %414 = arith.mulf %413, %401 : vector<8x256xf32>
    %415 = arith.addf %412, %414 : vector<8x256xf32>
    %416 = vector.broadcast %404 : f32 to vector<8x256xf32>
    %417 = arith.mulf %416, %399 : vector<8x256xf32>
    %418 = vector.broadcast %405 : f32 to vector<8x256xf32>
    %419 = arith.mulf %418, %401 : vector<8x256xf32>
    %420 = arith.addf %417, %419 : vector<8x256xf32>
    %421 = vector.broadcast %406 : f32 to vector<8x256xf32>
    %422 = arith.mulf %421, %403 : vector<8x256xf32>
    %423 = arith.addf %420, %422 : vector<8x256xf32>
    %424 = arith.maximumf %415, %423 : vector<8x256xf32>
    %425 = vector.broadcast %407 : f32 to vector<8x256xf32>
    %426 = arith.addf %424, %425 : vector<8x256xf32>
    %427 = math.tanh %426 : vector<8x256xf32>
    %c0_182 = arith.constant 0 : index
    %c3072 = arith.constant 3072 : index
    %428 = vector.load %arg7[%c0_182, %c3072] : memref<8x4096xf32, #tpu.memory_space<vmem>>, vector<8x256xf32>
    tpu.vector_store %arg7[%c0_182, %c3072], %427 {strides = array<i32>} : memref<8x4096xf32, #tpu.memory_space<vmem>>, vector<8x256xf32>,
    %c0_183 = arith.constant 0 : index
    %c0_184 = arith.constant 0 : index
    %c0_185 = arith.constant 0 : index
    %429 = vector.load %arg1[%c0_183, %c0_184, %c0_185] : memref<4x8x256xf32, #tpu.memory_space<vmem>>, vector<1x8x256xf32>
    %430 = vector.shape_cast %429 : vector<1x8x256xf32> to vector<8x256xf32>
    %c1_186 = arith.constant 1 : index
    %c0_187 = arith.constant 0 : index
    %c0_188 = arith.constant 0 : index
    %431 = vector.load %arg1[%c1_186, %c0_187, %c0_188] : memref<4x8x256xf32, #tpu.memory_space<vmem>>, vector<1x8x256xf32>
    %432 = vector.shape_cast %431 : vector<1x8x256xf32> to vector<8x256xf32>
    %c2_189 = arith.constant 2 : index
    %c0_190 = arith.constant 0 : index
    %c0_191 = arith.constant 0 : index
    %433 = vector.load %arg1[%c2_189, %c0_190, %c0_191] : memref<4x8x256xf32, #tpu.memory_space<vmem>>, vector<1x8x256xf32>
    %434 = vector.shape_cast %433 : vector<1x8x256xf32> to vector<8x256xf32>
    %c3_192 = arith.constant 3 : index
    %c0_193 = arith.constant 0 : index
    %c0_194 = arith.constant 0 : index
    %435 = vector.load %arg1[%c3_192, %c0_193, %c0_194] : memref<4x8x256xf32, #tpu.memory_space<vmem>>, vector<1x8x256xf32>
    %436 = vector.shape_cast %435 : vector<1x8x256xf32> to vector<8x256xf32>
    %c39 = arith.constant 39 : index
    %437 = memref.load %arg2[%c39] : memref<48xf32, #tpu.memory_space<smem>>
    %c40 = arith.constant 40 : index
    %438 = memref.load %arg2[%c40] : memref<48xf32, #tpu.memory_space<smem>>
    %c41 = arith.constant 41 : index
    %439 = memref.load %arg2[%c41] : memref<48xf32, #tpu.memory_space<smem>>
    %c13_195 = arith.constant 13 : index
    %440 = memref.load %arg3[%c13_195] : memref<16xf32, #tpu.memory_space<smem>>
    %441 = vector.broadcast %437 : f32 to vector<8x256xf32>
    %442 = arith.mulf %441, %430 : vector<8x256xf32>
    %443 = vector.broadcast %438 : f32 to vector<8x256xf32>
    %444 = arith.mulf %443, %432 : vector<8x256xf32>
    %445 = arith.addf %442, %444 : vector<8x256xf32>
    %446 = vector.broadcast %439 : f32 to vector<8x256xf32>
    %447 = arith.mulf %446, %434 : vector<8x256xf32>
    %448 = arith.addf %445, %447 : vector<8x256xf32>
    %449 = vector.broadcast %437 : f32 to vector<8x256xf32>
    %450 = arith.mulf %449, %432 : vector<8x256xf32>
    %451 = vector.broadcast %438 : f32 to vector<8x256xf32>
    %452 = arith.mulf %451, %434 : vector<8x256xf32>
    %453 = arith.addf %450, %452 : vector<8x256xf32>
    %454 = vector.broadcast %439 : f32 to vector<8x256xf32>
    %455 = arith.mulf %454, %436 : vector<8x256xf32>
    %456 = arith.addf %453, %455 : vector<8x256xf32>
    %457 = arith.maximumf %448, %456 : vector<8x256xf32>
    %458 = vector.broadcast %440 : f32 to vector<8x256xf32>
    %459 = arith.addf %457, %458 : vector<8x256xf32>
    %460 = math.tanh %459 : vector<8x256xf32>
    %c0_196 = arith.constant 0 : index
    %c3328 = arith.constant 3328 : index
    %461 = vector.load %arg7[%c0_196, %c3328] : memref<8x4096xf32, #tpu.memory_space<vmem>>, vector<8x256xf32>
    tpu.vector_store %arg7[%c0_196, %c3328], %460 {strides = array<i32>} : memref<8x4096xf32, #tpu.memory_space<vmem>>, vector<8x256xf32>,
    %c0_197 = arith.constant 0 : index
    %c0_198 = arith.constant 0 : index
    %c0_199 = arith.constant 0 : index
    %462 = vector.load %arg1[%c0_197, %c0_198, %c0_199] : memref<4x8x256xf32, #tpu.memory_space<vmem>>, vector<1x8x256xf32>
    %463 = vector.shape_cast %462 : vector<1x8x256xf32> to vector<8x256xf32>
    %c1_200 = arith.constant 1 : index
    %c0_201 = arith.constant 0 : index
    %c0_202 = arith.constant 0 : index
    %464 = vector.load %arg1[%c1_200, %c0_201, %c0_202] : memref<4x8x256xf32, #tpu.memory_space<vmem>>, vector<1x8x256xf32>
    %465 = vector.shape_cast %464 : vector<1x8x256xf32> to vector<8x256xf32>
    %c2_203 = arith.constant 2 : index
    %c0_204 = arith.constant 0 : index
    %c0_205 = arith.constant 0 : index
    %466 = vector.load %arg1[%c2_203, %c0_204, %c0_205] : memref<4x8x256xf32, #tpu.memory_space<vmem>>, vector<1x8x256xf32>
    %467 = vector.shape_cast %466 : vector<1x8x256xf32> to vector<8x256xf32>
    %c3_206 = arith.constant 3 : index
    %c0_207 = arith.constant 0 : index
    %c0_208 = arith.constant 0 : index
    %468 = vector.load %arg1[%c3_206, %c0_207, %c0_208] : memref<4x8x256xf32, #tpu.memory_space<vmem>>, vector<1x8x256xf32>
    %469 = vector.shape_cast %468 : vector<1x8x256xf32> to vector<8x256xf32>
    %c42 = arith.constant 42 : index
    %470 = memref.load %arg2[%c42] : memref<48xf32, #tpu.memory_space<smem>>
    %c43 = arith.constant 43 : index
    %471 = memref.load %arg2[%c43] : memref<48xf32, #tpu.memory_space<smem>>
    %c44 = arith.constant 44 : index
    %472 = memref.load %arg2[%c44] : memref<48xf32, #tpu.memory_space<smem>>
    %c14_209 = arith.constant 14 : index
    %473 = memref.load %arg3[%c14_209] : memref<16xf32, #tpu.memory_space<smem>>
    %474 = vector.broadcast %470 : f32 to vector<8x256xf32>
    %475 = arith.mulf %474, %463 : vector<8x256xf32>
    %476 = vector.broadcast %471 : f32 to vector<8x256xf32>
    %477 = arith.mulf %476, %465 : vector<8x256xf32>
    %478 = arith.addf %475, %477 : vector<8x256xf32>
    %479 = vector.broadcast %472 : f32 to vector<8x256xf32>
    %480 = arith.mulf %479, %467 : vector<8x256xf32>
    %481 = arith.addf %478, %480 : vector<8x256xf32>
    %482 = vector.broadcast %470 : f32 to vector<8x256xf32>
    %483 = arith.mulf %482, %465 : vector<8x256xf32>
    %484 = vector.broadcast %471 : f32 to vector<8x256xf32>
    %485 = arith.mulf %484, %467 : vector<8x256xf32>
    %486 = arith.addf %483, %485 : vector<8x256xf32>
    %487 = vector.broadcast %472 : f32 to vector<8x256xf32>
    %488 = arith.mulf %487, %469 : vector<8x256xf32>
    %489 = arith.addf %486, %488 : vector<8x256xf32>
    %490 = arith.maximumf %481, %489 : vector<8x256xf32>
    %491 = vector.broadcast %473 : f32 to vector<8x256xf32>
    %492 = arith.addf %490, %491 : vector<8x256xf32>
    %493 = math.tanh %492 : vector<8x256xf32>
    %c0_210 = arith.constant 0 : index
    %c3584 = arith.constant 3584 : index
    %494 = vector.load %arg7[%c0_210, %c3584] : memref<8x4096xf32, #tpu.memory_space<vmem>>, vector<8x256xf32>
    tpu.vector_store %arg7[%c0_210, %c3584], %493 {strides = array<i32>} : memref<8x4096xf32, #tpu.memory_space<vmem>>, vector<8x256xf32>,
    %c0_211 = arith.constant 0 : index
    %c0_212 = arith.constant 0 : index
    %c0_213 = arith.constant 0 : index
    %495 = vector.load %arg1[%c0_211, %c0_212, %c0_213] : memref<4x8x256xf32, #tpu.memory_space<vmem>>, vector<1x8x256xf32>
    %496 = vector.shape_cast %495 : vector<1x8x256xf32> to vector<8x256xf32>
    %c1_214 = arith.constant 1 : index
    %c0_215 = arith.constant 0 : index
    %c0_216 = arith.constant 0 : index
    %497 = vector.load %arg1[%c1_214, %c0_215, %c0_216] : memref<4x8x256xf32, #tpu.memory_space<vmem>>, vector<1x8x256xf32>
    %498 = vector.shape_cast %497 : vector<1x8x256xf32> to vector<8x256xf32>
    %c2_217 = arith.constant 2 : index
    %c0_218 = arith.constant 0 : index
    %c0_219 = arith.constant 0 : index
    %499 = vector.load %arg1[%c2_217, %c0_218, %c0_219] : memref<4x8x256xf32, #tpu.memory_space<vmem>>, vector<1x8x256xf32>
    %500 = vector.shape_cast %499 : vector<1x8x256xf32> to vector<8x256xf32>
    %c3_220 = arith.constant 3 : index
    %c0_221 = arith.constant 0 : index
    %c0_222 = arith.constant 0 : index
    %501 = vector.load %arg1[%c3_220, %c0_221, %c0_222] : memref<4x8x256xf32, #tpu.memory_space<vmem>>, vector<1x8x256xf32>
    %502 = vector.shape_cast %501 : vector<1x8x256xf32> to vector<8x256xf32>
    %c45 = arith.constant 45 : index
    %503 = memref.load %arg2[%c45] : memref<48xf32, #tpu.memory_space<smem>>
    %c46 = arith.constant 46 : index
    %504 = memref.load %arg2[%c46] : memref<48xf32, #tpu.memory_space<smem>>
    %c47 = arith.constant 47 : index
    %505 = memref.load %arg2[%c47] : memref<48xf32, #tpu.memory_space<smem>>
    %c15_223 = arith.constant 15 : index
    %506 = memref.load %arg3[%c15_223] : memref<16xf32, #tpu.memory_space<smem>>
    %507 = vector.broadcast %503 : f32 to vector<8x256xf32>
    %508 = arith.mulf %507, %496 : vector<8x256xf32>
    %509 = vector.broadcast %504 : f32 to vector<8x256xf32>
    %510 = arith.mulf %509, %498 : vector<8x256xf32>
    %511 = arith.addf %508, %510 : vector<8x256xf32>
    %512 = vector.broadcast %505 : f32 to vector<8x256xf32>
    %513 = arith.mulf %512, %500 : vector<8x256xf32>
    %514 = arith.addf %511, %513 : vector<8x256xf32>
    %515 = vector.broadcast %503 : f32 to vector<8x256xf32>
    %516 = arith.mulf %515, %498 : vector<8x256xf32>
    %517 = vector.broadcast %504 : f32 to vector<8x256xf32>
    %518 = arith.mulf %517, %500 : vector<8x256xf32>
    %519 = arith.addf %516, %518 : vector<8x256xf32>
    %520 = vector.broadcast %505 : f32 to vector<8x256xf32>
    %521 = arith.mulf %520, %502 : vector<8x256xf32>
    %522 = arith.addf %519, %521 : vector<8x256xf32>
    %523 = arith.maximumf %514, %522 : vector<8x256xf32>
    %524 = vector.broadcast %506 : f32 to vector<8x256xf32>
    %525 = arith.addf %523, %524 : vector<8x256xf32>
    %526 = math.tanh %525 : vector<8x256xf32>
    %c0_224 = arith.constant 0 : index
    %c3840 = arith.constant 3840 : index
    %527 = vector.load %arg7[%c0_224, %c3840] : memref<8x4096xf32, #tpu.memory_space<vmem>>, vector<8x256xf32>
    tpu.vector_store %arg7[%c0_224, %c3840], %526 {strides = array<i32>} : memref<8x4096xf32, #tpu.memory_space<vmem>>, vector<8x256xf32>,
    %c0_225 = arith.constant 0 : index
    %c0_226 = arith.constant 0 : index
    %528 = vector.load %arg7[%c0_225, %c0_226] : memref<8x4096xf32, #tpu.memory_space<vmem>>, vector<8x4096xf32>
    %c0_227 = arith.constant 0 : index
    %c0_228 = arith.constant 0 : index
    %529 = vector.load %arg4[%c0_227, %c0_228] : memref<4096x10xf32, #tpu.memory_space<vmem>>, vector<4096x10xf32>
    %cst = arith.constant dense<0.000000e+00> : vector<8x10xf32>
    %530 = tpu.matmul %528, %529, %cst {dimension_numbers = #tpu.dot_dimension_numbers<[1], [0], [0], [1], [0, 0, 1, 1], [], []>} : vector<8x4096xf32>, vector<4096x10xf32>, vector<8x10xf32> -> vector<8x10xf32>
    %c0_229 = arith.constant 0 : index
    %c0_230 = arith.constant 0 : index
    %531 = vector.load %arg5[%c0_229, %c0_230] : memref<1x10xf32, #tpu.memory_space<vmem>>, vector<1x10xf32>
    %532 = vector.broadcast %531 : vector<1x10xf32> to vector<8x10xf32>
    %533 = arith.addf %530, %532 : vector<8x10xf32>
    %c0_231 = arith.constant 0 : index
    %c0_232 = arith.constant 0 : index
    %534 = vector.load %arg6[%c0_231, %c0_232] : memref<8x10xf32, #tpu.memory_space<vmem>>, vector<8x10xf32>
    tpu.vector_store %arg6[%c0_231, %c0_232], %533 {strides = array<i32>} : memref<8x10xf32, #tpu.memory_space<vmem>>, vector<8x10xf32>,
    return
  }
  func.func @transform_0(%arg0: i32) -> (i32, i32, i32) {
    %c0_i32 = arith.constant 0 : i32
    %c0_i32_0 = arith.constant 0 : i32
    %c0_i32_1 = arith.constant 0 : i32
    return %c0_i32, %arg0, %c0_i32_0 : i32, i32, i32
  }
  func.func @transform_1(%arg0: i32) -> i32 {
    %c0_i32 = arith.constant 0 : i32
    %c0_i32_0 = arith.constant 0 : i32
    return %c0_i32 : i32
  }
  func.func @transform_2(%arg0: i32) -> i32 {
    %c0_i32 = arith.constant 0 : i32
    %c0_i32_0 = arith.constant 0 : i32
    return %c0_i32 : i32
  }
  func.func @transform_3(%arg0: i32) -> (i32, i32) {
    %c0_i32 = arith.constant 0 : i32
    %c0_i32_0 = arith.constant 0 : i32
    %c0_i32_1 = arith.constant 0 : i32
    return %c0_i32, %c0_i32_0 : i32, i32
  }
  func.func @transform_4(%arg0: i32) -> (i32, i32) {
    %c0_i32 = arith.constant 0 : i32
    %c0_i32_0 = arith.constant 0 : i32
    %c0_i32_1 = arith.constant 0 : i32
    return %c0_i32, %c0_i32_0 : i32, i32
  }
  func.func @transform_5(%arg0: i32) -> (i32, i32) {
    %c0_i32 = arith.constant 0 : i32
    %c0_i32_0 = arith.constant 0 : i32
    return %arg0, %c0_i32 : i32, i32
  }
}

</mosaic_0001>

<llo_original>
// kernel: tpu_custom_call.1
$region0: #{tpu_custom_call.1}
  #allocation0 [shape = 'u32[]', space=smem, size = 0x4, offset = 0x4, fixed_abs, tag = 'smem constant byte address 0x4 - core index']
  #allocation1 [shape = 'u32[72,128]{1,0:T(1,128)}', space=vmem, size = 0x9000, scoped, tag = 'internal scratch']
  #allocation2 [shape = 'f32[8,4096]{1,0:T(8,128)}', space=vmem, size = 0x20000, scoped, tag = 'scratch operand']
  %s0 = inlined_call_operand.vmem [shape: f32[4,8,256], index: 0, kind: input, shape index: {}]
  %s1 = inlined_call_operand.vmem [shape: f32[48], index: 1, kind: input, shape index: {}]
  %s2 = inlined_call_operand.vmem [shape: f32[16], index: 2, kind: input, shape index: {}]
  %s3 = inlined_call_operand.vmem [shape: f32[4096,10], index: 3, kind: input, shape index: {}]
  %s4 = inlined_call_operand.vmem [shape: f32[1,10], index: 4, kind: input, shape index: {}]
  %s5 = inlined_call_operand.hbm [shape: f32[8,10], index: 5, kind: output, shape index: {}]
  %s6 = sld [smem:[#allocation0]]
  $region38: #{tpu_custom_call.1} parent=0
    _
  %s8 = ssub.s32 1, %s6
  %s9 = scalar_select 0, %s8, %s6
  $region1: #{tpu_custom_call.1} parent=0
    #allocation3 [shape = 'u8[512]{0}', space=smem, size = 0x200, scoped, tag = 'input window, operand 1, single buffered']
    #allocation4 [shape = 's32[1]{0}', space=sflag, size = 0x4, scoped, tag = 'scoped memory for tpu_custom_call.1']
    #allocation5 [shape = 's32[1]{0}', space=sflag, size = 0x4, scoped, tag = 'scoped memory for tpu_custom_call.1']
    #allocation6 [shape = 'u8[512]{0}', space=smem, size = 0x200, scoped, tag = 'input window, operand 2, single buffered']
    #allocation7 [shape = 's32[1]{0}', space=sflag, size = 0x4, scoped, tag = 'scoped memory for tpu_custom_call.1']
    #allocation8 [shape = 'u8[4096]{0}', space=vmem, size = 0x1000, scoped, tag = 'output window, operand 0, single buffered']
    %10 = vsyncpa [#allocation5], 0
    %11 = vsyncpa [#allocation7], 0
    %12 = vsyncpa [#allocation4], 0
    // Predicated region
    $region2: #{tpu_custom_call.1} parent=1 // pred_check
      _
    $region3: #{tpu_custom_call.1} parent=1 // pred_check_branch
      %14 = sbr.rel (0) target = $region5
    $region4: #{tpu_custom_call.1} parent=1 // pred_region
      _
    $region5: #{tpu_custom_call.1} parent=1 // pred_fallthru
      _
    // Predicated region
    $region6: #{tpu_custom_call.1} parent=1 // pred_check
      _
    $region7: #{tpu_custom_call.1} parent=1 // pred_check_branch
      %16 = sbr.rel (0) target = $region9
    $region8: #{tpu_custom_call.1} parent=1 // pred_region
      %18 = vsyncadd [#allocation5], 0
      %s20 = sshll.u32 %s1, 4
      %s21 = int_to_ptr.vmem [resolvable:$true] %s20
      %23 = dma.vmem_to_smem %s21, 16, [#allocation3], [#allocation5]
    $region9: #{tpu_custom_call.1} parent=1 // pred_fallthru
      _
    // Predicated region
    $region10: #{tpu_custom_call.1} parent=1 // pred_check
      _
    $region11: #{tpu_custom_call.1} parent=1 // pred_check_branch
      %25 = sbr.rel (0) target = $region13
    $region12: #{tpu_custom_call.1} parent=1 // pred_region
      %27 = vsyncadd [#allocation7], 0
      %s29 = sshll.u32 %s2, 4
      %s30 = int_to_ptr.vmem [resolvable:$true] %s29
      %32 = dma.vmem_to_smem %s30, 16, [#allocation6], [#allocation7]
    $region13: #{tpu_custom_call.1} parent=1 // pred_fallthru
      _
    // Predicated region
    $region14: #{tpu_custom_call.1} parent=1 // pred_check
      _
    $region15: #{tpu_custom_call.1} parent=1 // pred_check_branch
      %34 = sbr.rel (0) target = $region17
    $region16: #{tpu_custom_call.1} parent=1 // pred_region
      _
    $region17: #{tpu_custom_call.1} parent=1 // pred_fallthru
      _
    // Predicated region
    $region18: #{tpu_custom_call.1} parent=1 // pred_check
      _
    $region19: #{tpu_custom_call.1} parent=1 // pred_check_branch
      %36 = sbr.rel (0) target = $region21
    $region20: #{tpu_custom_call.1} parent=1 // pred_region
      _
    $region21: #{tpu_custom_call.1} parent=1 // pred_fallthru
      _
    // Predicated region
    $region22: #{tpu_custom_call.1} parent=1 // pred_check
      _
    $region23: #{tpu_custom_call.1} parent=1 // pred_check_branch
      %38 = sbr.rel (0) target = $region25
    $region24: #{tpu_custom_call.1} parent=1 // pred_region
      %40 = dma.done [#allocation5], 16
    $region25: #{tpu_custom_call.1} parent=1 // pred_fallthru
      _
    // Predicated region
    $region26: #{tpu_custom_call.1} parent=1 // pred_check
      _
    $region27: #{tpu_custom_call.1} parent=1 // pred_check_branch
      %42 = sbr.rel (0) target = $region29
    $region28: #{tpu_custom_call.1} parent=1 // pred_region
      %44 = dma.done [#allocation7], 16
    $region29: #{tpu_custom_call.1} parent=1 // pred_fallthru
      _
    %45 = sfence
    %v46 = vld [vmem:[%s0] sm:$0xff]
    %v47 = vld [vmem:[%s0 + $0x8] sm:$0xff]
    %s48 = scalar_lea.vmem %s0, 16
    %v49 = vld [vmem:[%s48] sm:$0xff]
    %v50 = vld [vmem:[%s48 + $0x8] sm:$0xff]
    %s51 = scalar_lea.vmem %s0, 32
    %v52 = vld [vmem:[%s51] sm:$0xff]
    %v53 = vld [vmem:[%s51 + $0x8] sm:$0xff]
    %s54 = scalar_lea.vmem %s0, 48
    %v55 = vld [vmem:[%s54] sm:$0xff]
    %v56 = vld [vmem:[%s54 + $0x8] sm:$0xff]
    %s57 = sld [smem:[#allocation3]]
    %s58 = sld [smem:[#allocation3 + $0x1]]
    %s59 = sld [smem:[#allocation3 + $0x2]]
    %s60 = sld [smem:[#allocation6]]
    %v61 = vstv %s57
    %v62 = vmul.f32 %v61, %v46
    %v63 = vmul.f32 %v61, %v47
    %v64 = vstv %s58
    %v65 = vmul.f32 %v64, %v49
    %v66 = vmul.f32 %v64, %v50
    %v67 = vadd.f32 %v62, %v65
    %v68 = vadd.f32 %v63, %v66
    %v69 = vstv %s59
    %v70 = vmul.f32 %v69, %v52
    %v71 = vmul.f32 %v69, %v53
    %v72 = vadd.f32 %v67, %v70
    %v73 = vadd.f32 %v68, %v71
    %v74 = vmul.f32 %v61, %v49
    %v75 = vmul.f32 %v61, %v50
    %v76 = vmul.f32 %v64, %v52
    %v77 = vmul.f32 %v64, %v53
    %v78 = vadd.f32 %v74, %v76
    %v79 = vadd.f32 %v75, %v77
    %v80 = vmul.f32 %v69, %v55
    %v81 = vmul.f32 %v69, %v56
    %v82 = vadd.f32 %v78, %v80
    %v83 = vadd.f32 %v79, %v81
    %v84 = vmax.f32 %v72, %v82
    %v85 = vmax.f32 %v73, %v83
    %v86 = vstv %s60
    %v87 = vadd.f32 %v84, %v86
    %v88 = vadd.f32 %v85, %v86
    %v89 = vtanh.pop %v87
    %v90 = vtanh.pop %v88
    %91 = vst [vmem:[#allocation2] sm:$0xff] %v89
    %92 = vst [vmem:[#allocation2 + $0x8] sm:$0xff] %v90
    %v93 = vld [vmem:[%s0] sm:$0xff]
    %v94 = vld [vmem:[%s0 + $0x8] sm:$0xff]
    %v95 = vld [vmem:[%s48] sm:$0xff]
    %v96 = vld [vmem:[%s48 + $0x8] sm:$0xff]
    %v97 = vld [vmem:[%s51] sm:$0xff]
    %v98 = vld [vmem:[%s51 + $0x8] sm:$0xff]
    %v99 = vld [vmem:[%s54] sm:$0xff]
    %v100 = vld [vmem:[%s54 + $0x8] sm:$0xff]
    %s101 = sld [smem:[#allocation3 + $0x3]]
    %s102 = sld [smem:[#allocation3 + $0x4]]
    %s103 = sld [smem:[#allocation3 + $0x5]]
    %s104 = sld [smem:[#allocation6 + $0x1]]
    %v105 = vstv %s101
    %v106 = vmul.f32 %v105, %v93
    %v107 = vmul.f32 %v105, %v94
    %v108 = vstv %s102
    %v109 = vmul.f32 %v108, %v95
    %v110 = vmul.f32 %v108, %v96
    %v111 = vadd.f32 %v106, %v109
    %v112 = vadd.f32 %v107, %v110
    %v113 = vstv %s103
    %v114 = vmul.f32 %v113, %v97
    %v115 = vmul.f32 %v113, %v98
    %v116 = vadd.f32 %v111, %v114
    %v117 = vadd.f32 %v112, %v115
    %v118 = vmul.f32 %v105, %v95
    %v119 = vmul.f32 %v105, %v96
    %v120 = vmul.f32 %v108, %v97
    %v121 = vmul.f32 %v108, %v98
    %v122 = vadd.f32 %v118, %v120
    %v123 = vadd.f32 %v119, %v121
    %v124 = vmul.f32 %v113, %v99
    %v125 = vmul.f32 %v113, %v100
    %v126 = vadd.f32 %v122, %v124
    %v127 = vadd.f32 %v123, %v125
    %v128 = vmax.f32 %v116, %v126
    %v129 = vmax.f32 %v117, %v127
    %v130 = vstv %s104
    %v131 = vadd.f32 %v128, %v130
    %v132 = vadd.f32 %v129, %v130
    %v133 = vtanh.pop %v131
    %v134 = vtanh.pop %v132
    %135 = vst [vmem:[#allocation2 + $0x10] sm:$0xff] %v133
    %136 = vst [vmem:[#allocation2 + $0x18] sm:$0xff] %v134
    %v137 = vld [vmem:[%s0] sm:$0xff]
    %v138 = vld [vmem:[%s0 + $0x8] sm:$0xff]
    %v139 = vld [vmem:[%s48] sm:$0xff]
    %v140 = vld [vmem:[%s48 + $0x8] sm:$0xff]
    %v141 = vld [vmem:[%s51] sm:$0xff]
    %v142 = vld [vmem:[%s51 + $0x8] sm:$0xff]
    %v143 = vld [vmem:[%s54] sm:$0xff]
    %v144 = vld [vmem:[%s54 + $0x8] sm:$0xff]
    %s145 = sld [smem:[#allocation3 + $0x6]]
    %s146 = sld [smem:[#allocation3 + $0x7]]
    %s147 = sld [smem:[#allocation3 + $0x8]]
    %s148 = sld [smem:[#allocation6 + $0x2]]
    %v149 = vstv %s145
    %v150 = vmul.f32 %v149, %v137
    %v151 = vmul.f32 %v149, %v138
    %v152 = vstv %s146
    %v153 = vmul.f32 %v152, %v139
    %v154 = vmul.f32 %v152, %v140
    %v155 = vadd.f32 %v150, %v153
    %v156 = vadd.f32 %v151, %v154
    %v157 = vstv %s147
    %v158 = vmul.f32 %v157, %v141
    %v159 = vmul.f32 %v157, %v142
    %v160 = vadd.f32 %v155, %v158
    %v161 = vadd.f32 %v156, %v159
    %v162 = vmul.f32 %v149, %v139
    %v163 = vmul.f32 %v149, %v140
    %v164 = vmul.f32 %v152, %v141
    %v165 = vmul.f32 %v152, %v142
    %v166 = vadd.f32 %v162, %v164
    %v167 = vadd.f32 %v163, %v165
    %v168 = vmul.f32 %v157, %v143
    %v169 = vmul.f32 %v157, %v144
    %v170 = vadd.f32 %v166, %v168
    %v171 = vadd.f32 %v167, %v169
    %v172 = vmax.f32 %v160, %v170
    %v173 = vmax.f32 %v161, %v171
    %v174 = vstv %s148
    %v175 = vadd.f32 %v172, %v174
    %v176 = vadd.f32 %v173, %v174
    %v177 = vtanh.pop %v175
    %v178 = vtanh.pop %v176
    %179 = vst [vmem:[#allocation2 + $0x20] sm:$0xff] %v177
    %180 = vst [vmem:[#allocation2 + $0x28] sm:$0xff] %v178
    %v181 = vld [vmem:[%s0] sm:$0xff]
    %v182 = vld [vmem:[%s0 + $0x8] sm:$0xff]
    %v183 = vld [vmem:[%s48] sm:$0xff]
    %v184 = vld [vmem:[%s48 + $0x8] sm:$0xff]
    %v185 = vld [vmem:[%s51] sm:$0xff]
    %v186 = vld [vmem:[%s51 + $0x8] sm:$0xff]
    %v187 = vld [vmem:[%s54] sm:$0xff]
    %v188 = vld [vmem:[%s54 + $0x8] sm:$0xff]
    %s189 = sld [smem:[#allocation3 + $0x9]]
    %s190 = sld [smem:[#allocation3 + $0xa]]
    %s191 = sld [smem:[#allocation3 + $0xb]]
    %s192 = sld [smem:[#allocation6 + $0x3]]
    %v193 = vstv %s189
    %v194 = vmul.f32 %v193, %v181
    %v195 = vmul.f32 %v193, %v182
    %v196 = vstv %s190
    %v197 = vmul.f32 %v196, %v183
    %v198 = vmul.f32 %v196, %v184
    %v199 = vadd.f32 %v194, %v197
    %v200 = vadd.f32 %v195, %v198
    %v201 = vstv %s191
    %v202 = vmul.f32 %v201, %v185
    %v203 = vmul.f32 %v201, %v186
    %v204 = vadd.f32 %v199, %v202
    %v205 = vadd.f32 %v200, %v203
    %v206 = vmul.f32 %v193, %v183
    %v207 = vmul.f32 %v193, %v184
    %v208 = vmul.f32 %v196, %v185
    %v209 = vmul.f32 %v196, %v186
    %v210 = vadd.f32 %v206, %v208
    %v211 = vadd.f32 %v207, %v209
    %v212 = vmul.f32 %v201, %v187
    %v213 = vmul.f32 %v201, %v188
    %v214 = vadd.f32 %v210, %v212
    %v215 = vadd.f32 %v211, %v213
    %v216 = vmax.f32 %v204, %v214
    %v217 = vmax.f32 %v205, %v215
    %v218 = vstv %s192
    %v219 = vadd.f32 %v216, %v218
    %v220 = vadd.f32 %v217, %v218
    %v221 = vtanh.pop %v219
    %v222 = vtanh.pop %v220
    %223 = vst [vmem:[#allocation2 + $0x30] sm:$0xff] %v221
    %224 = vst [vmem:[#allocation2 + $0x38] sm:$0xff] %v222
    %v225 = vld [vmem:[%s0] sm:$0xff]
    %v226 = vld [vmem:[%s0 + $0x8] sm:$0xff]
    %v227 = vld [vmem:[%s48] sm:$0xff]
    %v228 = vld [vmem:[%s48 + $0x8] sm:$0xff]
    %v229 = vld [vmem:[%s51] sm:$0xff]
    %v230 = vld [vmem:[%s51 + $0x8] sm:$0xff]
    %v231 = vld [vmem:[%s54] sm:$0xff]
    %v232 = vld [vmem:[%s54 + $0x8] sm:$0xff]
    %s233 = sld [smem:[#allocation3 + $0xc]]
    %s234 = sld [smem:[#allocation3 + $0xd]]
    %s235 = sld [smem:[#allocation3 + $0xe]]
    %s236 = sld [smem:[#allocation6 + $0x4]]
    %v237 = vstv %s233
    %v238 = vmul.f32 %v237, %v225
    %v239 = vmul.f32 %v237, %v226
    %v240 = vstv %s234
    %v241 = vmul.f32 %v240, %v227
    %v242 = vmul.f32 %v240, %v228
    %v243 = vadd.f32 %v238, %v241
    %v244 = vadd.f32 %v239, %v242
    %v245 = vstv %s235
    %v246 = vmul.f32 %v245, %v229
    %v247 = vmul.f32 %v245, %v230
    %v248 = vadd.f32 %v243, %v246
    %v249 = vadd.f32 %v244, %v247
    %v250 = vmul.f32 %v237, %v227
    %v251 = vmul.f32 %v237, %v228
    %v252 = vmul.f32 %v240, %v229
    %v253 = vmul.f32 %v240, %v230
    %v254 = vadd.f32 %v250, %v252
    %v255 = vadd.f32 %v251, %v253
    %v256 = vmul.f32 %v245, %v231
    %v257 = vmul.f32 %v245, %v232
    %v258 = vadd.f32 %v254, %v256
    %v259 = vadd.f32 %v255, %v257
    %v260 = vmax.f32 %v248, %v258
    %v261 = vmax.f32 %v249, %v259
    %v262 = vstv %s236
    %v263 = vadd.f32 %v260, %v262
    %v264 = vadd.f32 %v261, %v262
    %v265 = vtanh.pop %v263
    %v266 = vtanh.pop %v264
    %267 = vst [vmem:[#allocation2 + $0x40] sm:$0xff] %v265
    %268 = vst [vmem:[#allocation2 + $0x48] sm:$0xff] %v266
    %v269 = vld [vmem:[%s0] sm:$0xff]
    %v270 = vld [vmem:[%s0 + $0x8] sm:$0xff]
    %v271 = vld [vmem:[%s48] sm:$0xff]
    %v272 = vld [vmem:[%s48 + $0x8] sm:$0xff]
    %v273 = vld [vmem:[%s51] sm:$0xff]
    %v274 = vld [vmem:[%s51 + $0x8] sm:$0xff]
    %v275 = vld [vmem:[%s54] sm:$0xff]
    %v276 = vld [vmem:[%s54 + $0x8] sm:$0xff]
    %s277 = sld [smem:[#allocation3 + $0xf]]
    %s278 = sld [smem:[#allocation3 + $0x10]]
    %s279 = sld [smem:[#allocation3 + $0x11]]
    %s280 = sld [smem:[#allocation6 + $0x5]]
    %v281 = vstv %s277
    %v282 = vmul.f32 %v281, %v269
    %v283 = vmul.f32 %v281, %v270
    %v284 = vstv %s278
    %v285 = vmul.f32 %v284, %v271
    %v286 = vmul.f32 %v284, %v272
    %v287 = vadd.f32 %v282, %v285
    %v288 = vadd.f32 %v283, %v286
    %v289 = vstv %s279
    %v290 = vmul.f32 %v289, %v273
    %v291 = vmul.f32 %v289, %v274
    %v292 = vadd.f32 %v287, %v290
    %v293 = vadd.f32 %v288, %v291
    %v294 = vmul.f32 %v281, %v271
    %v295 = vmul.f32 %v281, %v272
    %v296 = vmul.f32 %v284, %v273
    %v297 = vmul.f32 %v284, %v274
    %v298 = vadd.f32 %v294, %v296
    %v299 = vadd.f32 %v295, %v297
    %v300 = vmul.f32 %v289, %v275
    %v301 = vmul.f32 %v289, %v276
    %v302 = vadd.f32 %v298, %v300
    %v303 = vadd.f32 %v299, %v301
    %v304 = vmax.f32 %v292, %v302
    %v305 = vmax.f32 %v293, %v303
    %v306 = vstv %s280
    %v307 = vadd.f32 %v304, %v306
    %v308 = vadd.f32 %v305, %v306
    %v309 = vtanh.pop %v307
    %v310 = vtanh.pop %v308
    %311 = vst [vmem:[#allocation2 + $0x50] sm:$0xff] %v309
    %312 = vst [vmem:[#allocation2 + $0x58] sm:$0xff] %v310
    %v313 = vld [vmem:[%s0] sm:$0xff]
    %v314 = vld [vmem:[%s0 + $0x8] sm:$0xff]
    %v315 = vld [vmem:[%s48] sm:$0xff]
    %v316 = vld [vmem:[%s48 + $0x8] sm:$0xff]
    %v317 = vld [vmem:[%s51] sm:$0xff]
    %v318 = vld [vmem:[%s51 + $0x8] sm:$0xff]
    %v319 = vld [vmem:[%s54] sm:$0xff]
    %v320 = vld [vmem:[%s54 + $0x8] sm:$0xff]
    %s321 = sld [smem:[#allocation3 + $0x12]]
    %s322 = sld [smem:[#allocation3 + $0x13]]
    %s323 = sld [smem:[#allocation3 + $0x14]]
    %s324 = sld [smem:[#allocation6 + $0x6]]
    %v325 = vstv %s321
    %v326 = vmul.f32 %v325, %v313
    %v327 = vmul.f32 %v325, %v314
    %v328 = vstv %s322
    %v329 = vmul.f32 %v328, %v315
    %v330 = vmul.f32 %v328, %v316
    %v331 = vadd.f32 %v326, %v329
    %v332 = vadd.f32 %v327, %v330
    %v333 = vstv %s323
    %v334 = vmul.f32 %v333, %v317
    %v335 = vmul.f32 %v333, %v318
    %v336 = vadd.f32 %v331, %v334
    %v337 = vadd.f32 %v332, %v335
    %v338 = vmul.f32 %v325, %v315
    %v339 = vmul.f32 %v325, %v316
    %v340 = vmul.f32 %v328, %v317
    %v341 = vmul.f32 %v328, %v318
    %v342 = vadd.f32 %v338, %v340
    %v343 = vadd.f32 %v339, %v341
    %v344 = vmul.f32 %v333, %v319
    %v345 = vmul.f32 %v333, %v320
    %v346 = vadd.f32 %v342, %v344
    %v347 = vadd.f32 %v343, %v345
    %v348 = vmax.f32 %v336, %v346
    %v349 = vmax.f32 %v337, %v347
    %v350 = vstv %s324
    %v351 = vadd.f32 %v348, %v350
    %v352 = vadd.f32 %v349, %v350
    %v353 = vtanh.pop %v351
    %v354 = vtanh.pop %v352
    %355 = vst [vmem:[#allocation2 + $0x60] sm:$0xff] %v353
    %356 = vst [vmem:[#allocation2 + $0x68] sm:$0xff] %v354
    %v357 = vld [vmem:[%s0] sm:$0xff]
    %v358 = vld [vmem:[%s0 + $0x8] sm:$0xff]
    %v359 = vld [vmem:[%s48] sm:$0xff]
    %v360 = vld [vmem:[%s48 + $0x8] sm:$0xff]
    %v361 = vld [vmem:[%s51] sm:$0xff]
    %v362 = vld [vmem:[%s51 + $0x8] sm:$0xff]
    %v363 = vld [vmem:[%s54] sm:$0xff]
    %v364 = vld [vmem:[%s54 + $0x8] sm:$0xff]
    %s365 = sld [smem:[#allocation3 + $0x15]]
    %s366 = sld [smem:[#allocation3 + $0x16]]
    %s367 = sld [smem:[#allocation3 + $0x17]]
    %s368 = sld [smem:[#allocation6 + $0x7]]
    %v369 = vstv %s365
    %v370 = vmul.f32 %v369, %v357
    %v371 = vmul.f32 %v369, %v358
    %v372 = vstv %s366
    %v373 = vmul.f32 %v372, %v359
    %v374 = vmul.f32 %v372, %v360
    %v375 = vadd.f32 %v370, %v373
    %v376 = vadd.f32 %v371, %v374
    %v377 = vstv %s367
    %v378 = vmul.f32 %v377, %v361
    %v379 = vmul.f32 %v377, %v362
    %v380 = vadd.f32 %v375, %v378
    %v381 = vadd.f32 %v376, %v379
    %v382 = vmul.f32 %v369, %v359
    %v383 = vmul.f32 %v369, %v360
    %v384 = vmul.f32 %v372, %v361
    %v385 = vmul.f32 %v372, %v362
    %v386 = vadd.f32 %v382, %v384
    %v387 = vadd.f32 %v383, %v385
    %v388 = vmul.f32 %v377, %v363
    %v389 = vmul.f32 %v377, %v364
    %v390 = vadd.f32 %v386, %v388
    %v391 = vadd.f32 %v387, %v389
    %v392 = vmax.f32 %v380, %v390
    %v393 = vmax.f32 %v381, %v391
    %v394 = vstv %s368
    %v395 = vadd.f32 %v392, %v394
    %v396 = vadd.f32 %v393, %v394
    %v397 = vtanh.pop %v395
    %v398 = vtanh.pop %v396
    %399 = vst [vmem:[#allocation2 + $0x70] sm:$0xff] %v397
    %400 = vst [vmem:[#allocation2 + $0x78] sm:$0xff] %v398
    %v401 = vld [vmem:[%s0] sm:$0xff]
    %v402 = vld [vmem:[%s0 + $0x8] sm:$0xff]
    %v403 = vld [vmem:[%s48] sm:$0xff]
    %v404 = vld [vmem:[%s48 + $0x8] sm:$0xff]
    %v405 = vld [vmem:[%s51] sm:$0xff]
    %v406 = vld [vmem:[%s51 + $0x8] sm:$0xff]
    %v407 = vld [vmem:[%s54] sm:$0xff]
    %v408 = vld [vmem:[%s54 + $0x8] sm:$0xff]
    %s409 = sld [smem:[#allocation3 + $0x18]]
    %s410 = sld [smem:[#allocation3 + $0x19]]
    %s411 = sld [smem:[#allocation3 + $0x1a]]
    %s412 = sld [smem:[#allocation6 + $0x8]]
    %v413 = vstv %s409
    %v414 = vmul.f32 %v413, %v401
    %v415 = vmul.f32 %v413, %v402
    %v416 = vstv %s410
    %v417 = vmul.f32 %v416, %v403
    %v418 = vmul.f32 %v416, %v404
    %v419 = vadd.f32 %v414, %v417
    %v420 = vadd.f32 %v415, %v418
    %v421 = vstv %s411
    %v422 = vmul.f32 %v421, %v405
    %v423 = vmul.f32 %v421, %v406
    %v424 = vadd.f32 %v419, %v422
    %v425 = vadd.f32 %v420, %v423
    %v426 = vmul.f32 %v413, %v403
    %v427 = vmul.f32 %v413, %v404
    %v428 = vmul.f32 %v416, %v405
    %v429 = vmul.f32 %v416, %v406
    %v430 = vadd.f32 %v426, %v428
    %v431 = vadd.f32 %v427, %v429
    %v432 = vmul.f32 %v421, %v407
    %v433 = vmul.f32 %v421, %v408
    %v434 = vadd.f32 %v430, %v432
    %v435 = vadd.f32 %v431, %v433
    %v436 = vmax.f32 %v424, %v434
    %v437 = vmax.f32 %v425, %v435
    %v438 = vstv %s412
    %v439 = vadd.f32 %v436, %v438
    %v440 = vadd.f32 %v437, %v438
    %v441 = vtanh.pop %v439
    %v442 = vtanh.pop %v440
    %443 = vst [vmem:[#allocation2 + $0x80] sm:$0xff] %v441
    %444 = vst [vmem:[#allocation2 + $0x88] sm:$0xff] %v442
    %v445 = vld [vmem:[%s0] sm:$0xff]
    %v446 = vld [vmem:[%s0 + $0x8] sm:$0xff]
    %v447 = vld [vmem:[%s48] sm:$0xff]
    %v448 = vld [vmem:[%s48 + $0x8] sm:$0xff]
    %v449 = vld [vmem:[%s51] sm:$0xff]
    %v450 = vld [vmem:[%s51 + $0x8] sm:$0xff]
    %v451 = vld [vmem:[%s54] sm:$0xff]
    %v452 = vld [vmem:[%s54 + $0x8] sm:$0xff]
    %s453 = sld [smem:[#allocation3 + $0x1b]]
    %s454 = sld [smem:[#allocation3 + $0x1c]]
    %s455 = sld [smem:[#allocation3 + $0x1d]]
    %s456 = sld [smem:[#allocation6 + $0x9]]
    %v457 = vstv %s453
    %v458 = vmul.f32 %v457, %v445
    %v459 = vmul.f32 %v457, %v446
    %v460 = vstv %s454
    %v461 = vmul.f32 %v460, %v447
    %v462 = vmul.f32 %v460, %v448
    %v463 = vadd.f32 %v458, %v461
    %v464 = vadd.f32 %v459, %v462
    %v465 = vstv %s455
    %v466 = vmul.f32 %v465, %v449
    %v467 = vmul.f32 %v465, %v450
    %v468 = vadd.f32 %v463, %v466
    %v469 = vadd.f32 %v464, %v467
    %v470 = vmul.f32 %v457, %v447
    %v471 = vmul.f32 %v457, %v448
    %v472 = vmul.f32 %v460, %v449
    %v473 = vmul.f32 %v460, %v450
    %v474 = vadd.f32 %v470, %v472
    %v475 = vadd.f32 %v471, %v473
    %v476 = vmul.f32 %v465, %v451
    %v477 = vmul.f32 %v465, %v452
    %v478 = vadd.f32 %v474, %v476
    %v479 = vadd.f32 %v475, %v477
    %v480 = vmax.f32 %v468, %v478
    %v481 = vmax.f32 %v469, %v479
    %v482 = vstv %s456
    %v483 = vadd.f32 %v480, %v482
    %v484 = vadd.f32 %v481, %v482
    %v485 = vtanh.pop %v483
    %v486 = vtanh.pop %v484
    %487 = vst [vmem:[#allocation2 + $0x90] sm:$0xff] %v485
    %488 = vst [vmem:[#allocation2 + $0x98] sm:$0xff] %v486
    %v489 = vld [vmem:[%s0] sm:$0xff]
    %v490 = vld [vmem:[%s0 + $0x8] sm:$0xff]
    %v491 = vld [vmem:[%s48] sm:$0xff]
    %v492 = vld [vmem:[%s48 + $0x8] sm:$0xff]
    %v493 = vld [vmem:[%s51] sm:$0xff]
    %v494 = vld [vmem:[%s51 + $0x8] sm:$0xff]
    %v495 = vld [vmem:[%s54] sm:$0xff]
    %v496 = vld [vmem:[%s54 + $0x8] sm:$0xff]
    %s497 = sld [smem:[#allocation3 + $0x1e]]
    %s498 = sld [smem:[#allocation3 + $0x1f]]
    %s499 = sld [smem:[#allocation3 + $0x20]]
    %s500 = sld [smem:[#allocation6 + $0xa]]
    %v501 = vstv %s497
    %v502 = vmul.f32 %v501, %v489
    %v503 = vmul.f32 %v501, %v490
    %v504 = vstv %s498
    %v505 = vmul.f32 %v504, %v491
    %v506 = vmul.f32 %v504, %v492
    %v507 = vadd.f32 %v502, %v505
    %v508 = vadd.f32 %v503, %v506
    %v509 = vstv %s499
    %v510 = vmul.f32 %v509, %v493
    %v511 = vmul.f32 %v509, %v494
    %v512 = vadd.f32 %v507, %v510
    %v513 = vadd.f32 %v508, %v511
    %v514 = vmul.f32 %v501, %v491
    %v515 = vmul.f32 %v501, %v492
    %v516 = vmul.f32 %v504, %v493
    %v517 = vmul.f32 %v504, %v494
    %v518 = vadd.f32 %v514, %v516
    %v519 = vadd.f32 %v515, %v517
    %v520 = vmul.f32 %v509, %v495
    %v521 = vmul.f32 %v509, %v496
    %v522 = vadd.f32 %v518, %v520
    %v523 = vadd.f32 %v519, %v521
    %v524 = vmax.f32 %v512, %v522
    %v525 = vmax.f32 %v513, %v523
    %v526 = vstv %s500
    %v527 = vadd.f32 %v524, %v526
    %v528 = vadd.f32 %v525, %v526
    %v529 = vtanh.pop %v527
    %v530 = vtanh.pop %v528
    %531 = vst [vmem:[#allocation2 + $0xa0] sm:$0xff] %v529
    %532 = vst [vmem:[#allocation2 + $0xa8] sm:$0xff] %v530
    %v533 = vld [vmem:[%s0] sm:$0xff]
    %v534 = vld [vmem:[%s0 + $0x8] sm:$0xff]
    %v535 = vld [vmem:[%s48] sm:$0xff]
    %v536 = vld [vmem:[%s48 + $0x8] sm:$0xff]
    %v537 = vld [vmem:[%s51] sm:$0xff]
    %v538 = vld [vmem:[%s51 + $0x8] sm:$0xff]
    %v539 = vld [vmem:[%s54] sm:$0xff]
    %v540 = vld [vmem:[%s54 + $0x8] sm:$0xff]
    %s541 = sld [smem:[#allocation3 + $0x21]]
    %s542 = sld [smem:[#allocation3 + $0x22]]
    %s543 = sld [smem:[#allocation3 + $0x23]]
    %s544 = sld [smem:[#allocation6 + $0xb]]
    %v545 = vstv %s541
    %v546 = vmul.f32 %v545, %v533
    %v547 = vmul.f32 %v545, %v534
    %v548 = vstv %s542
    %v549 = vmul.f32 %v548, %v535
    %v550 = vmul.f32 %v548, %v536
    %v551 = vadd.f32 %v546, %v549
    %v552 = vadd.f32 %v547, %v550
    %v553 = vstv %s543
    %v554 = vmul.f32 %v553, %v537
    %v555 = vmul.f32 %v553, %v538
    %v556 = vadd.f32 %v551, %v554
    %v557 = vadd.f32 %v552, %v555
    %v558 = vmul.f32 %v545, %v535
    %v559 = vmul.f32 %v545, %v536
    %v560 = vmul.f32 %v548, %v537
    %v561 = vmul.f32 %v548, %v538
    %v562 = vadd.f32 %v558, %v560
    %v563 = vadd.f32 %v559, %v561
    %v564 = vmul.f32 %v553, %v539
    %v565 = vmul.f32 %v553, %v540
    %v566 = vadd.f32 %v562, %v564
    %v567 = vadd.f32 %v563, %v565
    %v568 = vmax.f32 %v556, %v566
    %v569 = vmax.f32 %v557, %v567
    %v570 = vstv %s544
    %v571 = vadd.f32 %v568, %v570
    %v572 = vadd.f32 %v569, %v570
    %v573 = vtanh.pop %v571
    %v574 = vtanh.pop %v572
    %575 = vst [vmem:[#allocation2 + $0xb0] sm:$0xff] %v573
    %576 = vst [vmem:[#allocation2 + $0xb8] sm:$0xff] %v574
    %v577 = vld [vmem:[%s0] sm:$0xff]
    %v578 = vld [vmem:[%s0 + $0x8] sm:$0xff]
    %v579 = vld [vmem:[%s48] sm:$0xff]
    %v580 = vld [vmem:[%s48 + $0x8] sm:$0xff]
    %v581 = vld [vmem:[%s51] sm:$0xff]
    %v582 = vld [vmem:[%s51 + $0x8] sm:$0xff]
    %v583 = vld [vmem:[%s54] sm:$0xff]
    %v584 = vld [vmem:[%s54 + $0x8] sm:$0xff]
    %s585 = sld [smem:[#allocation3 + $0x24]]
    %s586 = sld [smem:[#allocation3 + $0x25]]
    %s587 = sld [smem:[#allocation3 + $0x26]]
    %s588 = sld [smem:[#allocation6 + $0xc]]
    %v589 = vstv %s585
    %v590 = vmul.f32 %v589, %v577
    %v591 = vmul.f32 %v589, %v578
    %v592 = vstv %s586
    %v593 = vmul.f32 %v592, %v579
    %v594 = vmul.f32 %v592, %v580
    %v595 = vadd.f32 %v590, %v593
    %v596 = vadd.f32 %v591, %v594
    %v597 = vstv %s587
    %v598 = vmul.f32 %v597, %v581
    %v599 = vmul.f32 %v597, %v582
    %v600 = vadd.f32 %v595, %v598
    %v601 = vadd.f32 %v596, %v599
    %v602 = vmul.f32 %v589, %v579
    %v603 = vmul.f32 %v589, %v580
    %v604 = vmul.f32 %v592, %v581
    %v605 = vmul.f32 %v592, %v582
    %v606 = vadd.f32 %v602, %v604
    %v607 = vadd.f32 %v603, %v605
    %v608 = vmul.f32 %v597, %v583
    %v609 = vmul.f32 %v597, %v584
    %v610 = vadd.f32 %v606, %v608
    %v611 = vadd.f32 %v607, %v609
    %v612 = vmax.f32 %v600, %v610
    %v613 = vmax.f32 %v601, %v611
    %v614 = vstv %s588
    %v615 = vadd.f32 %v612, %v614
    %v616 = vadd.f32 %v613, %v614
    %v617 = vtanh.pop %v615
    %v618 = vtanh.pop %v616
    %619 = vst [vmem:[#allocation2 + $0xc0] sm:$0xff] %v617
    %620 = vst [vmem:[#allocation2 + $0xc8] sm:$0xff] %v618
    %v621 = vld [vmem:[%s0] sm:$0xff]
    %v622 = vld [vmem:[%s0 + $0x8] sm:$0xff]
    %v623 = vld [vmem:[%s48] sm:$0xff]
    %v624 = vld [vmem:[%s48 + $0x8] sm:$0xff]
    %v625 = vld [vmem:[%s51] sm:$0xff]
    %v626 = vld [vmem:[%s51 + $0x8] sm:$0xff]
    %v627 = vld [vmem:[%s54] sm:$0xff]
    %v628 = vld [vmem:[%s54 + $0x8] sm:$0xff]
    %s629 = sld [smem:[#allocation3 + $0x27]]
    %s630 = sld [smem:[#allocation3 + $0x28]]
    %s631 = sld [smem:[#allocation3 + $0x29]]
    %s632 = sld [smem:[#allocation6 + $0xd]]
    %v633 = vstv %s629
    %v634 = vmul.f32 %v633, %v621
    %v635 = vmul.f32 %v633, %v622
    %v636 = vstv %s630
    %v637 = vmul.f32 %v636, %v623
    %v638 = vmul.f32 %v636, %v624
    %v639 = vadd.f32 %v634, %v637
    %v640 = vadd.f32 %v635, %v638
    %v641 = vstv %s631
    %v642 = vmul.f32 %v641, %v625
    %v643 = vmul.f32 %v641, %v626
    %v644 = vadd.f32 %v639, %v642
    %v645 = vadd.f32 %v640, %v643
    %v646 = vmul.f32 %v633, %v623
    %v647 = vmul.f32 %v633, %v624
    %v648 = vmul.f32 %v636, %v625
    %v649 = vmul.f32 %v636, %v626
    %v650 = vadd.f32 %v646, %v648
    %v651 = vadd.f32 %v647, %v649
    %v652 = vmul.f32 %v641, %v627
    %v653 = vmul.f32 %v641, %v628
    %v654 = vadd.f32 %v650, %v652
    %v655 = vadd.f32 %v651, %v653
    %v656 = vmax.f32 %v644, %v654
    %v657 = vmax.f32 %v645, %v655
    %v658 = vstv %s632
    %v659 = vadd.f32 %v656, %v658
    %v660 = vadd.f32 %v657, %v658
    %v661 = vtanh.pop %v659
    %v662 = vtanh.pop %v660
    %663 = vst [vmem:[#allocation2 + $0xd0] sm:$0xff] %v661
    %664 = vst [vmem:[#allocation2 + $0xd8] sm:$0xff] %v662
    %v665 = vld [vmem:[%s0] sm:$0xff]
    %v666 = vld [vmem:[%s0 + $0x8] sm:$0xff]
    %v667 = vld [vmem:[%s48] sm:$0xff]
    %v668 = vld [vmem:[%s48 + $0x8] sm:$0xff]
    %v669 = vld [vmem:[%s51] sm:$0xff]
    %v670 = vld [vmem:[%s51 + $0x8] sm:$0xff]
    %v671 = vld [vmem:[%s54] sm:$0xff]
    %v672 = vld [vmem:[%s54 + $0x8] sm:$0xff]
    %s673 = sld [smem:[#allocation3 + $0x2a]]
    %s674 = sld [smem:[#allocation3 + $0x2b]]
    %s675 = sld [smem:[#allocation3 + $0x2c]]
    %s676 = sld [smem:[#allocation6 + $0xe]]
    %v677 = vstv %s673
    %v678 = vmul.f32 %v677, %v665
    %v679 = vmul.f32 %v677, %v666
    %v680 = vstv %s674
    %v681 = vmul.f32 %v680, %v667
    %v682 = vmul.f32 %v680, %v668
    %v683 = vadd.f32 %v678, %v681
    %v684 = vadd.f32 %v679, %v682
    %v685 = vstv %s675
    %v686 = vmul.f32 %v685, %v669
    %v687 = vmul.f32 %v685, %v670
    %v688 = vadd.f32 %v683, %v686
    %v689 = vadd.f32 %v684, %v687
    %v690 = vmul.f32 %v677, %v667
    %v691 = vmul.f32 %v677, %v668
    %v692 = vmul.f32 %v680, %v669
    %v693 = vmul.f32 %v680, %v670
    %v694 = vadd.f32 %v690, %v692
    %v695 = vadd.f32 %v691, %v693
    %v696 = vmul.f32 %v685, %v671
    %v697 = vmul.f32 %v685, %v672
    %v698 = vadd.f32 %v694, %v696
    %v699 = vadd.f32 %v695, %v697
    %v700 = vmax.f32 %v688, %v698
    %v701 = vmax.f32 %v689, %v699
    %v702 = vstv %s676
    %v703 = vadd.f32 %v700, %v702
    %v704 = vadd.f32 %v701, %v702
    %v705 = vtanh.pop %v703
    %v706 = vtanh.pop %v704
    %707 = vst [vmem:[#allocation2 + $0xe0] sm:$0xff] %v705
    %708 = vst [vmem:[#allocation2 + $0xe8] sm:$0xff] %v706
    %v709 = vld [vmem:[%s0] sm:$0xff]
    %v710 = vld [vmem:[%s0 + $0x8] sm:$0xff]
    %v711 = vld [vmem:[%s48] sm:$0xff]
    %v712 = vld [vmem:[%s48 + $0x8] sm:$0xff]
    %v713 = vld [vmem:[%s51] sm:$0xff]
    %v714 = vld [vmem:[%s51 + $0x8] sm:$0xff]
    %v715 = vld [vmem:[%s54] sm:$0xff]
    %v716 = vld [vmem:[%s54 + $0x8] sm:$0xff]
    %s717 = sld [smem:[#allocation3 + $0x2d]]
    %s718 = sld [smem:[#allocation3 + $0x2e]]
    %s719 = sld [smem:[#allocation3 + $0x2f]]
    %s720 = sld [smem:[#allocation6 + $0xf]]
    %v721 = vstv %s717
    %v722 = vmul.f32 %v721, %v709
    %v723 = vmul.f32 %v721, %v710
    %v724 = vstv %s718
    %v725 = vmul.f32 %v724, %v711
    %v726 = vmul.f32 %v724, %v712
    %v727 = vadd.f32 %v722, %v725
    %v728 = vadd.f32 %v723, %v726
    %v729 = vstv %s719
    %v730 = vmul.f32 %v729, %v713
    %v731 = vmul.f32 %v729, %v714
    %v732 = vadd.f32 %v727, %v730
    %v733 = vadd.f32 %v728, %v731
    %v734 = vmul.f32 %v721, %v711
    %v735 = vmul.f32 %v721, %v712
    %v736 = vmul.f32 %v724, %v713
    %v737 = vmul.f32 %v724, %v714
    %v738 = vadd.f32 %v734, %v736
    %v739 = vadd.f32 %v735, %v737
    %v740 = vmul.f32 %v729, %v715
    %v741 = vmul.f32 %v729, %v716
    %v742 = vadd.f32 %v738, %v740
    %v743 = vadd.f32 %v739, %v741
    %v744 = vmax.f32 %v732, %v742
    %v745 = vmax.f32 %v733, %v743
    %v746 = vstv %s720
    %v747 = vadd.f32 %v744, %v746
    %v748 = vadd.f32 %v745, %v746
    %v749 = vtanh.pop %v747
    %v750 = vtanh.pop %v748
    %751 = vst [vmem:[#allocation2 + $0xf0] sm:$0xff] %v749
    %752 = vst [vmem:[#allocation2 + $0xf8] sm:$0xff] %v750
    %v753 = vld [vmem:[#allocation2] sm:$0xff]
    %v754 = vld [vmem:[#allocation2 + $0x8] sm:$0xff]
    %v755 = vld [vmem:[#allocation2 + $0x10] sm:$0xff]
    %v756 = vld [vmem:[#allocation2 + $0x18] sm:$0xff]
    %v757 = vld [vmem:[#allocation2 + $0x20] sm:$0xff]
    %v758 = vld [vmem:[#allocation2 + $0x28] sm:$0xff]
    %v759 = vld [vmem:[#allocation2 + $0x30] sm:$0xff]
    %v760 = vld [vmem:[#allocation2 + $0x38] sm:$0xff]
    %v761 = vld [vmem:[#allocation2 + $0x40] sm:$0xff]
    %v762 = vld [vmem:[#allocation2 + $0x48] sm:$0xff]
    %v763 = vld [vmem:[#allocation2 + $0x50] sm:$0xff]
    %v764 = vld [vmem:[#allocation2 + $0x58] sm:$0xff]
    %v765 = vld [vmem:[#allocation2 + $0x60] sm:$0xff]
    %v766 = vld [vmem:[#allocation2 + $0x68] sm:$0xff]
    %v767 = vld [vmem:[#allocation2 + $0x70] sm:$0xff]
    %v768 = vld [vmem:[#allocation2 + $0x78] sm:$0xff]
    %v769 = vld [vmem:[#allocation2 + $0x80] sm:$0xff]
    %v770 = vld [vmem:[#allocation2 + $0x88] sm:$0xff]
    %v771 = vld [vmem:[#allocation2 + $0x90] sm:$0xff]
    %v772 = vld [vmem:[#allocation2 + $0x98] sm:$0xff]
    %v773 = vld [vmem:[#allocation2 + $0xa0] sm:$0xff]
    %v774 = vld [vmem:[#allocation2 + $0xa8] sm:$0xff]
    %v775 = vld [vmem:[#allocation2 + $0xb0] sm:$0xff]
    %v776 = vld [vmem:[#allocation2 + $0xb8] sm:$0xff]
    %v777 = vld [vmem:[#allocation2 + $0xc0] sm:$0xff]
    %v778 = vld [vmem:[#allocation2 + $0xc8] sm:$0xff]
    %v779 = vld [vmem:[#allocation2 + $0xd0] sm:$0xff]
    %v780 = vld [vmem:[#allocation2 + $0xd8] sm:$0xff]
    %v781 = vld [vmem:[#allocation2 + $0xe0] sm:$0xff]
    %v782 = vld [vmem:[#allocation2 + $0xe8] sm:$0xff]
    %v783 = vld [vmem:[#allocation2 + $0xf0] sm:$0xff]
    %v784 = vld [vmem:[#allocation2 + $0xf8] sm:$0xff]
    %v785 = vld [vmem:[%s3] sm:$0xff]
    %v786 = vld [vmem:[%s3 + $0x8] sm:$0xff]
    %v787 = vld [vmem:[%s3 + $0x10] sm:$0xff]
    %v788 = vld [vmem:[%s3 + $0x18] sm:$0xff]
    %v789 = vld [vmem:[%s3 + $0x20] sm:$0xff]
    %v790 = vld [vmem:[%s3 + $0x28] sm:$0xff]
    %v791 = vld [vmem:[%s3 + $0x30] sm:$0xff]
    %v792 = vld [vmem:[%s3 + $0x38] sm:$0xff]
    %v793 = vld [vmem:[%s3 + $0x40] sm:$0xff]
    %v794 = vld [vmem:[%s3 + $0x48] sm:$0xff]
    %v795 = vld [vmem:[%s3 + $0x50] sm:$0xff]
    %v796 = vld [vmem:[%s3 + $0x58] sm:$0xff]
    %v797 = vld [vmem:[%s3 + $0x60] sm:$0xff]
    %v798 = vld [vmem:[%s3 + $0x68] sm:$0xff]
    %v799 = vld [vmem:[%s3 + $0x70] sm:$0xff]
    %v800 = vld [vmem:[%s3 + $0x78] sm:$0xff]
    %v801 = vld [vmem:[%s3 + $0x80] sm:$0xff]
    %v802 = vld [vmem:[%s3 + $0x88] sm:$0xff]
    %v803 = vld [vmem:[%s3 + $0x90] sm:$0xff]
    %v804 = vld [vmem:[%s3 + $0x98] sm:$0xff]
    %v805 = vld [vmem:[%s3 + $0xa0] sm:$0xff]
    %v806 = vld [vmem:[%s3 + $0xa8] sm:$0xff]
    %v807 = vld [vmem:[%s3 + $0xb0] sm:$0xff]
    %v808 = vld [vmem:[%s3 + $0xb8] sm:$0xff]
    %v809 = vld [vmem:[%s3 + $0xc0] sm:$0xff]
    %v810 = vld [vmem:[%s3 + $0xc8] sm:$0xff]
    %v811 = vld [vmem:[%s3 + $0xd0] sm:$0xff]
    %v812 = vld [vmem:[%s3 + $0xd8] sm:$0xff]
    %v813 = vld [vmem:[%s3 + $0xe0] sm:$0xff]
    %v814 = vld [vmem:[%s3 + $0xe8] sm:$0xff]
    %v815 = vld [vmem:[%s3 + $0xf0] sm:$0xff]
    %v816 = vld [vmem:[%s3 + $0xf8] sm:$0xff]
    %v817 = vld [vmem:[%s3 + $0x100] sm:$0xff]
    %v818 = vld [vmem:[%s3 + $0x108] sm:$0xff]
    %v819 = vld [vmem:[%s3 + $0x110] sm:$0xff]
    %v820 = vld [vmem:[%s3 + $0x118] sm:$0xff]
    %v821 = vld [vmem:[%s3 + $0x120] sm:$0xff]
    %v822 = vld [vmem:[%s3 + $0x128] sm:$0xff]
    %v823 = vld [vmem:[%s3 + $0x130] sm:$0xff]
    %v824 = vld [vmem:[%s3 + $0x138] sm:$0xff]
    %v825 = vld [vmem:[%s3 + $0x140] sm:$0xff]
    %v826 = vld [vmem:[%s3 + $0x148] sm:$0xff]
    %v827 = vld [vmem:[%s3 + $0x150] sm:$0xff]
    %v828 = vld [vmem:[%s3 + $0x158] sm:$0xff]
    %v829 = vld [vmem:[%s3 + $0x160] sm:$0xff]
    %v830 = vld [vmem:[%s3 + $0x168] sm:$0xff]
    %v831 = vld [vmem:[%s3 + $0x170] sm:$0xff]
    %v832 = vld [vmem:[%s3 + $0x178] sm:$0xff]
    %v833 = vld [vmem:[%s3 + $0x180] sm:$0xff]
    %v834 = vld [vmem:[%s3 + $0x188] sm:$0xff]
    %v835 = vld [vmem:[%s3 + $0x190] sm:$0xff]
    %v836 = vld [vmem:[%s3 + $0x198] sm:$0xff]
    %v837 = vld [vmem:[%s3 + $0x1a0] sm:$0xff]
    %v838 = vld [vmem:[%s3 + $0x1a8] sm:$0xff]
    %v839 = vld [vmem:[%s3 + $0x1b0] sm:$0xff]
    %v840 = vld [vmem:[%s3 + $0x1b8] sm:$0xff]
    %v841 = vld [vmem:[%s3 + $0x1c0] sm:$0xff]
    %v842 = vld [vmem:[%s3 + $0x1c8] sm:$0xff]
    %v843 = vld [vmem:[%s3 + $0x1d0] sm:$0xff]
    %v844 = vld [vmem:[%s3 + $0x1d8] sm:$0xff]
    %v845 = vld [vmem:[%s3 + $0x1e0] sm:$0xff]
    %v846 = vld [vmem:[%s3 + $0x1e8] sm:$0xff]
    %v847 = vld [vmem:[%s3 + $0x1f0] sm:$0xff]
    %v848 = vld [vmem:[%s3 + $0x1f8] sm:$0xff]
    %v849 = vld [vmem:[%s3 + $0x200] sm:$0xff]
    %v850 = vld [vmem:[%s3 + $0x208] sm:$0xff]
    %v851 = vld [vmem:[%s3 + $0x210] sm:$0xff]
    %v852 = vld [vmem:[%s3 + $0x218] sm:$0xff]
    %v853 = vld [vmem:[%s3 + $0x220] sm:$0xff]
    %v854 = vld [vmem:[%s3 + $0x228] sm:$0xff]
    %v855 = vld [vmem:[%s3 + $0x230] sm:$0xff]
    %v856 = vld [vmem:[%s3 + $0x238] sm:$0xff]
    %v857 = vld [vmem:[%s3 + $0x240] sm:$0xff]
    %v858 = vld [vmem:[%s3 + $0x248] sm:$0xff]
    %v859 = vld [vmem:[%s3 + $0x250] sm:$0xff]
    %v860 = vld [vmem:[%s3 + $0x258] sm:$0xff]
    %v861 = vld [vmem:[%s3 + $0x260] sm:$0xff]
    %v862 = vld [vmem:[%s3 + $0x268] sm:$0xff]
    %v863 = vld [vmem:[%s3 + $0x270] sm:$0xff]
    %v864 = vld [vmem:[%s3 + $0x278] sm:$0xff]
    %v865 = vld [vmem:[%s3 + $0x280] sm:$0xff]
    %v866 = vld [vmem:[%s3 + $0x288] sm:$0xff]
    %v867 = vld [vmem:[%s3 + $0x290] sm:$0xff]
    %v868 = vld [vmem:[%s3 + $0x298] sm:$0xff]
    %v869 = vld [vmem:[%s3 + $0x2a0] sm:$0xff]
    %v870 = vld [vmem:[%s3 + $0x2a8] sm:$0xff]
    %v871 = vld [vmem:[%s3 + $0x2b0] sm:$0xff]
    %v872 = vld [vmem:[%s3 + $0x2b8] sm:$0xff]
    %v873 = vld [vmem:[%s3 + $0x2c0] sm:$0xff]
    %v874 = vld [vmem:[%s3 + $0x2c8] sm:$0xff]
    %v875 = vld [vmem:[%s3 + $0x2d0] sm:$0xff]
    %v876 = vld [vmem:[%s3 + $0x2d8] sm:$0xff]
    %v877 = vld [vmem:[%s3 + $0x2e0] sm:$0xff]
    %v878 = vld [vmem:[%s3 + $0x2e8] sm:$0xff]
    %v879 = vld [vmem:[%s3 + $0x2f0] sm:$0xff]
    %v880 = vld [vmem:[%s3 + $0x2f8] sm:$0xff]
    %v881 = vld [vmem:[%s3 + $0x300] sm:$0xff]
    %v882 = vld [vmem:[%s3 + $0x308] sm:$0xff]
    %v883 = vld [vmem:[%s3 + $0x310] sm:$0xff]
    %v884 = vld [vmem:[%s3 + $0x318] sm:$0xff]
    %v885 = vld [vmem:[%s3 + $0x320] sm:$0xff]
    %v886 = vld [vmem:[%s3 + $0x328] sm:$0xff]
    %v887 = vld [vmem:[%s3 + $0x330] sm:$0xff]
    %v888 = vld [vmem:[%s3 + $0x338] sm:$0xff]
    %v889 = vld [vmem:[%s3 + $0x340] sm:$0xff]
    %v890 = vld [vmem:[%s3 + $0x348] sm:$0xff]
    %v891 = vld [vmem:[%s3 + $0x350] sm:$0xff]
    %v892 = vld [vmem:[%s3 + $0x358] sm:$0xff]
    %v893 = vld [vmem:[%s3 + $0x360] sm:$0xff]
    %v894 = vld [vmem:[%s3 + $0x368] sm:$0xff]
    %v895 = vld [vmem:[%s3 + $0x370] sm:$0xff]
    %v896 = vld [vmem:[%s3 + $0x378] sm:$0xff]
    %v897 = vld [vmem:[%s3 + $0x380] sm:$0xff]
    %v898 = vld [vmem:[%s3 + $0x388] sm:$0xff]
    %v899 = vld [vmem:[%s3 + $0x390] sm:$0xff]
    %v900 = vld [vmem:[%s3 + $0x398] sm:$0xff]
    %v901 = vld [vmem:[%s3 + $0x3a0] sm:$0xff]
    %v902 = vld [vmem:[%s3 + $0x3a8] sm:$0xff]
    %v903 = vld [vmem:[%s3 + $0x3b0] sm:$0xff]
    %v904 = vld [vmem:[%s3 + $0x3b8] sm:$0xff]
    %v905 = vld [vmem:[%s3 + $0x3c0] sm:$0xff]
    %v906 = vld [vmem:[%s3 + $0x3c8] sm:$0xff]
    %v907 = vld [vmem:[%s3 + $0x3d0] sm:$0xff]
    %v908 = vld [vmem:[%s3 + $0x3d8] sm:$0xff]
    %v909 = vld [vmem:[%s3 + $0x3e0] sm:$0xff]
    %v910 = vld [vmem:[%s3 + $0x3e8] sm:$0xff]
    %v911 = vld [vmem:[%s3 + $0x3f0] sm:$0xff]
    %v912 = vld [vmem:[%s3 + $0x3f8] sm:$0xff]
    %v913 = vld [vmem:[%s3 + $0x400] sm:$0xff]
    %v914 = vld [vmem:[%s3 + $0x408] sm:$0xff]
    %v915 = vld [vmem:[%s3 + $0x410] sm:$0xff]
    %v916 = vld [vmem:[%s3 + $0x418] sm:$0xff]
    %v917 = vld [vmem:[%s3 + $0x420] sm:$0xff]
    %v918 = vld [vmem:[%s3 + $0x428] sm:$0xff]
    %v919 = vld [vmem:[%s3 + $0x430] sm:$0xff]
    %v920 = vld [vmem:[%s3 + $0x438] sm:$0xff]
    %v921 = vld [vmem:[%s3 + $0x440] sm:$0xff]
    %v922 = vld [vmem:[%s3 + $0x448] sm:$0xff]
    %v923 = vld [vmem:[%s3 + $0x450] sm:$0xff]
    %v924 = vld [vmem:[%s3 + $0x458] sm:$0xff]
    %v925 = vld [vmem:[%s3 + $0x460] sm:$0xff]
    %v926 = vld [vmem:[%s3 + $0x468] sm:$0xff]
    %v927 = vld [vmem:[%s3 + $0x470] sm:$0xff]
    %v928 = vld [vmem:[%s3 + $0x478] sm:$0xff]
    %v929 = vld [vmem:[%s3 + $0x480] sm:$0xff]
    %v930 = vld [vmem:[%s3 + $0x488] sm:$0xff]
    %v931 = vld [vmem:[%s3 + $0x490] sm:$0xff]
    %v932 = vld [vmem:[%s3 + $0x498] sm:$0xff]
    %v933 = vld [vmem:[%s3 + $0x4a0] sm:$0xff]
    %v934 = vld [vmem:[%s3 + $0x4a8] sm:$0xff]
    %v935 = vld [vmem:[%s3 + $0x4b0] sm:$0xff]
    %v936 = vld [vmem:[%s3 + $0x4b8] sm:$0xff]
    %v937 = vld [vmem:[%s3 + $0x4c0] sm:$0xff]
    %v938 = vld [vmem:[%s3 + $0x4c8] sm:$0xff]
    %v939 = vld [vmem:[%s3 + $0x4d0] sm:$0xff]
    %v940 = vld [vmem:[%s3 + $0x4d8] sm:$0xff]
    %v941 = vld [vmem:[%s3 + $0x4e0] sm:$0xff]
    %v942 = vld [vmem:[%s3 + $0x4e8] sm:$0xff]
    %v943 = vld [vmem:[%s3 + $0x4f0] sm:$0xff]
    %v944 = vld [vmem:[%s3 + $0x4f8] sm:$0xff]
    %v945 = vld [vmem:[%s3 + $0x500] sm:$0xff]
    %v946 = vld [vmem:[%s3 + $0x508] sm:$0xff]
    %v947 = vld [vmem:[%s3 + $0x510] sm:$0xff]
    %v948 = vld [vmem:[%s3 + $0x518] sm:$0xff]
    %v949 = vld [vmem:[%s3 + $0x520] sm:$0xff]
    %v950 = vld [vmem:[%s3 + $0x528] sm:$0xff]
    %v951 = vld [vmem:[%s3 + $0x530] sm:$0xff]
    %v952 = vld [vmem:[%s3 + $0x538] sm:$0xff]
    %v953 = vld [vmem:[%s3 + $0x540] sm:$0xff]
    %v954 = vld [vmem:[%s3 + $0x548] sm:$0xff]
    %v955 = vld [vmem:[%s3 + $0x550] sm:$0xff]
    %v956 = vld [vmem:[%s3 + $0x558] sm:$0xff]
    %v957 = vld [vmem:[%s3 + $0x560] sm:$0xff]
    %v958 = vld [vmem:[%s3 + $0x568] sm:$0xff]
    %v959 = vld [vmem:[%s3 + $0x570] sm:$0xff]
    %v960 = vld [vmem:[%s3 + $0x578] sm:$0xff]
    %v961 = vld [vmem:[%s3 + $0x580] sm:$0xff]
    %v962 = vld [vmem:[%s3 + $0x588] sm:$0xff]
    %v963 = vld [vmem:[%s3 + $0x590] sm:$0xff]
    %v964 = vld [vmem:[%s3 + $0x598] sm:$0xff]
    %v965 = vld [vmem:[%s3 + $0x5a0] sm:$0xff]
    %v966 = vld [vmem:[%s3 + $0x5a8] sm:$0xff]
    %v967 = vld [vmem:[%s3 + $0x5b0] sm:$0xff]
    %v968 = vld [vmem:[%s3 + $0x5b8] sm:$0xff]
    %v969 = vld [vmem:[%s3 + $0x5c0] sm:$0xff]
    %v970 = vld [vmem:[%s3 + $0x5c8] sm:$0xff]
    %v971 = vld [vmem:[%s3 + $0x5d0] sm:$0xff]
    %v972 = vld [vmem:[%s3 + $0x5d8] sm:$0xff]
    %v973 = vld [vmem:[%s3 + $0x5e0] sm:$0xff]
    %v974 = vld [vmem:[%s3 + $0x5e8] sm:$0xff]
    %v975 = vld [vmem:[%s3 + $0x5f0] sm:$0xff]
    %v976 = vld [vmem:[%s3 + $0x5f8] sm:$0xff]
    %v977 = vld [vmem:[%s3 + $0x600] sm:$0xff]
    %v978 = vld [vmem:[%s3 + $0x608] sm:$0xff]
    %v979 = vld [vmem:[%s3 + $0x610] sm:$0xff]
    %v980 = vld [vmem:[%s3 + $0x618] sm:$0xff]
    %v981 = vld [vmem:[%s3 + $0x620] sm:$0xff]
    %v982 = vld [vmem:[%s3 + $0x628] sm:$0xff]
    %v983 = vld [vmem:[%s3 + $0x630] sm:$0xff]
    %v984 = vld [vmem:[%s3 + $0x638] sm:$0xff]
    %v985 = vld [vmem:[%s3 + $0x640] sm:$0xff]
    %v986 = vld [vmem:[%s3 + $0x648] sm:$0xff]
    %v987 = vld [vmem:[%s3 + $0x650] sm:$0xff]
    %v988 = vld [vmem:[%s3 + $0x658] sm:$0xff]
    %v989 = vld [vmem:[%s3 + $0x660] sm:$0xff]
    %v990 = vld [vmem:[%s3 + $0x668] sm:$0xff]
    %v991 = vld [vmem:[%s3 + $0x670] sm:$0xff]
    %v992 = vld [vmem:[%s3 + $0x678] sm:$0xff]
    %v993 = vld [vmem:[%s3 + $0x680] sm:$0xff]
    %v994 = vld [vmem:[%s3 + $0x688] sm:$0xff]
    %v995 = vld [vmem:[%s3 + $0x690] sm:$0xff]
    %v996 = vld [vmem:[%s3 + $0x698] sm:$0xff]
    %v997 = vld [vmem:[%s3 + $0x6a0] sm:$0xff]
    %v998 = vld [vmem:[%s3 + $0x6a8] sm:$0xff]
    %v999 = vld [vmem:[%s3 + $0x6b0] sm:$0xff]
    %v1000 = vld [vmem:[%s3 + $0x6b8] sm:$0xff]
    %v1001 = vld [vmem:[%s3 + $0x6c0] sm:$0xff]
    %v1002 = vld [vmem:[%s3 + $0x6c8] sm:$0xff]
    %v1003 = vld [vmem:[%s3 + $0x6d0] sm:$0xff]
    %v1004 = vld [vmem:[%s3 + $0x6d8] sm:$0xff]
    %v1005 = vld [vmem:[%s3 + $0x6e0] sm:$0xff]
    %v1006 = vld [vmem:[%s3 + $0x6e8] sm:$0xff]
    %v1007 = vld [vmem:[%s3 + $0x6f0] sm:$0xff]
    %v1008 = vld [vmem:[%s3 + $0x6f8] sm:$0xff]
    %v1009 = vld [vmem:[%s3 + $0x700] sm:$0xff]
    %v1010 = vld [vmem:[%s3 + $0x708] sm:$0xff]
    %v1011 = vld [vmem:[%s3 + $0x710] sm:$0xff]
    %v1012 = vld [vmem:[%s3 + $0x718] sm:$0xff]
    %v1013 = vld [vmem:[%s3 + $0x720] sm:$0xff]
    %v1014 = vld [vmem:[%s3 + $0x728] sm:$0xff]
    %v1015 = vld [vmem:[%s3 + $0x730] sm:$0xff]
    %v1016 = vld [vmem:[%s3 + $0x738] sm:$0xff]
    %v1017 = vld [vmem:[%s3 + $0x740] sm:$0xff]
    %v1018 = vld [vmem:[%s3 + $0x748] sm:$0xff]
    %v1019 = vld [vmem:[%s3 + $0x750] sm:$0xff]
    %v1020 = vld [vmem:[%s3 + $0x758] sm:$0xff]
    %v1021 = vld [vmem:[%s3 + $0x760] sm:$0xff]
    %v1022 = vld [vmem:[%s3 + $0x768] sm:$0xff]
    %v1023 = vld [vmem:[%s3 + $0x770] sm:$0xff]
    %v1024 = vld [vmem:[%s3 + $0x778] sm:$0xff]
    %v1025 = vld [vmem:[%s3 + $0x780] sm:$0xff]
    %v1026 = vld [vmem:[%s3 + $0x788] sm:$0xff]
    %v1027 = vld [vmem:[%s3 + $0x790] sm:$0xff]
    %v1028 = vld [vmem:[%s3 + $0x798] sm:$0xff]
    %v1029 = vld [vmem:[%s3 + $0x7a0] sm:$0xff]
    %v1030 = vld [vmem:[%s3 + $0x7a8] sm:$0xff]
    %v1031 = vld [vmem:[%s3 + $0x7b0] sm:$0xff]
    %v1032 = vld [vmem:[%s3 + $0x7b8] sm:$0xff]
    %v1033 = vld [vmem:[%s3 + $0x7c0] sm:$0xff]
    %v1034 = vld [vmem:[%s3 + $0x7c8] sm:$0xff]
    %v1035 = vld [vmem:[%s3 + $0x7d0] sm:$0xff]
    %v1036 = vld [vmem:[%s3 + $0x7d8] sm:$0xff]
    %v1037 = vld [vmem:[%s3 + $0x7e0] sm:$0xff]
    %v1038 = vld [vmem:[%s3 + $0x7e8] sm:$0xff]
    %v1039 = vld [vmem:[%s3 + $0x7f0] sm:$0xff]
    %v1040 = vld [vmem:[%s3 + $0x7f8] sm:$0xff]
    %v1041 = vld [vmem:[%s3 + $0x800] sm:$0xff]
    %v1042 = vld [vmem:[%s3 + $0x808] sm:$0xff]
    %v1043 = vld [vmem:[%s3 + $0x810] sm:$0xff]
    %v1044 = vld [vmem:[%s3 + $0x818] sm:$0xff]
    %v1045 = vld [vmem:[%s3 + $0x820] sm:$0xff]
    %v1046 = vld [vmem:[%s3 + $0x828] sm:$0xff]
    %v1047 = vld [vmem:[%s3 + $0x830] sm:$0xff]
    %v1048 = vld [vmem:[%s3 + $0x838] sm:$0xff]
    %v1049 = vld [vmem:[%s3 + $0x840] sm:$0xff]
    %v1050 = vld [vmem:[%s3 + $0x848] sm:$0xff]
    %v1051 = vld [vmem:[%s3 + $0x850] sm:$0xff]
    %v1052 = vld [vmem:[%s3 + $0x858] sm:$0xff]
    %v1053 = vld [vmem:[%s3 + $0x860] sm:$0xff]
    %v1054 = vld [vmem:[%s3 + $0x868] sm:$0xff]
    %v1055 = vld [vmem:[%s3 + $0x870] sm:$0xff]
    %v1056 = vld [vmem:[%s3 + $0x878] sm:$0xff]
    %v1057 = vld [vmem:[%s3 + $0x880] sm:$0xff]
    %v1058 = vld [vmem:[%s3 + $0x888] sm:$0xff]
    %v1059 = vld [vmem:[%s3 + $0x890] sm:$0xff]
    %v1060 = vld [vmem:[%s3 + $0x898] sm:$0xff]
    %v1061 = vld [vmem:[%s3 + $0x8a0] sm:$0xff]
    %v1062 = vld [vmem:[%s3 + $0x8a8] sm:$0xff]
    %v1063 = vld [vmem:[%s3 + $0x8b0] sm:$0xff]
    %v1064 = vld [vmem:[%s3 + $0x8b8] sm:$0xff]
    %v1065 = vld [vmem:[%s3 + $0x8c0] sm:$0xff]
    %v1066 = vld [vmem:[%s3 + $0x8c8] sm:$0xff]
    %v1067 = vld [vmem:[%s3 + $0x8d0] sm:$0xff]
    %v1068 = vld [vmem:[%s3 + $0x8d8] sm:$0xff]
    %v1069 = vld [vmem:[%s3 + $0x8e0] sm:$0xff]
    %v1070 = vld [vmem:[%s3 + $0x8e8] sm:$0xff]
    %v1071 = vld [vmem:[%s3 + $0x8f0] sm:$0xff]
    %v1072 = vld [vmem:[%s3 + $0x8f8] sm:$0xff]
    %v1073 = vld [vmem:[%s3 + $0x900] sm:$0xff]
    %v1074 = vld [vmem:[%s3 + $0x908] sm:$0xff]
    %v1075 = vld [vmem:[%s3 + $0x910] sm:$0xff]
    %v1076 = vld [vmem:[%s3 + $0x918] sm:$0xff]
    %v1077 = vld [vmem:[%s3 + $0x920] sm:$0xff]
    %v1078 = vld [vmem:[%s3 + $0x928] sm:$0xff]
    %v1079 = vld [vmem:[%s3 + $0x930] sm:$0xff]
    %v1080 = vld [vmem:[%s3 + $0x938] sm:$0xff]
    %v1081 = vld [vmem:[%s3 + $0x940] sm:$0xff]
    %v1082 = vld [vmem:[%s3 + $0x948] sm:$0xff]
    %v1083 = vld [vmem:[%s3 + $0x950] sm:$0xff]
    %v1084 = vld [vmem:[%s3 + $0x958] sm:$0xff]
    %v1085 = vld [vmem:[%s3 + $0x960] sm:$0xff]
    %v1086 = vld [vmem:[%s3 + $0x968] sm:$0xff]
    %v1087 = vld [vmem:[%s3 + $0x970] sm:$0xff]
    %v1088 = vld [vmem:[%s3 + $0x978] sm:$0xff]
    %v1089 = vld [vmem:[%s3 + $0x980] sm:$0xff]
    %v1090 = vld [vmem:[%s3 + $0x988] sm:$0xff]
    %v1091 = vld [vmem:[%s3 + $0x990] sm:$0xff]
    %v1092 = vld [vmem:[%s3 + $0x998] sm:$0xff]
    %v1093 = vld [vmem:[%s3 + $0x9a0] sm:$0xff]
    %v1094 = vld [vmem:[%s3 + $0x9a8] sm:$0xff]
    %v1095 = vld [vmem:[%s3 + $0x9b0] sm:$0xff]
    %v1096 = vld [vmem:[%s3 + $0x9b8] sm:$0xff]
    %v1097 = vld [vmem:[%s3 + $0x9c0] sm:$0xff]
    %v1098 = vld [vmem:[%s3 + $0x9c8] sm:$0xff]
    %v1099 = vld [vmem:[%s3 + $0x9d0] sm:$0xff]
    %v1100 = vld [vmem:[%s3 + $0x9d8] sm:$0xff]
    %v1101 = vld [vmem:[%s3 + $0x9e0] sm:$0xff]
    %v1102 = vld [vmem:[%s3 + $0x9e8] sm:$0xff]
    %v1103 = vld [vmem:[%s3 + $0x9f0] sm:$0xff]
    %v1104 = vld [vmem:[%s3 + $0x9f8] sm:$0xff]
    %v1105 = vld [vmem:[%s3 + $0xa00] sm:$0xff]
    %v1106 = vld [vmem:[%s3 + $0xa08] sm:$0xff]
    %v1107 = vld [vmem:[%s3 + $0xa10] sm:$0xff]
    %v1108 = vld [vmem:[%s3 + $0xa18] sm:$0xff]
    %v1109 = vld [vmem:[%s3 + $0xa20] sm:$0xff]
    %v1110 = vld [vmem:[%s3 + $0xa28] sm:$0xff]
    %v1111 = vld [vmem:[%s3 + $0xa30] sm:$0xff]
    %v1112 = vld [vmem:[%s3 + $0xa38] sm:$0xff]
    %v1113 = vld [vmem:[%s3 + $0xa40] sm:$0xff]
    %v1114 = vld [vmem:[%s3 + $0xa48] sm:$0xff]
    %v1115 = vld [vmem:[%s3 + $0xa50] sm:$0xff]
    %v1116 = vld [vmem:[%s3 + $0xa58] sm:$0xff]
    %v1117 = vld [vmem:[%s3 + $0xa60] sm:$0xff]
    %v1118 = vld [vmem:[%s3 + $0xa68] sm:$0xff]
    %v1119 = vld [vmem:[%s3 + $0xa70] sm:$0xff]
    %v1120 = vld [vmem:[%s3 + $0xa78] sm:$0xff]
    %v1121 = vld [vmem:[%s3 + $0xa80] sm:$0xff]
    %v1122 = vld [vmem:[%s3 + $0xa88] sm:$0xff]
    %v1123 = vld [vmem:[%s3 + $0xa90] sm:$0xff]
    %v1124 = vld [vmem:[%s3 + $0xa98] sm:$0xff]
    %v1125 = vld [vmem:[%s3 + $0xaa0] sm:$0xff]
    %v1126 = vld [vmem:[%s3 + $0xaa8] sm:$0xff]
    %v1127 = vld [vmem:[%s3 + $0xab0] sm:$0xff]
    %v1128 = vld [vmem:[%s3 + $0xab8] sm:$0xff]
    %v1129 = vld [vmem:[%s3 + $0xac0] sm:$0xff]
    %v1130 = vld [vmem:[%s3 + $0xac8] sm:$0xff]
    %v1131 = vld [vmem:[%s3 + $0xad0] sm:$0xff]
    %v1132 = vld [vmem:[%s3 + $0xad8] sm:$0xff]
    %v1133 = vld [vmem:[%s3 + $0xae0] sm:$0xff]
    %v1134 = vld [vmem:[%s3 + $0xae8] sm:$0xff]
    %v1135 = vld [vmem:[%s3 + $0xaf0] sm:$0xff]
    %v1136 = vld [vmem:[%s3 + $0xaf8] sm:$0xff]
    %v1137 = vld [vmem:[%s3 + $0xb00] sm:$0xff]
    %v1138 = vld [vmem:[%s3 + $0xb08] sm:$0xff]
    %v1139 = vld [vmem:[%s3 + $0xb10] sm:$0xff]
    %v1140 = vld [vmem:[%s3 + $0xb18] sm:$0xff]
    %v1141 = vld [vmem:[%s3 + $0xb20] sm:$0xff]
    %v1142 = vld [vmem:[%s3 + $0xb28] sm:$0xff]
    %v1143 = vld [vmem:[%s3 + $0xb30] sm:$0xff]
    %v1144 = vld [vmem:[%s3 + $0xb38] sm:$0xff]
    %v1145 = vld [vmem:[%s3 + $0xb40] sm:$0xff]
    %v1146 = vld [vmem:[%s3 + $0xb48] sm:$0xff]
    %v1147 = vld [vmem:[%s3 + $0xb50] sm:$0xff]
    %v1148 = vld [vmem:[%s3 + $0xb58] sm:$0xff]
    %v1149 = vld [vmem:[%s3 + $0xb60] sm:$0xff]
    %v1150 = vld [vmem:[%s3 + $0xb68] sm:$0xff]
    %v1151 = vld [vmem:[%s3 + $0xb70] sm:$0xff]
    %v1152 = vld [vmem:[%s3 + $0xb78] sm:$0xff]
    %v1153 = vld [vmem:[%s3 + $0xb80] sm:$0xff]
    %v1154 = vld [vmem:[%s3 + $0xb88] sm:$0xff]
    %v1155 = vld [vmem:[%s3 + $0xb90] sm:$0xff]
    %v1156 = vld [vmem:[%s3 + $0xb98] sm:$0xff]
    %v1157 = vld [vmem:[%s3 + $0xba0] sm:$0xff]
    %v1158 = vld [vmem:[%s3 + $0xba8] sm:$0xff]
    %v1159 = vld [vmem:[%s3 + $0xbb0] sm:$0xff]
    %v1160 = vld [vmem:[%s3 + $0xbb8] sm:$0xff]
    %v1161 = vld [vmem:[%s3 + $0xbc0] sm:$0xff]
    %v1162 = vld [vmem:[%s3 + $0xbc8] sm:$0xff]
    %v1163 = vld [vmem:[%s3 + $0xbd0] sm:$0xff]
    %v1164 = vld [vmem:[%s3 + $0xbd8] sm:$0xff]
    %v1165 = vld [vmem:[%s3 + $0xbe0] sm:$0xff]
    %v1166 = vld [vmem:[%s3 + $0xbe8] sm:$0xff]
    %v1167 = vld [vmem:[%s3 + $0xbf0] sm:$0xff]
    %v1168 = vld [vmem:[%s3 + $0xbf8] sm:$0xff]
    %v1169 = vld [vmem:[%s3 + $0xc00] sm:$0xff]
    %v1170 = vld [vmem:[%s3 + $0xc08] sm:$0xff]
    %v1171 = vld [vmem:[%s3 + $0xc10] sm:$0xff]
    %v1172 = vld [vmem:[%s3 + $0xc18] sm:$0xff]
    %v1173 = vld [vmem:[%s3 + $0xc20] sm:$0xff]
    %v1174 = vld [vmem:[%s3 + $0xc28] sm:$0xff]
    %v1175 = vld [vmem:[%s3 + $0xc30] sm:$0xff]
    %v1176 = vld [vmem:[%s3 + $0xc38] sm:$0xff]
    %v1177 = vld [vmem:[%s3 + $0xc40] sm:$0xff]
    %v1178 = vld [vmem:[%s3 + $0xc48] sm:$0xff]
    %v1179 = vld [vmem:[%s3 + $0xc50] sm:$0xff]
    %v1180 = vld [vmem:[%s3 + $0xc58] sm:$0xff]
    %v1181 = vld [vmem:[%s3 + $0xc60] sm:$0xff]
    %v1182 = vld [vmem:[%s3 + $0xc68] sm:$0xff]
    %v1183 = vld [vmem:[%s3 + $0xc70] sm:$0xff]
    %v1184 = vld [vmem:[%s3 + $0xc78] sm:$0xff]
    %v1185 = vld [vmem:[%s3 + $0xc80] sm:$0xff]
    %v1186 = vld [vmem:[%s3 + $0xc88] sm:$0xff]
    %v1187 = vld [vmem:[%s3 + $0xc90] sm:$0xff]
    %v1188 = vld [vmem:[%s3 + $0xc98] sm:$0xff]
    %v1189 = vld [vmem:[%s3 + $0xca0] sm:$0xff]
    %v1190 = vld [vmem:[%s3 + $0xca8] sm:$0xff]
    %v1191 = vld [vmem:[%s3 + $0xcb0] sm:$0xff]
    %v1192 = vld [vmem:[%s3 + $0xcb8] sm:$0xff]
    %v1193 = vld [vmem:[%s3 + $0xcc0] sm:$0xff]
    %v1194 = vld [vmem:[%s3 + $0xcc8] sm:$0xff]
    %v1195 = vld [vmem:[%s3 + $0xcd0] sm:$0xff]
    %v1196 = vld [vmem:[%s3 + $0xcd8] sm:$0xff]
    %v1197 = vld [vmem:[%s3 + $0xce0] sm:$0xff]
    %v1198 = vld [vmem:[%s3 + $0xce8] sm:$0xff]
    %v1199 = vld [vmem:[%s3 + $0xcf0] sm:$0xff]
    %v1200 = vld [vmem:[%s3 + $0xcf8] sm:$0xff]
    %v1201 = vld [vmem:[%s3 + $0xd00] sm:$0xff]
    %v1202 = vld [vmem:[%s3 + $0xd08] sm:$0xff]
    %v1203 = vld [vmem:[%s3 + $0xd10] sm:$0xff]
    %v1204 = vld [vmem:[%s3 + $0xd18] sm:$0xff]
    %v1205 = vld [vmem:[%s3 + $0xd20] sm:$0xff]
    %v1206 = vld [vmem:[%s3 + $0xd28] sm:$0xff]
    %v1207 = vld [vmem:[%s3 + $0xd30] sm:$0xff]
    %v1208 = vld [vmem:[%s3 + $0xd38] sm:$0xff]
    %v1209 = vld [vmem:[%s3 + $0xd40] sm:$0xff]
    %v1210 = vld [vmem:[%s3 + $0xd48] sm:$0xff]
    %v1211 = vld [vmem:[%s3 + $0xd50] sm:$0xff]
    %v1212 = vld [vmem:[%s3 + $0xd58] sm:$0xff]
    %v1213 = vld [vmem:[%s3 + $0xd60] sm:$0xff]
    %v1214 = vld [vmem:[%s3 + $0xd68] sm:$0xff]
    %v1215 = vld [vmem:[%s3 + $0xd70] sm:$0xff]
    %v1216 = vld [vmem:[%s3 + $0xd78] sm:$0xff]
    %v1217 = vld [vmem:[%s3 + $0xd80] sm:$0xff]
    %v1218 = vld [vmem:[%s3 + $0xd88] sm:$0xff]
    %v1219 = vld [vmem:[%s3 + $0xd90] sm:$0xff]
    %v1220 = vld [vmem:[%s3 + $0xd98] sm:$0xff]
    %v1221 = vld [vmem:[%s3 + $0xda0] sm:$0xff]
    %v1222 = vld [vmem:[%s3 + $0xda8] sm:$0xff]
    %v1223 = vld [vmem:[%s3 + $0xdb0] sm:$0xff]
    %v1224 = vld [vmem:[%s3 + $0xdb8] sm:$0xff]
    %v1225 = vld [vmem:[%s3 + $0xdc0] sm:$0xff]
    %v1226 = vld [vmem:[%s3 + $0xdc8] sm:$0xff]
    %v1227 = vld [vmem:[%s3 + $0xdd0] sm:$0xff]
    %v1228 = vld [vmem:[%s3 + $0xdd8] sm:$0xff]
    %v1229 = vld [vmem:[%s3 + $0xde0] sm:$0xff]
    %v1230 = vld [vmem:[%s3 + $0xde8] sm:$0xff]
    %v1231 = vld [vmem:[%s3 + $0xdf0] sm:$0xff]
    %v1232 = vld [vmem:[%s3 + $0xdf8] sm:$0xff]
    %v1233 = vld [vmem:[%s3 + $0xe00] sm:$0xff]
    %v1234 = vld [vmem:[%s3 + $0xe08] sm:$0xff]
    %v1235 = vld [vmem:[%s3 + $0xe10] sm:$0xff]
    %v1236 = vld [vmem:[%s3 + $0xe18] sm:$0xff]
    %v1237 = vld [vmem:[%s3 + $0xe20] sm:$0xff]
    %v1238 = vld [vmem:[%s3 + $0xe28] sm:$0xff]
    %v1239 = vld [vmem:[%s3 + $0xe30] sm:$0xff]
    %v1240 = vld [vmem:[%s3 + $0xe38] sm:$0xff]
    %v1241 = vld [vmem:[%s3 + $0xe40] sm:$0xff]
    %v1242 = vld [vmem:[%s3 + $0xe48] sm:$0xff]
    %v1243 = vld [vmem:[%s3 + $0xe50] sm:$0xff]
    %v1244 = vld [vmem:[%s3 + $0xe58] sm:$0xff]
    %v1245 = vld [vmem:[%s3 + $0xe60] sm:$0xff]
    %v1246 = vld [vmem:[%s3 + $0xe68] sm:$0xff]
    %v1247 = vld [vmem:[%s3 + $0xe70] sm:$0xff]
    %v1248 = vld [vmem:[%s3 + $0xe78] sm:$0xff]
    %v1249 = vld [vmem:[%s3 + $0xe80] sm:$0xff]
    %v1250 = vld [vmem:[%s3 + $0xe88] sm:$0xff]
    %v1251 = vld [vmem:[%s3 + $0xe90] sm:$0xff]
    %v1252 = vld [vmem:[%s3 + $0xe98] sm:$0xff]
    %v1253 = vld [vmem:[%s3 + $0xea0] sm:$0xff]
    %v1254 = vld [vmem:[%s3 + $0xea8] sm:$0xff]
    %v1255 = vld [vmem:[%s3 + $0xeb0] sm:$0xff]
    %v1256 = vld [vmem:[%s3 + $0xeb8] sm:$0xff]
    %v1257 = vld [vmem:[%s3 + $0xec0] sm:$0xff]
    %v1258 = vld [vmem:[%s3 + $0xec8] sm:$0xff]
    %v1259 = vld [vmem:[%s3 + $0xed0] sm:$0xff]
    %v1260 = vld [vmem:[%s3 + $0xed8] sm:$0xff]
    %v1261 = vld [vmem:[%s3 + $0xee0] sm:$0xff]
    %v1262 = vld [vmem:[%s3 + $0xee8] sm:$0xff]
    %v1263 = vld [vmem:[%s3 + $0xef0] sm:$0xff]
    %v1264 = vld [vmem:[%s3 + $0xef8] sm:$0xff]
    %v1265 = vld [vmem:[%s3 + $0xf00] sm:$0xff]
    %v1266 = vld [vmem:[%s3 + $0xf08] sm:$0xff]
    %v1267 = vld [vmem:[%s3 + $0xf10] sm:$0xff]
    %v1268 = vld [vmem:[%s3 + $0xf18] sm:$0xff]
    %v1269 = vld [vmem:[%s3 + $0xf20] sm:$0xff]
    %v1270 = vld [vmem:[%s3 + $0xf28] sm:$0xff]
    %v1271 = vld [vmem:[%s3 + $0xf30] sm:$0xff]
    %v1272 = vld [vmem:[%s3 + $0xf38] sm:$0xff]
    %v1273 = vld [vmem:[%s3 + $0xf40] sm:$0xff]
    %v1274 = vld [vmem:[%s3 + $0xf48] sm:$0xff]
    %v1275 = vld [vmem:[%s3 + $0xf50] sm:$0xff]
    %v1276 = vld [vmem:[%s3 + $0xf58] sm:$0xff]
    %v1277 = vld [vmem:[%s3 + $0xf60] sm:$0xff]
    %v1278 = vld [vmem:[%s3 + $0xf68] sm:$0xff]
    %v1279 = vld [vmem:[%s3 + $0xf70] sm:$0xff]
    %v1280 = vld [vmem:[%s3 + $0xf78] sm:$0xff]
    %v1281 = vld [vmem:[%s3 + $0xf80] sm:$0xff]
    %v1282 = vld [vmem:[%s3 + $0xf88] sm:$0xff]
    %v1283 = vld [vmem:[%s3 + $0xf90] sm:$0xff]
    %v1284 = vld [vmem:[%s3 + $0xf98] sm:$0xff]
    %v1285 = vld [vmem:[%s3 + $0xfa0] sm:$0xff]
    %v1286 = vld [vmem:[%s3 + $0xfa8] sm:$0xff]
    %v1287 = vld [vmem:[%s3 + $0xfb0] sm:$0xff]
    %v1288 = vld [vmem:[%s3 + $0xfb8] sm:$0xff]
    %v1289 = vld [vmem:[%s3 + $0xfc0] sm:$0xff]
    %v1290 = vld [vmem:[%s3 + $0xfc8] sm:$0xff]
    %v1291 = vld [vmem:[%s3 + $0xfd0] sm:$0xff]
    %v1292 = vld [vmem:[%s3 + $0xfd8] sm:$0xff]
    %v1293 = vld [vmem:[%s3 + $0xfe0] sm:$0xff]
    %v1294 = vld [vmem:[%s3 + $0xfe8] sm:$0xff]
    %v1295 = vld [vmem:[%s3 + $0xff0] sm:$0xff]
    %v1296 = vld [vmem:[%s3 + $0xff8] sm:$0xff]
    %v1297 = vld [vmem:[%s4] sm:$0x1]
    %v1299 = vperm.slane %v1297, 0
    %1301 = vmatpush.msra.mxu0 %v800
    %1302 = vmatpush.msra.mxu0 %v799
    %1303 = vmatpush.msra.mxu0 %v798
    %1304 = vmatpush.msra.mxu0 %v797
    %1305 = vmatpush.msra.mxu0 %v796
    %1306 = vmatpush.msra.mxu0 %v795
    %1307 = vmatpush.msra.mxu0 %v794
    %1308 = vmatpush.msra.mxu0 %v793
    %1309 = vmatpush.msra.mxu0 %v792
    %1310 = vmatpush.msra.mxu0 %v791
    %1311 = vmatpush.msra.mxu0 %v790
    %1312 = vmatpush.msra.mxu0 %v789
    %1313 = vmatpush.msra.mxu0 %v788
    %1314 = vmatpush.msra.mxu0 %v787
    %1315 = vmatpush.msra.mxu0 %v786
    %1316 = vmatpush.msra.mxu0 %v785
    %1317 = vmatmul.f32.gmra.mxu0 %v753
    %v1318 = vpop.f32.mrf.mxu0
    %v1319 = vadd.f32 %v1299, %v1318
    %1320 = vdwg.mxu0
    %1321 = vmatpush.msra.mxu0 %v816
    %1322 = vmatpush.msra.mxu0 %v815
    %1323 = vmatpush.msra.mxu0 %v814
    %1324 = vmatpush.msra.mxu0 %v813
    %1325 = vmatpush.msra.mxu0 %v812
    %1326 = vmatpush.msra.mxu0 %v811
    %1327 = vmatpush.msra.mxu0 %v810
    %1328 = vmatpush.msra.mxu0 %v809
    %1329 = vmatpush.msra.mxu0 %v808
    %1330 = vmatpush.msra.mxu0 %v807
    %1331 = vmatpush.msra.mxu0 %v806
    %1332 = vmatpush.msra.mxu0 %v805
    %1333 = vmatpush.msra.mxu0 %v804
    %1334 = vmatpush.msra.mxu0 %v803
    %1335 = vmatpush.msra.mxu0 %v802
    %1336 = vmatpush.msra.mxu0 %v801
    %1337 = vmatmul.f32.gmra.mxu0 %v754
    %v1338 = vpop.f32.mrf.mxu0
    %v1339 = vadd.f32 %v1319, %v1338
    %1340 = vdwg.mxu0
    %1341 = vmatpush.msra.mxu0 %v832
    %1342 = vmatpush.msra.mxu0 %v831
    %1343 = vmatpush.msra.mxu0 %v830
    %1344 = vmatpush.msra.mxu0 %v829
    %1345 = vmatpush.msra.mxu0 %v828
    %1346 = vmatpush.msra.mxu0 %v827
    %1347 = vmatpush.msra.mxu0 %v826
    %1348 = vmatpush.msra.mxu0 %v825
    %1349 = vmatpush.msra.mxu0 %v824
    %1350 = vmatpush.msra.mxu0 %v823
    %1351 = vmatpush.msra.mxu0 %v822
    %1352 = vmatpush.msra.mxu0 %v821
    %1353 = vmatpush.msra.mxu0 %v820
    %1354 = vmatpush.msra.mxu0 %v819
    %1355 = vmatpush.msra.mxu0 %v818
    %1356 = vmatpush.msra.mxu0 %v817
    %1357 = vmatmul.f32.gmra.mxu0 %v755
    %v1358 = vpop.f32.mrf.mxu0
    %v1359 = vadd.f32 %v1339, %v1358
    %1360 = vdwg.mxu0
    %1361 = vmatpush.msra.mxu0 %v848
    %1362 = vmatpush.msra.mxu0 %v847
    %1363 = vmatpush.msra.mxu0 %v846
    %1364 = vmatpush.msra.mxu0 %v845
    %1365 = vmatpush.msra.mxu0 %v844
    %1366 = vmatpush.msra.mxu0 %v843
    %1367 = vmatpush.msra.mxu0 %v842
    %1368 = vmatpush.msra.mxu0 %v841
    %1369 = vmatpush.msra.mxu0 %v840
    %1370 = vmatpush.msra.mxu0 %v839
    %1371 = vmatpush.msra.mxu0 %v838
    %1372 = vmatpush.msra.mxu0 %v837
    %1373 = vmatpush.msra.mxu0 %v836
    %1374 = vmatpush.msra.mxu0 %v835
    %1375 = vmatpush.msra.mxu0 %v834
    %1376 = vmatpush.msra.mxu0 %v833
    %1377 = vmatmul.f32.gmra.mxu0 %v756
    %v1378 = vpop.f32.mrf.mxu0
    %v1379 = vadd.f32 %v1359, %v1378
    %1380 = vdwg.mxu0
    %1381 = vmatpush.msra.mxu0 %v864
    %1382 = vmatpush.msra.mxu0 %v863
    %1383 = vmatpush.msra.mxu0 %v862
    %1384 = vmatpush.msra.mxu0 %v861
    %1385 = vmatpush.msra.mxu0 %v860
    %1386 = vmatpush.msra.mxu0 %v859
    %1387 = vmatpush.msra.mxu0 %v858
    %1388 = vmatpush.msra.mxu0 %v857
    %1389 = vmatpush.msra.mxu0 %v856
    %1390 = vmatpush.msra.mxu0 %v855
    %1391 = vmatpush.msra.mxu0 %v854
    %1392 = vmatpush.msra.mxu0 %v853
    %1393 = vmatpush.msra.mxu0 %v852
    %1394 = vmatpush.msra.mxu0 %v851
    %1395 = vmatpush.msra.mxu0 %v850
    %1396 = vmatpush.msra.mxu0 %v849
    %1397 = vmatmul.f32.gmra.mxu0 %v757
    %v1398 = vpop.f32.mrf.mxu0
    %v1399 = vadd.f32 %v1379, %v1398
    %1400 = vdwg.mxu0
    %1401 = vmatpush.msra.mxu0 %v880
    %1402 = vmatpush.msra.mxu0 %v879
    %1403 = vmatpush.msra.mxu0 %v878
    %1404 = vmatpush.msra.mxu0 %v877
    %1405 = vmatpush.msra.mxu0 %v876
    %1406 = vmatpush.msra.mxu0 %v875
    %1407 = vmatpush.msra.mxu0 %v874
    %1408 = vmatpush.msra.mxu0 %v873
    %1409 = vmatpush.msra.mxu0 %v872
    %1410 = vmatpush.msra.mxu0 %v871
    %1411 = vmatpush.msra.mxu0 %v870
    %1412 = vmatpush.msra.mxu0 %v869
    %1413 = vmatpush.msra.mxu0 %v868
    %1414 = vmatpush.msra.mxu0 %v867
    %1415 = vmatpush.msra.mxu0 %v866
    %1416 = vmatpush.msra.mxu0 %v865
    %1417 = vmatmul.f32.gmra.mxu0 %v758
    %v1418 = vpop.f32.mrf.mxu0
    %v1419 = vadd.f32 %v1399, %v1418
    %1420 = vdwg.mxu0
    %1421 = vmatpush.msra.mxu0 %v896
    %1422 = vmatpush.msra.mxu0 %v895
    %1423 = vmatpush.msra.mxu0 %v894
    %1424 = vmatpush.msra.mxu0 %v893
    %1425 = vmatpush.msra.mxu0 %v892
    %1426 = vmatpush.msra.mxu0 %v891
    %1427 = vmatpush.msra.mxu0 %v890
    %1428 = vmatpush.msra.mxu0 %v889
    %1429 = vmatpush.msra.mxu0 %v888
    %1430 = vmatpush.msra.mxu0 %v887
    %1431 = vmatpush.msra.mxu0 %v886
    %1432 = vmatpush.msra.mxu0 %v885
    %1433 = vmatpush.msra.mxu0 %v884
    %1434 = vmatpush.msra.mxu0 %v883
    %1435 = vmatpush.msra.mxu0 %v882
    %1436 = vmatpush.msra.mxu0 %v881
    %1437 = vmatmul.f32.gmra.mxu0 %v759
    %v1438 = vpop.f32.mrf.mxu0
    %v1439 = vadd.f32 %v1419, %v1438
    %1440 = vdwg.mxu0
    %1441 = vmatpush.msra.mxu0 %v912
    %1442 = vmatpush.msra.mxu0 %v911
    %1443 = vmatpush.msra.mxu0 %v910
    %1444 = vmatpush.msra.mxu0 %v909
    %1445 = vmatpush.msra.mxu0 %v908
    %1446 = vmatpush.msra.mxu0 %v907
    %1447 = vmatpush.msra.mxu0 %v906
    %1448 = vmatpush.msra.mxu0 %v905
    %1449 = vmatpush.msra.mxu0 %v904
    %1450 = vmatpush.msra.mxu0 %v903
    %1451 = vmatpush.msra.mxu0 %v902
    %1452 = vmatpush.msra.mxu0 %v901
    %1453 = vmatpush.msra.mxu0 %v900
    %1454 = vmatpush.msra.mxu0 %v899
    %1455 = vmatpush.msra.mxu0 %v898
    %1456 = vmatpush.msra.mxu0 %v897
    %1457 = vmatmul.f32.gmra.mxu0 %v760
    %v1458 = vpop.f32.mrf.mxu0
    %v1459 = vadd.f32 %v1439, %v1458
    %1460 = vdwg.mxu0
    %1461 = vmatpush.msra.mxu0 %v928
    %1462 = vmatpush.msra.mxu0 %v927
    %1463 = vmatpush.msra.mxu0 %v926
    %1464 = vmatpush.msra.mxu0 %v925
    %1465 = vmatpush.msra.mxu0 %v924
    %1466 = vmatpush.msra.mxu0 %v923
    %1467 = vmatpush.msra.mxu0 %v922
    %1468 = vmatpush.msra.mxu0 %v921
    %1469 = vmatpush.msra.mxu0 %v920
    %1470 = vmatpush.msra.mxu0 %v919
    %1471 = vmatpush.msra.mxu0 %v918
    %1472 = vmatpush.msra.mxu0 %v917
    %1473 = vmatpush.msra.mxu0 %v916
    %1474 = vmatpush.msra.mxu0 %v915
    %1475 = vmatpush.msra.mxu0 %v914
    %1476 = vmatpush.msra.mxu0 %v913
    %1477 = vmatmul.f32.gmra.mxu0 %v761
    %v1478 = vpop.f32.mrf.mxu0
    %v1479 = vadd.f32 %v1459, %v1478
    %1480 = vdwg.mxu0
    %1481 = vmatpush.msra.mxu0 %v944
    %1482 = vmatpush.msra.mxu0 %v943
    %1483 = vmatpush.msra.mxu0 %v942
    %1484 = vmatpush.msra.mxu0 %v941
    %1485 = vmatpush.msra.mxu0 %v940
    %1486 = vmatpush.msra.mxu0 %v939
    %1487 = vmatpush.msra.mxu0 %v938
    %1488 = vmatpush.msra.mxu0 %v937
    %1489 = vmatpush.msra.mxu0 %v936
    %1490 = vmatpush.msra.mxu0 %v935
    %1491 = vmatpush.msra.mxu0 %v934
    %1492 = vmatpush.msra.mxu0 %v933
    %1493 = vmatpush.msra.mxu0 %v932
    %1494 = vmatpush.msra.mxu0 %v931
    %1495 = vmatpush.msra.mxu0 %v930
    %1496 = vmatpush.msra.mxu0 %v929
    %1497 = vmatmul.f32.gmra.mxu0 %v762
    %v1498 = vpop.f32.mrf.mxu0
    %v1499 = vadd.f32 %v1479, %v1498
    %1500 = vdwg.mxu0
    %1501 = vmatpush.msra.mxu0 %v960
    %1502 = vmatpush.msra.mxu0 %v959
    %1503 = vmatpush.msra.mxu0 %v958
    %1504 = vmatpush.msra.mxu0 %v957
    %1505 = vmatpush.msra.mxu0 %v956
    %1506 = vmatpush.msra.mxu0 %v955
    %1507 = vmatpush.msra.mxu0 %v954
    %1508 = vmatpush.msra.mxu0 %v953
    %1509 = vmatpush.msra.mxu0 %v952
    %1510 = vmatpush.msra.mxu0 %v951
    %1511 = vmatpush.msra.mxu0 %v950
    %1512 = vmatpush.msra.mxu0 %v949
    %1513 = vmatpush.msra.mxu0 %v948
    %1514 = vmatpush.msra.mxu0 %v947
    %1515 = vmatpush.msra.mxu0 %v946
    %1516 = vmatpush.msra.mxu0 %v945
    %1517 = vmatmul.f32.gmra.mxu0 %v763
    %v1518 = vpop.f32.mrf.mxu0
    %v1519 = vadd.f32 %v1499, %v1518
    %1520 = vdwg.mxu0
    %1521 = vmatpush.msra.mxu0 %v976
    %1522 = vmatpush.msra.mxu0 %v975
    %1523 = vmatpush.msra.mxu0 %v974
    %1524 = vmatpush.msra.mxu0 %v973
    %1525 = vmatpush.msra.mxu0 %v972
    %1526 = vmatpush.msra.mxu0 %v971
    %1527 = vmatpush.msra.mxu0 %v970
    %1528 = vmatpush.msra.mxu0 %v969
    %1529 = vmatpush.msra.mxu0 %v968
    %1530 = vmatpush.msra.mxu0 %v967
    %1531 = vmatpush.msra.mxu0 %v966
    %1532 = vmatpush.msra.mxu0 %v965
    %1533 = vmatpush.msra.mxu0 %v964
    %1534 = vmatpush.msra.mxu0 %v963
    %1535 = vmatpush.msra.mxu0 %v962
    %1536 = vmatpush.msra.mxu0 %v961
    %1537 = vmatmul.f32.gmra.mxu0 %v764
    %v1538 = vpop.f32.mrf.mxu0
    %v1539 = vadd.f32 %v1519, %v1538
    %1540 = vdwg.mxu0
    %1541 = vmatpush.msra.mxu0 %v992
    %1542 = vmatpush.msra.mxu0 %v991
    %1543 = vmatpush.msra.mxu0 %v990
    %1544 = vmatpush.msra.mxu0 %v989
    %1545 = vmatpush.msra.mxu0 %v988
    %1546 = vmatpush.msra.mxu0 %v987
    %1547 = vmatpush.msra.mxu0 %v986
    %1548 = vmatpush.msra.mxu0 %v985
    %1549 = vmatpush.msra.mxu0 %v984
    %1550 = vmatpush.msra.mxu0 %v983
    %1551 = vmatpush.msra.mxu0 %v982
    %1552 = vmatpush.msra.mxu0 %v981
    %1553 = vmatpush.msra.mxu0 %v980
    %1554 = vmatpush.msra.mxu0 %v979
    %1555 = vmatpush.msra.mxu0 %v978
    %1556 = vmatpush.msra.mxu0 %v977
    %1557 = vmatmul.f32.gmra.mxu0 %v765
    %v1558 = vpop.f32.mrf.mxu0
    %v1559 = vadd.f32 %v1539, %v1558
    %1560 = vdwg.mxu0
    %1561 = vmatpush.msra.mxu0 %v1008
    %1562 = vmatpush.msra.mxu0 %v1007
    %1563 = vmatpush.msra.mxu0 %v1006
    %1564 = vmatpush.msra.mxu0 %v1005
    %1565 = vmatpush.msra.mxu0 %v1004
    %1566 = vmatpush.msra.mxu0 %v1003
    %1567 = vmatpush.msra.mxu0 %v1002
    %1568 = vmatpush.msra.mxu0 %v1001
    %1569 = vmatpush.msra.mxu0 %v1000
    %1570 = vmatpush.msra.mxu0 %v999
    %1571 = vmatpush.msra.mxu0 %v998
    %1572 = vmatpush.msra.mxu0 %v997
    %1573 = vmatpush.msra.mxu0 %v996
    %1574 = vmatpush.msra.mxu0 %v995
    %1575 = vmatpush.msra.mxu0 %v994
    %1576 = vmatpush.msra.mxu0 %v993
    %1577 = vmatmul.f32.gmra.mxu0 %v766
    %v1578 = vpop.f32.mrf.mxu0
    %v1579 = vadd.f32 %v1559, %v1578
    %1580 = vdwg.mxu0
    %1581 = vmatpush.msra.mxu0 %v1024
    %1582 = vmatpush.msra.mxu0 %v1023
    %1583 = vmatpush.msra.mxu0 %v1022
    %1584 = vmatpush.msra.mxu0 %v1021
    %1585 = vmatpush.msra.mxu0 %v1020
    %1586 = vmatpush.msra.mxu0 %v1019
    %1587 = vmatpush.msra.mxu0 %v1018
    %1588 = vmatpush.msra.mxu0 %v1017
    %1589 = vmatpush.msra.mxu0 %v1016
    %1590 = vmatpush.msra.mxu0 %v1015
    %1591 = vmatpush.msra.mxu0 %v1014
    %1592 = vmatpush.msra.mxu0 %v1013
    %1593 = vmatpush.msra.mxu0 %v1012
    %1594 = vmatpush.msra.mxu0 %v1011
    %1595 = vmatpush.msra.mxu0 %v1010
    %1596 = vmatpush.msra.mxu0 %v1009
    %1597 = vmatmul.f32.gmra.mxu0 %v767
    %v1598 = vpop.f32.mrf.mxu0
    %v1599 = vadd.f32 %v1579, %v1598
    %1600 = vdwg.mxu0
    %1601 = vmatpush.msra.mxu0 %v1040
    %1602 = vmatpush.msra.mxu0 %v1039
    %1603 = vmatpush.msra.mxu0 %v1038
    %1604 = vmatpush.msra.mxu0 %v1037
    %1605 = vmatpush.msra.mxu0 %v1036
    %1606 = vmatpush.msra.mxu0 %v1035
    %1607 = vmatpush.msra.mxu0 %v1034
    %1608 = vmatpush.msra.mxu0 %v1033
    %1609 = vmatpush.msra.mxu0 %v1032
    %1610 = vmatpush.msra.mxu0 %v1031
    %1611 = vmatpush.msra.mxu0 %v1030
    %1612 = vmatpush.msra.mxu0 %v1029
    %1613 = vmatpush.msra.mxu0 %v1028
    %1614 = vmatpush.msra.mxu0 %v1027
    %1615 = vmatpush.msra.mxu0 %v1026
    %1616 = vmatpush.msra.mxu0 %v1025
    %1617 = vmatmul.f32.gmra.mxu0 %v768
    %v1618 = vpop.f32.mrf.mxu0
    %v1619 = vadd.f32 %v1599, %v1618
    %1620 = vdwg.mxu0
    %1621 = vmatpush.msra.mxu0 %v1056
    %1622 = vmatpush.msra.mxu0 %v1055
    %1623 = vmatpush.msra.mxu0 %v1054
    %1624 = vmatpush.msra.mxu0 %v1053
    %1625 = vmatpush.msra.mxu0 %v1052
    %1626 = vmatpush.msra.mxu0 %v1051
    %1627 = vmatpush.msra.mxu0 %v1050
    %1628 = vmatpush.msra.mxu0 %v1049
    %1629 = vmatpush.msra.mxu0 %v1048
    %1630 = vmatpush.msra.mxu0 %v1047
    %1631 = vmatpush.msra.mxu0 %v1046
    %1632 = vmatpush.msra.mxu0 %v1045
    %1633 = vmatpush.msra.mxu0 %v1044
    %1634 = vmatpush.msra.mxu0 %v1043
    %1635 = vmatpush.msra.mxu0 %v1042
    %1636 = vmatpush.msra.mxu0 %v1041
    %1637 = vmatmul.f32.gmra.mxu0 %v769
    %v1638 = vpop.f32.mrf.mxu0
    %v1639 = vadd.f32 %v1619, %v1638
    %1640 = vdwg.mxu0
    %1641 = vmatpush.msra.mxu0 %v1072
    %1642 = vmatpush.msra.mxu0 %v1071
    %1643 = vmatpush.msra.mxu0 %v1070
    %1644 = vmatpush.msra.mxu0 %v1069
    %1645 = vmatpush.msra.mxu0 %v1068
    %1646 = vmatpush.msra.mxu0 %v1067
    %1647 = vmatpush.msra.mxu0 %v1066
    %1648 = vmatpush.msra.mxu0 %v1065
    %1649 = vmatpush.msra.mxu0 %v1064
    %1650 = vmatpush.msra.mxu0 %v1063
    %1651 = vmatpush.msra.mxu0 %v1062
    %1652 = vmatpush.msra.mxu0 %v1061
    %1653 = vmatpush.msra.mxu0 %v1060
    %1654 = vmatpush.msra.mxu0 %v1059
    %1655 = vmatpush.msra.mxu0 %v1058
    %1656 = vmatpush.msra.mxu0 %v1057
    %1657 = vmatmul.f32.gmra.mxu0 %v770
    %v1658 = vpop.f32.mrf.mxu0
    %v1659 = vadd.f32 %v1639, %v1658
    %1660 = vdwg.mxu0
    %1661 = vmatpush.msra.mxu0 %v1088
    %1662 = vmatpush.msra.mxu0 %v1087
    %1663 = vmatpush.msra.mxu0 %v1086
    %1664 = vmatpush.msra.mxu0 %v1085
    %1665 = vmatpush.msra.mxu0 %v1084
    %1666 = vmatpush.msra.mxu0 %v1083
    %1667 = vmatpush.msra.mxu0 %v1082
    %1668 = vmatpush.msra.mxu0 %v1081
    %1669 = vmatpush.msra.mxu0 %v1080
    %1670 = vmatpush.msra.mxu0 %v1079
    %1671 = vmatpush.msra.mxu0 %v1078
    %1672 = vmatpush.msra.mxu0 %v1077
    %1673 = vmatpush.msra.mxu0 %v1076
    %1674 = vmatpush.msra.mxu0 %v1075
    %1675 = vmatpush.msra.mxu0 %v1074
    %1676 = vmatpush.msra.mxu0 %v1073
    %1677 = vmatmul.f32.gmra.mxu0 %v771
    %v1678 = vpop.f32.mrf.mxu0
    %v1679 = vadd.f32 %v1659, %v1678
    %1680 = vdwg.mxu0
    %1681 = vmatpush.msra.mxu0 %v1104
    %1682 = vmatpush.msra.mxu0 %v1103
    %1683 = vmatpush.msra.mxu0 %v1102
    %1684 = vmatpush.msra.mxu0 %v1101
    %1685 = vmatpush.msra.mxu0 %v1100
    %1686 = vmatpush.msra.mxu0 %v1099
    %1687 = vmatpush.msra.mxu0 %v1098
    %1688 = vmatpush.msra.mxu0 %v1097
    %1689 = vmatpush.msra.mxu0 %v1096
    %1690 = vmatpush.msra.mxu0 %v1095
    %1691 = vmatpush.msra.mxu0 %v1094
    %1692 = vmatpush.msra.mxu0 %v1093
    %1693 = vmatpush.msra.mxu0 %v1092
    %1694 = vmatpush.msra.mxu0 %v1091
    %1695 = vmatpush.msra.mxu0 %v1090
    %1696 = vmatpush.msra.mxu0 %v1089
    %1697 = vmatmul.f32.gmra.mxu0 %v772
    %v1698 = vpop.f32.mrf.mxu0
    %v1699 = vadd.f32 %v1679, %v1698
    %1700 = vdwg.mxu0
    %1701 = vmatpush.msra.mxu0 %v1120
    %1702 = vmatpush.msra.mxu0 %v1119
    %1703 = vmatpush.msra.mxu0 %v1118
    %1704 = vmatpush.msra.mxu0 %v1117
    %1705 = vmatpush.msra.mxu0 %v1116
    %1706 = vmatpush.msra.mxu0 %v1115
    %1707 = vmatpush.msra.mxu0 %v1114
    %1708 = vmatpush.msra.mxu0 %v1113
    %1709 = vmatpush.msra.mxu0 %v1112
    %1710 = vmatpush.msra.mxu0 %v1111
    %1711 = vmatpush.msra.mxu0 %v1110
    %1712 = vmatpush.msra.mxu0 %v1109
    %1713 = vmatpush.msra.mxu0 %v1108
    %1714 = vmatpush.msra.mxu0 %v1107
    %1715 = vmatpush.msra.mxu0 %v1106
    %1716 = vmatpush.msra.mxu0 %v1105
    %1717 = vmatmul.f32.gmra.mxu0 %v773
    %v1718 = vpop.f32.mrf.mxu0
    %v1719 = vadd.f32 %v1699, %v1718
    %1720 = vdwg.mxu0
    %1721 = vmatpush.msra.mxu0 %v1136
    %1722 = vmatpush.msra.mxu0 %v1135
    %1723 = vmatpush.msra.mxu0 %v1134
    %1724 = vmatpush.msra.mxu0 %v1133
    %1725 = vmatpush.msra.mxu0 %v1132
    %1726 = vmatpush.msra.mxu0 %v1131
    %1727 = vmatpush.msra.mxu0 %v1130
    %1728 = vmatpush.msra.mxu0 %v1129
    %1729 = vmatpush.msra.mxu0 %v1128
    %1730 = vmatpush.msra.mxu0 %v1127
    %1731 = vmatpush.msra.mxu0 %v1126
    %1732 = vmatpush.msra.mxu0 %v1125
    %1733 = vmatpush.msra.mxu0 %v1124
    %1734 = vmatpush.msra.mxu0 %v1123
    %1735 = vmatpush.msra.mxu0 %v1122
    %1736 = vmatpush.msra.mxu0 %v1121
    %1737 = vmatmul.f32.gmra.mxu0 %v774
    %v1738 = vpop.f32.mrf.mxu0
    %v1739 = vadd.f32 %v1719, %v1738
    %1740 = vdwg.mxu0
    %1741 = vmatpush.msra.mxu0 %v1152
    %1742 = vmatpush.msra.mxu0 %v1151
    %1743 = vmatpush.msra.mxu0 %v1150
    %1744 = vmatpush.msra.mxu0 %v1149
    %1745 = vmatpush.msra.mxu0 %v1148
    %1746 = vmatpush.msra.mxu0 %v1147
    %1747 = vmatpush.msra.mxu0 %v1146
    %1748 = vmatpush.msra.mxu0 %v1145
    %1749 = vmatpush.msra.mxu0 %v1144
    %1750 = vmatpush.msra.mxu0 %v1143
    %1751 = vmatpush.msra.mxu0 %v1142
    %1752 = vmatpush.msra.mxu0 %v1141
    %1753 = vmatpush.msra.mxu0 %v1140
    %1754 = vmatpush.msra.mxu0 %v1139
    %1755 = vmatpush.msra.mxu0 %v1138
    %1756 = vmatpush.msra.mxu0 %v1137
    %1757 = vmatmul.f32.gmra.mxu0 %v775
    %v1758 = vpop.f32.mrf.mxu0
    %v1759 = vadd.f32 %v1739, %v1758
    %1760 = vdwg.mxu0
    %1761 = vmatpush.msra.mxu0 %v1168
    %1762 = vmatpush.msra.mxu0 %v1167
    %1763 = vmatpush.msra.mxu0 %v1166
    %1764 = vmatpush.msra.mxu0 %v1165
    %1765 = vmatpush.msra.mxu0 %v1164
    %1766 = vmatpush.msra.mxu0 %v1163
    %1767 = vmatpush.msra.mxu0 %v1162
    %1768 = vmatpush.msra.mxu0 %v1161
    %1769 = vmatpush.msra.mxu0 %v1160
    %1770 = vmatpush.msra.mxu0 %v1159
    %1771 = vmatpush.msra.mxu0 %v1158
    %1772 = vmatpush.msra.mxu0 %v1157
    %1773 = vmatpush.msra.mxu0 %v1156
    %1774 = vmatpush.msra.mxu0 %v1155
    %1775 = vmatpush.msra.mxu0 %v1154
    %1776 = vmatpush.msra.mxu0 %v1153
    %1777 = vmatmul.f32.gmra.mxu0 %v776
    %v1778 = vpop.f32.mrf.mxu0
    %v1779 = vadd.f32 %v1759, %v1778
    %1780 = vdwg.mxu0
    %1781 = vmatpush.msra.mxu0 %v1184
    %1782 = vmatpush.msra.mxu0 %v1183
    %1783 = vmatpush.msra.mxu0 %v1182
    %1784 = vmatpush.msra.mxu0 %v1181
    %1785 = vmatpush.msra.mxu0 %v1180
    %1786 = vmatpush.msra.mxu0 %v1179
    %1787 = vmatpush.msra.mxu0 %v1178
    %1788 = vmatpush.msra.mxu0 %v1177
    %1789 = vmatpush.msra.mxu0 %v1176
    %1790 = vmatpush.msra.mxu0 %v1175
    %1791 = vmatpush.msra.mxu0 %v1174
    %1792 = vmatpush.msra.mxu0 %v1173
    %1793 = vmatpush.msra.mxu0 %v1172
    %1794 = vmatpush.msra.mxu0 %v1171
    %1795 = vmatpush.msra.mxu0 %v1170
    %1796 = vmatpush.msra.mxu0 %v1169
    %1797 = vmatmul.f32.gmra.mxu0 %v777
    %v1798 = vpop.f32.mrf.mxu0
    %v1799 = vadd.f32 %v1779, %v1798
    %1800 = vdwg.mxu0
    %1801 = vmatpush.msra.mxu0 %v1200
    %1802 = vmatpush.msra.mxu0 %v1199
    %1803 = vmatpush.msra.mxu0 %v1198
    %1804 = vmatpush.msra.mxu0 %v1197
    %1805 = vmatpush.msra.mxu0 %v1196
    %1806 = vmatpush.msra.mxu0 %v1195
    %1807 = vmatpush.msra.mxu0 %v1194
    %1808 = vmatpush.msra.mxu0 %v1193
    %1809 = vmatpush.msra.mxu0 %v1192
    %1810 = vmatpush.msra.mxu0 %v1191
    %1811 = vmatpush.msra.mxu0 %v1190
    %1812 = vmatpush.msra.mxu0 %v1189
    %1813 = vmatpush.msra.mxu0 %v1188
    %1814 = vmatpush.msra.mxu0 %v1187
    %1815 = vmatpush.msra.mxu0 %v1186
    %1816 = vmatpush.msra.mxu0 %v1185
    %1817 = vmatmul.f32.gmra.mxu0 %v778
    %v1818 = vpop.f32.mrf.mxu0
    %v1819 = vadd.f32 %v1799, %v1818
    %1820 = vdwg.mxu0
    %1821 = vmatpush.msra.mxu0 %v1216
    %1822 = vmatpush.msra.mxu0 %v1215
    %1823 = vmatpush.msra.mxu0 %v1214
    %1824 = vmatpush.msra.mxu0 %v1213
    %1825 = vmatpush.msra.mxu0 %v1212
    %1826 = vmatpush.msra.mxu0 %v1211
    %1827 = vmatpush.msra.mxu0 %v1210
    %1828 = vmatpush.msra.mxu0 %v1209
    %1829 = vmatpush.msra.mxu0 %v1208
    %1830 = vmatpush.msra.mxu0 %v1207
    %1831 = vmatpush.msra.mxu0 %v1206
    %1832 = vmatpush.msra.mxu0 %v1205
    %1833 = vmatpush.msra.mxu0 %v1204
    %1834 = vmatpush.msra.mxu0 %v1203
    %1835 = vmatpush.msra.mxu0 %v1202
    %1836 = vmatpush.msra.mxu0 %v1201
    %1837 = vmatmul.f32.gmra.mxu0 %v779
    %v1838 = vpop.f32.mrf.mxu0
    %v1839 = vadd.f32 %v1819, %v1838
    %1840 = vdwg.mxu0
    %1841 = vmatpush.msra.mxu0 %v1232
    %1842 = vmatpush.msra.mxu0 %v1231
    %1843 = vmatpush.msra.mxu0 %v1230
    %1844 = vmatpush.msra.mxu0 %v1229
    %1845 = vmatpush.msra.mxu0 %v1228
    %1846 = vmatpush.msra.mxu0 %v1227
    %1847 = vmatpush.msra.mxu0 %v1226
    %1848 = vmatpush.msra.mxu0 %v1225
    %1849 = vmatpush.msra.mxu0 %v1224
    %1850 = vmatpush.msra.mxu0 %v1223
    %1851 = vmatpush.msra.mxu0 %v1222
    %1852 = vmatpush.msra.mxu0 %v1221
    %1853 = vmatpush.msra.mxu0 %v1220
    %1854 = vmatpush.msra.mxu0 %v1219
    %1855 = vmatpush.msra.mxu0 %v1218
    %1856 = vmatpush.msra.mxu0 %v1217
    %1857 = vmatmul.f32.gmra.mxu0 %v780
    %v1858 = vpop.f32.mrf.mxu0
    %v1859 = vadd.f32 %v1839, %v1858
    %1860 = vdwg.mxu0
    %1861 = vmatpush.msra.mxu0 %v1248
    %1862 = vmatpush.msra.mxu0 %v1247
    %1863 = vmatpush.msra.mxu0 %v1246
    %1864 = vmatpush.msra.mxu0 %v1245
    %1865 = vmatpush.msra.mxu0 %v1244
    %1866 = vmatpush.msra.mxu0 %v1243
    %1867 = vmatpush.msra.mxu0 %v1242
    %1868 = vmatpush.msra.mxu0 %v1241
    %1869 = vmatpush.msra.mxu0 %v1240
    %1870 = vmatpush.msra.mxu0 %v1239
    %1871 = vmatpush.msra.mxu0 %v1238
    %1872 = vmatpush.msra.mxu0 %v1237
    %1873 = vmatpush.msra.mxu0 %v1236
    %1874 = vmatpush.msra.mxu0 %v1235
    %1875 = vmatpush.msra.mxu0 %v1234
    %1876 = vmatpush.msra.mxu0 %v1233
    %1877 = vmatmul.f32.gmra.mxu0 %v781
    %v1878 = vpop.f32.mrf.mxu0
    %v1879 = vadd.f32 %v1859, %v1878
    %1880 = vdwg.mxu0
    %1881 = vmatpush.msra.mxu0 %v1264
    %1882 = vmatpush.msra.mxu0 %v1263
    %1883 = vmatpush.msra.mxu0 %v1262
    %1884 = vmatpush.msra.mxu0 %v1261
    %1885 = vmatpush.msra.mxu0 %v1260
    %1886 = vmatpush.msra.mxu0 %v1259
    %1887 = vmatpush.msra.mxu0 %v1258
    %1888 = vmatpush.msra.mxu0 %v1257
    %1889 = vmatpush.msra.mxu0 %v1256
    %1890 = vmatpush.msra.mxu0 %v1255
    %1891 = vmatpush.msra.mxu0 %v1254
    %1892 = vmatpush.msra.mxu0 %v1253
    %1893 = vmatpush.msra.mxu0 %v1252
    %1894 = vmatpush.msra.mxu0 %v1251
    %1895 = vmatpush.msra.mxu0 %v1250
    %1896 = vmatpush.msra.mxu0 %v1249
    %1897 = vmatmul.f32.gmra.mxu0 %v782
    %v1898 = vpop.f32.mrf.mxu0
    %v1899 = vadd.f32 %v1879, %v1898
    %1900 = vdwg.mxu0
    %1901 = vmatpush.msra.mxu0 %v1280
    %1902 = vmatpush.msra.mxu0 %v1279
    %1903 = vmatpush.msra.mxu0 %v1278
    %1904 = vmatpush.msra.mxu0 %v1277
    %1905 = vmatpush.msra.mxu0 %v1276
    %1906 = vmatpush.msra.mxu0 %v1275
    %1907 = vmatpush.msra.mxu0 %v1274
    %1908 = vmatpush.msra.mxu0 %v1273
    %1909 = vmatpush.msra.mxu0 %v1272
    %1910 = vmatpush.msra.mxu0 %v1271
    %1911 = vmatpush.msra.mxu0 %v1270
    %1912 = vmatpush.msra.mxu0 %v1269
    %1913 = vmatpush.msra.mxu0 %v1268
    %1914 = vmatpush.msra.mxu0 %v1267
    %1915 = vmatpush.msra.mxu0 %v1266
    %1916 = vmatpush.msra.mxu0 %v1265
    %1917 = vmatmul.f32.gmra.mxu0 %v783
    %v1918 = vpop.f32.mrf.mxu0
    %v1919 = vadd.f32 %v1899, %v1918
    %1920 = vdwg.mxu0
    %1921 = vmatpush.msra.mxu0 %v1296
    %1922 = vmatpush.msra.mxu0 %v1295
    %1923 = vmatpush.msra.mxu0 %v1294
    %1924 = vmatpush.msra.mxu0 %v1293
    %1925 = vmatpush.msra.mxu0 %v1292
    %1926 = vmatpush.msra.mxu0 %v1291
    %1927 = vmatpush.msra.mxu0 %v1290
    %1928 = vmatpush.msra.mxu0 %v1289
    %1929 = vmatpush.msra.mxu0 %v1288
    %1930 = vmatpush.msra.mxu0 %v1287
    %1931 = vmatpush.msra.mxu0 %v1286
    %1932 = vmatpush.msra.mxu0 %v1285
    %1933 = vmatpush.msra.mxu0 %v1284
    %1934 = vmatpush.msra.mxu0 %v1283
    %1935 = vmatpush.msra.mxu0 %v1282
    %1936 = vmatpush.msra.mxu0 %v1281
    %1937 = vmatmul.f32.gmra.mxu0 %v784
    %v1938 = vpop.f32.mrf.mxu0
    %v1939 = vadd.f32 %v1919, %v1938
    %1940 = vdwg.mxu0
    %vm1941 = vcmask 80896
    %1942 = vst.msk [vmem:[#allocation8] sm:$0xff] %vm1941, %v1939
    // Predicated region
    $region30: #{tpu_custom_call.1} parent=1 // pred_check
      _
    $region31: #{tpu_custom_call.1} parent=1 // pred_check_branch
      %1944 = sbr.rel (0) target = $region33
    $region32: #{tpu_custom_call.1} parent=1 // pred_region
      %1946 = vsyncadd [#allocation4], 0
      %s1948 = sshll.u32 [#allocation8], 4
      %s1949 = int_to_ptr.vmem [resolvable:$true] %s1948
      %s1950 = sshll.u32 %s5, 4
      %s1951 = int_to_ptr.hbm [resolvable:$true] %s1950
      %1953 = dma.vmem_to_hbm [thread:$0]  %s1949, 128, %s1951, [#allocation4]
    $region33: #{tpu_custom_call.1} parent=1 // pred_fallthru
      _
    // Predicated region
    $region34: #{tpu_custom_call.1} parent=1 // pred_check
      _
    $region35: #{tpu_custom_call.1} parent=1 // pred_check_branch
      %1955 = sbr.rel (0) target = $region37
    $region36: #{tpu_custom_call.1} parent=1 // pred_region
      %1957 = dma.done [#allocation4], 128
    $region37: #{tpu_custom_call.1} parent=1 // pred_fallthru
      _
    %1958 = vsyncpa [#allocation4], 1
    %1959 = vsyncpa [#allocation5], 1
    %1960 = vsyncpa [#allocation7], 1

</llo_original>
